<compile_context>
chip_gen: v5e
topology: v5e:2x2
jax: 0.10.0
libtpu: 0.0.40
codegen_flags: <defaults>
</compile_context>

<pallas_src>
import functools

import jax
import jax.numpy as jnp
from jax.experimental import pallas as pl
from jax.experimental.pallas import tpu as pltpu


# ----------------------------- config ---------------------------------------
VOCAB_SIZE = 64
N_EMBED = 32
BLOCK_SIZE = 8        # max sequence length (block_size in the PyTorch code)
N_LAYER = 2
N_HEAD = 4
HEAD_SIZE = N_EMBED // N_HEAD
DROPOUT = 0.0         # p=0 -> identity
V_PAD = 128           # lane-dense logits slab width (multiple of 128)
NEG_INF = -1e30       # large-negative mask value (stable under max-subtraction)


# --------------------------- kernel helpers ----------------------------------
def _layernorm(x, g, b, eps=1e-5):
    mu = jnp.mean(x, axis=-1, keepdims=True)
    var = jnp.mean((x - mu) ** 2, axis=-1, keepdims=True)
    return (x - mu) * jax.lax.rsqrt(var + eps) * g + b


# ------------------------------ fused kernel ---------------------------------
def gpt_kernel(T, n_layer, n_head, head_size, vocab, compute_loss, *refs):
    """One program = one batch row.  All activations stay VMEM resident."""
    if compute_loss:
        (idx_ref, tgt_ref, tok_ref, pos_ref,
         ln1g_ref, ln1b_ref, wqkv_ref, wproj_ref, bproj_ref,
         ln2g_ref, ln2b_ref, w1_ref, b1_ref, w2_ref, b2_ref,
         lnfg_ref, lnfb_ref, wlm_ref, blm_ref,
         logits_ref, loss_ref) = refs
    else:
        (idx_ref, tok_ref, pos_ref,
         ln1g_ref, ln1b_ref, wqkv_ref, wproj_ref, bproj_ref,
         ln2g_ref, ln2b_ref, w1_ref, b1_ref, w2_ref, b2_ref,
         lnfg_ref, lnfb_ref, wlm_ref, blm_ref,
         logits_ref) = refs
        tgt_ref = None
        loss_ref = None

    C = n_head * head_size

    # ---------- token + positional embedding --------------------------------
    # TODO(synk): switch to a direct row gather once vocab grows; at V=64 the
    # one-hot MXU matmul is negligible.
    ids = idx_ref[0]                                               # (T, 1) i32
    vcol = jax.lax.broadcasted_iota(jnp.int32, (T, vocab), 1)
    tok_oh = (vcol == ids).astype(jnp.bfloat16)                    # (T, V)
    tok_emb = jnp.dot(tok_oh, tok_ref[...],
                      preferred_element_type=jnp.float32)          # (T, C) f32
    x = tok_emb + pos_ref[...]                                     # (T, C) f32

    # causal mask shared by all layers / heads
    row = jax.lax.broadcasted_iota(jnp.int32, (T, T), 0)
    col = jax.lax.broadcasted_iota(jnp.int32, (T, T), 1)
    causal = row >= col
    scale = float(head_size) ** -0.5

    # ---------- transformer blocks (statically unrolled, VMEM resident) -----
    for l in range(n_layer):
        # pre-LN + multi-head causal self-attention (heads on the batch axis,
        # produced directly by the weight layout -- no lane slicing).
        xn = _layernorm(x, ln1g_ref[l], ln1b_ref[l])               # (T, C) f32
        xb = jnp.broadcast_to(xn.astype(jnp.bfloat16)[None],
                              (3 * n_head, T, C))                  # shared lhs
        qkv = jnp.einsum('ntc,ncd->ntd', xb, wqkv_ref[l],
                         preferred_element_type=jnp.float32)       # (3H,T,hs)
        q = qkv[0:n_head]                                          # (H, T, hs)
        k = qkv[n_head:2 * n_head]
        v = qkv[2 * n_head:3 * n_head]

        att = jnp.einsum('ntd,nsd->nts',
                         q.astype(jnp.bfloat16), k.astype(jnp.bfloat16),
                         preferred_element_type=jnp.float32) * scale
        att = jnp.where(causal[None], att, NEG_INF)
        att = att - jnp.max(att, axis=-1, keepdims=True)
        p = jnp.exp(att)
        p = p * pl.reciprocal(jnp.sum(p, axis=-1, keepdims=True), approx=True)
        oh = jnp.einsum('nts,nsd->ntd',
                        p.astype(jnp.bfloat16), v.astype(jnp.bfloat16),
                        preferred_element_type=jnp.float32)        # (H, T, hs)

        # head merge folded into the projection: per-head matmul + head sum
        attn_h = jnp.einsum('ntd,ndc->ntc',
                            oh.astype(jnp.bfloat16), wproj_ref[l],
                            preferred_element_type=jnp.float32)    # (H, T, C)
        attn = jnp.sum(attn_h, axis=0) + bproj_ref[l]              # (T, C)
        x = x + attn                                               # residual 1

        # pre-LN + feed-forward (Linear -> ReLU -> Linear)
        xn2 = _layernorm(x, ln2g_ref[l], ln2b_ref[l])
        h1 = jnp.dot(xn2.astype(jnp.bfloat16), w1_ref[l],
                     preferred_element_type=jnp.float32) + b1_ref[l]
        h1 = jnp.maximum(h1, 0.0)
        ff = jnp.dot(h1.astype(jnp.bfloat16), w2_ref[l],
                     preferred_element_type=jnp.float32) + b2_ref[l]
        x = x + ff                                                 # residual 2

    # ---------- final LN + LM head (lane-dense, vocab padded to 128) --------
    xf = _layernorm(x, lnfg_ref[...], lnfb_ref[...])               # (T, C)
    logits_p = jnp.dot(xf.astype(jnp.bfloat16), wlm_ref[...],
                       preferred_element_type=jnp.float32) + blm_ref[...]
    logits_ref[...] = logits_p[None]                               # (1,T,128)

    # ---------- fused cross-entropy (skipped entirely on inference path) ----
    if compute_loss:
        tgt = tgt_ref[0]                                           # (T, 1) i32
        pcol = jax.lax.broadcasted_iota(jnp.int32, (T, V_PAD), 1)
        lmask = jnp.where(pcol < vocab, logits_p, NEG_INF)         # mask pad
        m = jnp.max(lmask, axis=-1, keepdims=True)
        z = jnp.sum(jnp.exp(lmask - m), axis=-1, keepdims=True)
        logz = m + jnp.log(z)                                      # (T, 1)
        t_oh = (pcol == tgt).astype(jnp.float32)
        picked = jnp.sum(t_oh * logits_p, axis=-1, keepdims=True)  # (T, 1)
        row_loss = jnp.sum(logz - picked, axis=0, keepdims=True)   # (1, 1)
        loss_ref[...] = row_loss[None]                             # (1, 1, 1)


# ------------------------------ wrappers --------------------------------------
_WEIGHT_KEYS = ('tok_emb', 'pos_emb', 'ln1g', 'ln1b', 'wqkv', 'wproj', 'bproj',
                'ln2g', 'ln2b', 'w1', 'b1', 'w2', 'b2',
                'lnf_g', 'lnf_b', 'w_lm_pad', 'b_lm_pad')


def _full_spec(shape):
    zeros = (0,) * len(shape)
    return pl.BlockSpec(shape, lambda b, _z=zeros: _z)


@functools.partial(jax.jit, static_argnums=(3,))
def _forward_jit(params, idx3, tgt3, compute_loss):
    B, T, _ = idx3.shape
    C = N_EMBED

    kernel = functools.partial(gpt_kernel, T, N_LAYER, N_HEAD, HEAD_SIZE,
                               VOCAB_SIZE, compute_loss)

    row_spec = pl.BlockSpec((1, T, 1), lambda b: (b, 0, 0))
    pos_spec = pl.BlockSpec((T, C), lambda b: (0, 0))
    weight_specs = [pos_spec if kn == 'pos_emb' else _full_spec(params[kn].shape)
                    for kn in _WEIGHT_KEYS]

    logits_spec = pl.BlockSpec((1, T, V_PAD), lambda b: (b, 0, 0))
    loss_spec = pl.BlockSpec((1, 1, 1), lambda b: (b, 0, 0))

    operands = ([idx3] + ([tgt3] if compute_loss else [])
                + [params[kn] for kn in _WEIGHT_KEYS])
    in_specs = [row_spec] + ([row_spec] if compute_loss else []) + weight_specs

    if compute_loss:
        out_shape = (jax.ShapeDtypeStruct((B, T, V_PAD), jnp.float32),
                     jax.ShapeDtypeStruct((B, 1, 1), jnp.float32))
        out_specs = (logits_spec, loss_spec)
    else:
        out_shape = jax.ShapeDtypeStruct((B, T, V_PAD), jnp.float32)
        out_specs = logits_spec

    # explicit scoped-VMEM budget: resident weights + I/O + activations + slack
    weight_bytes = sum(int(params[kn].size) * params[kn].dtype.itemsize
                       for kn in _WEIGHT_KEYS)
    io_bytes = (B * T * V_PAD + B) * 4 + 2 * B * T * 4
    act_bytes = 32 * T * max(4 * C, V_PAD) * 4
    vmem_limit = int(min(2 * (weight_bytes + io_bytes + act_bytes) + (32 << 20),
                         100 << 20))

    result = pl.pallas_call(
        kernel,
        grid=(B,),
        out_shape=out_shape,
        in_specs=in_specs,
        out_specs=out_specs,
        compiler_params=pltpu.CompilerParams(
            dimension_semantics=("parallel",),
            vmem_limit_bytes=vmem_limit),
    )(*operands)

    if compute_loss:
        logits_pad, loss_rows = result
        loss = jnp.sum(loss_rows) / (B * T)          # mean over B*T tokens
    else:
        logits_pad = result
        loss = None
    logits = logits_pad[:, :, :VOCAB_SIZE]
    return logits, loss


def gpt_forward(params, idx, targets=None):
    B, T = idx.shape
    idx3 = idx.reshape(B, T, 1).astype(jnp.int32)
    if targets is None:
        logits, _ = _forward_jit(params, idx3, None, False)
        return logits, None
    tgt3 = targets.reshape(B, T, 1).astype(jnp.int32)
    return _forward_jit(params, idx3, tgt3, True)


# ----------------------- deterministic parameter init -------------------------
def init_params(key):
    """Mirrors GPT._init_weights: Linear/Embedding weights ~ N(0, 0.02),
    biases = 0, LayerNorm gamma = 1, beta = 0.  Matmul weights stored bf16."""
    keys = jax.random.split(key, 7)

    def normal(k, shape):
        return 0.02 * jax.random.normal(k, shape, dtype=jnp.float32)

    L, C, V, H, D = N_LAYER, N_EMBED, VOCAB_SIZE, N_HEAD, HEAD_SIZE
    params = {
        'tok_emb': normal(keys[0], (V, C)).astype(jnp.bfloat16),
        'pos_emb': normal(keys[1], (BLOCK_SIZE, C)),              # f32 (added)
        'ln1g': jnp.ones((L, 1, C), jnp.float32),
        'ln1b': jnp.zeros((L, 1, C), jnp.float32),
        # [q-heads | k-heads | v-heads] along the leading batch axis
        'wqkv': normal(keys[2], (L, 3 * H, C, D)).astype(jnp.bfloat16),
        # projection per head: sum_h (oh_h @ Wp[h]) == concat(heads) @ W_proj
        'wproj': normal(keys[3], (L, H, D, C)).astype(jnp.bfloat16),
        'bproj': jnp.zeros((L, 1, C), jnp.float32),
        'ln2g': jnp.ones((L, 1, C), jnp.float32),
        'ln2b': jnp.zeros((L, 1, C), jnp.float32),
        'w1': normal(keys[4], (L, C, 4 * C)).astype(jnp.bfloat16),
        'b1': jnp.zeros((L, 1, 4 * C), jnp.float32),
        'w2': normal(keys[5], (L, 4 * C, C)).astype(jnp.bfloat16),
        'b2': jnp.zeros((L, 1, C), jnp.float32),
        'lnf_g': jnp.ones((1, C), jnp.float32),
        'lnf_b': jnp.zeros((1, C), jnp.float32),
    }
    w_lm = normal(keys[6], (C, V))
    params['w_lm_pad'] = jnp.pad(w_lm, ((0, 0), (0, V_PAD - V))).astype(jnp.bfloat16)
    params['b_lm_pad'] = jnp.zeros((1, V_PAD), jnp.float32)
    return params


# --------------------------------- main ---------------------------------------
if __name__ == "__main__":
    key = jax.random.PRNGKey(0)
    pkey, ikey, tkey = jax.random.split(key, 3)
    params = init_params(pkey)

    B, T = 2, BLOCK_SIZE
    idx = jax.random.randint(ikey, (B, T), 0, VOCAB_SIZE, dtype=jnp.int32)
    targets = jax.random.randint(tkey, (B, T), 0, VOCAB_SIZE, dtype=jnp.int32)

    # training path (targets given): logits + fused cross-entropy
    logits, loss = gpt_forward(params, idx, targets)
    jax.block_until_ready(logits)
    jax.block_until_ready(loss)
    assert logits.shape == (B, T, VOCAB_SIZE)
    assert bool(jnp.isfinite(loss))

    # inference path (targets=None): cross-entropy is statically skipped
    logits_inf, loss_inf = gpt_forward(params, idx)
    jax.block_until_ready(logits_inf)
    assert loss_inf is None
    assert bool(jnp.all(jnp.isfinite(logits_inf)))

    # TODO(synk): generate() (autoregressive multinomial sampling) is outside
    # the forward pass and is not implemented as a kernel.
    print("KERNEL_OK")
</pallas_src>

<mosaic_0001>
module attributes {stable_mosaic.version = 11 : i64} {
  func.func @gpt_kernel(%arg0: i32, %arg1: memref<1x8x1xi32, #tpu.memory_space<vmem>>, %arg2: memref<1x8x1xi32, #tpu.memory_space<vmem>>, %arg3: memref<64x32xbf16, #tpu.memory_space<vmem>>, %arg4: memref<8x32xf32, #tpu.memory_space<vmem>>, %arg5: memref<2x1x32xf32, #tpu.memory_space<vmem>>, %arg6: memref<2x1x32xf32, #tpu.memory_space<vmem>>, %arg7: memref<2x12x32x8xbf16, #tpu.memory_space<vmem>>, %arg8: memref<2x4x8x32xbf16, #tpu.memory_space<vmem>>, %arg9: memref<2x1x32xf32, #tpu.memory_space<vmem>>, %arg10: memref<2x1x32xf32, #tpu.memory_space<vmem>>, %arg11: memref<2x1x32xf32, #tpu.memory_space<vmem>>, %arg12: memref<2x32x128xbf16, #tpu.memory_space<vmem>>, %arg13: memref<2x1x128xf32, #tpu.memory_space<vmem>>, %arg14: memref<2x128x32xbf16, #tpu.memory_space<vmem>>, %arg15: memref<2x1x32xf32, #tpu.memory_space<vmem>>, %arg16: memref<1x32xf32, #tpu.memory_space<vmem>>, %arg17: memref<1x32xf32, #tpu.memory_space<vmem>>, %arg18: memref<32x128xbf16, #tpu.memory_space<vmem>>, %arg19: memref<1x128xf32, #tpu.memory_space<vmem>>, %arg20: memref<1x8x128xf32, #tpu.memory_space<vmem>>, %arg21: memref<1x1x1xf32, #tpu.memory_space<vmem>>) attributes {dimension_semantics = [#tpu.dimension_semantics<parallel>], iteration_bounds = array<i64: 2>, scalar_prefetch = 0 : i64, scratch_operands = 0 : i64, tpu.core_type = #tpu.core_type<tc>, window_params = [{transform_indices = @transform_0, window_bounds = array<i64: 1, 8, 1>}, {transform_indices = @transform_1, window_bounds = array<i64: 1, 8, 1>}, {pipeline_mode = #tpu.pipeline_mode<synchronous>, transform_indices = @transform_2, window_bounds = array<i64: 64, 32>}, {pipeline_mode = #tpu.pipeline_mode<synchronous>, transform_indices = @transform_3, window_bounds = array<i64: 8, 32>}, {pipeline_mode = #tpu.pipeline_mode<synchronous>, transform_indices = @transform_4, window_bounds = array<i64: 2, 1, 32>}, {pipeline_mode = #tpu.pipeline_mode<synchronous>, transform_indices = @transform_5, window_bounds = array<i64: 2, 1, 32>}, {pipeline_mode = #tpu.pipeline_mode<synchronous>, transform_indices = @transform_6, window_bounds = array<i64: 2, 12, 32, 8>}, {pipeline_mode = #tpu.pipeline_mode<synchronous>, transform_indices = @transform_7, window_bounds = array<i64: 2, 4, 8, 32>}, {pipeline_mode = #tpu.pipeline_mode<synchronous>, transform_indices = @transform_8, window_bounds = array<i64: 2, 1, 32>}, {pipeline_mode = #tpu.pipeline_mode<synchronous>, transform_indices = @transform_9, window_bounds = array<i64: 2, 1, 32>}, {pipeline_mode = #tpu.pipeline_mode<synchronous>, transform_indices = @transform_10, window_bounds = array<i64: 2, 1, 32>}, {pipeline_mode = #tpu.pipeline_mode<synchronous>, transform_indices = @transform_11, window_bounds = array<i64: 2, 32, 128>}, {pipeline_mode = #tpu.pipeline_mode<synchronous>, transform_indices = @transform_12, window_bounds = array<i64: 2, 1, 128>}, {pipeline_mode = #tpu.pipeline_mode<synchronous>, transform_indices = @transform_13, window_bounds = array<i64: 2, 128, 32>}, {pipeline_mode = #tpu.pipeline_mode<synchronous>, transform_indices = @transform_14, window_bounds = array<i64: 2, 1, 32>}, {pipeline_mode = #tpu.pipeline_mode<synchronous>, transform_indices = @transform_15, window_bounds = array<i64: 1, 32>}, {pipeline_mode = #tpu.pipeline_mode<synchronous>, transform_indices = @transform_16, window_bounds = array<i64: 1, 32>}, {pipeline_mode = #tpu.pipeline_mode<synchronous>, transform_indices = @transform_17, window_bounds = array<i64: 32, 128>}, {pipeline_mode = #tpu.pipeline_mode<synchronous>, transform_indices = @transform_18, window_bounds = array<i64: 1, 128>}, {transform_indices = @transform_19, window_bounds = array<i64: 1, 8, 128>}, {transform_indices = @transform_20, window_bounds = array<i64: 1, 1, 1>}]} {
    %c0 = arith.constant 0 : index
    %c0_0 = arith.constant 0 : index
    %c0_1 = arith.constant 0 : index
    %0 = vector.load %arg1[%c0, %c0_0, %c0_1] : memref<1x8x1xi32, #tpu.memory_space<vmem>>, vector<1x8x1xi32>
    %1 = vector.shape_cast %0 : vector<1x8x1xi32> to vector<8x1xi32>
    %2 = tpu.iota {dimensions = array<i32: 1>} : vector<8x64xi32>
    %3 = vector.broadcast %1 : vector<8x1xi32> to vector<8x64xi32>
    %4 = arith.cmpi eq, %2, %3 : vector<8x64xi32>
    %5 = arith.extui %4 : vector<8x64xi1> to vector<8x64xi32>
    %6 = arith.sitofp %5 : vector<8x64xi32> to vector<8x64xf32>
    %7 = arith.truncf %6 : vector<8x64xf32> to vector<8x64xbf16>
    %c0_2 = arith.constant 0 : index
    %c0_3 = arith.constant 0 : index
    %8 = vector.load %arg3[%c0_2, %c0_3] : memref<64x32xbf16, #tpu.memory_space<vmem>>, vector<64x32xbf16>
    %cst = arith.constant dense<0.000000e+00> : vector<8x32xf32>
    %9 = tpu.matmul %7, %8, %cst {dimension_numbers = #tpu.dot_dimension_numbers<[1], [0], [0], [1], [0, 0, 1, 1], [], []>} : vector<8x64xbf16>, vector<64x32xbf16>, vector<8x32xf32> -> vector<8x32xf32>
    %c0_4 = arith.constant 0 : index
    %c0_5 = arith.constant 0 : index
    %10 = vector.load %arg4[%c0_4, %c0_5] : memref<8x32xf32, #tpu.memory_space<vmem>>, vector<8x32xf32>
    %11 = arith.addf %9, %10 : vector<8x32xf32>
    %12 = tpu.iota {dimensions = array<i32: 0>} : vector<8x8xi32>
    %13 = tpu.iota {dimensions = array<i32: 1>} : vector<8x8xi32>
    %14 = arith.cmpi sge, %12, %13 : vector<8x8xi32>
    %c0_6 = arith.constant 0 : index
    %c0_7 = arith.constant 0 : index
    %c0_8 = arith.constant 0 : index
    %15 = vector.load %arg5[%c0_6, %c0_7, %c0_8] : memref<2x1x32xf32, #tpu.memory_space<vmem>>, vector<1x1x32xf32>
    %16 = vector.shape_cast %15 : vector<1x1x32xf32> to vector<1x32xf32>
    %c0_9 = arith.constant 0 : index
    %c0_10 = arith.constant 0 : index
    %c0_11 = arith.constant 0 : index
    %17 = vector.load %arg6[%c0_9, %c0_10, %c0_11] : memref<2x1x32xf32, #tpu.memory_space<vmem>>, vector<1x1x32xf32>
    %18 = vector.shape_cast %17 : vector<1x1x32xf32> to vector<1x32xf32>
    %cst_12 = arith.constant dense<0.000000e+00> : vector<8xf32>
    %19 = vector.multi_reduction <add>, %11, %cst_12 [1] : vector<8x32xf32> to vector<8xf32>
    %20 = vector.shape_cast %19 : vector<8xf32> to vector<8x1xf32>
    %cst_13 = arith.constant 3.200000e+01 : f32
    %21 = vector.broadcast %cst_13 : f32 to vector<8x1xf32>
    %22 = arith.divf %20, %21 : vector<8x1xf32>
    %23 = vector.broadcast %22 : vector<8x1xf32> to vector<8x32xf32>
    %24 = arith.subf %11, %23 : vector<8x32xf32>
    %25 = arith.mulf %24, %24 : vector<8x32xf32>
    %cst_14 = arith.constant dense<0.000000e+00> : vector<8xf32>
    %26 = vector.multi_reduction <add>, %25, %cst_14 [1] : vector<8x32xf32> to vector<8xf32>
    %27 = vector.shape_cast %26 : vector<8xf32> to vector<8x1xf32>
    %cst_15 = arith.constant 3.200000e+01 : f32
    %28 = vector.broadcast %cst_15 : f32 to vector<8x1xf32>
    %29 = arith.divf %27, %28 : vector<8x1xf32>
    %30 = vector.broadcast %22 : vector<8x1xf32> to vector<8x32xf32>
    %31 = arith.subf %11, %30 : vector<8x32xf32>
    %cst_16 = arith.constant 9.99999974E-6 : f32
    %32 = vector.broadcast %cst_16 : f32 to vector<8x1xf32>
    %33 = arith.addf %29, %32 : vector<8x1xf32>
    %34 = math.rsqrt %33 : vector<8x1xf32>
    %35 = vector.broadcast %34 : vector<8x1xf32> to vector<8x32xf32>
    %36 = arith.mulf %31, %35 : vector<8x32xf32>
    %37 = vector.broadcast %16 : vector<1x32xf32> to vector<8x32xf32>
    %38 = arith.mulf %36, %37 : vector<8x32xf32>
    %39 = vector.broadcast %18 : vector<1x32xf32> to vector<8x32xf32>
    %40 = arith.addf %38, %39 : vector<8x32xf32>
    %41 = arith.truncf %40 : vector<8x32xf32> to vector<8x32xbf16>
    %42 = vector.shape_cast %41 : vector<8x32xbf16> to vector<1x8x32xbf16>
    %43 = vector.shape_cast %42 : vector<1x8x32xbf16> to vector<1x8x32xbf16>
    %44 = vector.broadcast %43 : vector<1x8x32xbf16> to vector<12x8x32xbf16>
    %c0_17 = arith.constant 0 : index
    %c0_18 = arith.constant 0 : index
    %c0_19 = arith.constant 0 : index
    %c0_20 = arith.constant 0 : index
    %45 = vector.load %arg7[%c0_17, %c0_18, %c0_19, %c0_20] : memref<2x12x32x8xbf16, #tpu.memory_space<vmem>>, vector<1x12x32x8xbf16>
    %46 = vector.shape_cast %45 : vector<1x12x32x8xbf16> to vector<12x32x8xbf16>
    "tpu.trace_start"() <{level = 10 : i32, message = "ntc,ncd->ntd"}> : () -> ()
    %cst_21 = arith.constant dense<0.000000e+00> : vector<12x8x8xf32>
    %47 = tpu.matmul %44, %46, %cst_21 {dimension_numbers = #tpu.dot_dimension_numbers<[2], [1], [1], [2], [0, 0, 0, 1, 1, 2], [0], [0]>} : vector<12x8x32xbf16>, vector<12x32x8xbf16>, vector<12x8x8xf32> -> vector<12x8x8xf32>
    "tpu.trace_stop"() : () -> ()
    %48 = vector.extract_strided_slice %47 {offsets = [0, 0, 0], sizes = [4, 8, 8], strides = [1, 1, 1]} : vector<12x8x8xf32> to vector<4x8x8xf32>
    %49 = vector.extract_strided_slice %47 {offsets = [4, 0, 0], sizes = [4, 8, 8], strides = [1, 1, 1]} : vector<12x8x8xf32> to vector<4x8x8xf32>
    %50 = vector.extract_strided_slice %47 {offsets = [8, 0, 0], sizes = [4, 8, 8], strides = [1, 1, 1]} : vector<12x8x8xf32> to vector<4x8x8xf32>
    %51 = arith.truncf %48 : vector<4x8x8xf32> to vector<4x8x8xbf16>
    %52 = arith.truncf %49 : vector<4x8x8xf32> to vector<4x8x8xbf16>
    "tpu.trace_start"() <{level = 10 : i32, message = "ntd,nsd->nts"}> : () -> ()
    %cst_22 = arith.constant dense<0.000000e+00> : vector<4x8x8xf32>
    %53 = tpu.matmul %51, %52, %cst_22 {dimension_numbers = #tpu.dot_dimension_numbers<[2], [2], [1], [1], [0, 0, 0, 1, 1, 1], [0], [0]>} : vector<4x8x8xbf16>, vector<4x8x8xbf16>, vector<4x8x8xf32> -> vector<4x8x8xf32>
    "tpu.trace_stop"() : () -> ()
    %cst_23 = arith.constant 0.353553385 : f32
    %54 = vector.broadcast %cst_23 : f32 to vector<4x8x8xf32>
    %55 = arith.mulf %53, %54 : vector<4x8x8xf32>
    %56 = vector.shape_cast %14 : vector<8x8xi1> to vector<1x8x8xi1>
    %cst_24 = arith.constant -1.000000e+30 : f32
    %57 = vector.shape_cast %56 : vector<1x8x8xi1> to vector<1x8x8xi1>
    %58 = vector.broadcast %57 : vector<1x8x8xi1> to vector<4x8x8xi1>
    %59 = vector.broadcast %cst_24 : f32 to vector<4x8x8xf32>
    %60 = arith.select %58, %55, %59 : vector<4x8x8xi1>, vector<4x8x8xf32>
    %cst_25 = arith.constant dense<0xFF800000> : vector<4x8xf32>
    %61 = vector.multi_reduction <maximumf>, %60, %cst_25 [2] : vector<4x8x8xf32> to vector<4x8xf32>
    %62 = vector.shape_cast %61 : vector<4x8xf32> to vector<4x8x1xf32>
    %63 = vector.broadcast %62 : vector<4x8x1xf32> to vector<4x8x8xf32>
    %64 = arith.subf %60, %63 : vector<4x8x8xf32>
    %65 = math.exp %64 : vector<4x8x8xf32>
    %cst_26 = arith.constant dense<0.000000e+00> : vector<4x8xf32>
    %66 = vector.multi_reduction <add>, %65, %cst_26 [2] : vector<4x8x8xf32> to vector<4x8xf32>
    %67 = vector.shape_cast %66 : vector<4x8xf32> to vector<4x8x1xf32>
    %68 = tpu.reciprocal %67 {approx = true} : vector<4x8x1xf32> -> vector<4x8x1xf32>
    %69 = vector.broadcast %68 : vector<4x8x1xf32> to vector<4x8x8xf32>
    %70 = arith.mulf %65, %69 : vector<4x8x8xf32>
    %71 = arith.truncf %70 : vector<4x8x8xf32> to vector<4x8x8xbf16>
    %72 = arith.truncf %50 : vector<4x8x8xf32> to vector<4x8x8xbf16>
    "tpu.trace_start"() <{level = 10 : i32, message = "nts,nsd->ntd"}> : () -> ()
    %cst_27 = arith.constant dense<0.000000e+00> : vector<4x8x8xf32>
    %73 = tpu.matmul %71, %72, %cst_27 {dimension_numbers = #tpu.dot_dimension_numbers<[2], [1], [1], [2], [0, 0, 0, 1, 1, 2], [0], [0]>} : vector<4x8x8xbf16>, vector<4x8x8xbf16>, vector<4x8x8xf32> -> vector<4x8x8xf32>
    "tpu.trace_stop"() : () -> ()
    %74 = arith.truncf %73 : vector<4x8x8xf32> to vector<4x8x8xbf16>
    %c0_28 = arith.constant 0 : index
    %c0_29 = arith.constant 0 : index
    %c0_30 = arith.constant 0 : index
    %c0_31 = arith.constant 0 : index
    %75 = vector.load %arg8[%c0_28, %c0_29, %c0_30, %c0_31] : memref<2x4x8x32xbf16, #tpu.memory_space<vmem>>, vector<1x4x8x32xbf16>
    %76 = vector.shape_cast %75 : vector<1x4x8x32xbf16> to vector<4x8x32xbf16>
    "tpu.trace_start"() <{level = 10 : i32, message = "ntd,ndc->ntc"}> : () -> ()
    %cst_32 = arith.constant dense<0.000000e+00> : vector<4x8x32xf32>
    %77 = tpu.matmul %74, %76, %cst_32 {dimension_numbers = #tpu.dot_dimension_numbers<[2], [1], [1], [2], [0, 0, 0, 1, 1, 2], [0], [0]>} : vector<4x8x8xbf16>, vector<4x8x32xbf16>, vector<4x8x32xf32> -> vector<4x8x32xf32>
    "tpu.trace_stop"() : () -> ()
    %cst_33 = arith.constant dense<0.000000e+00> : vector<8x32xf32>
    %78 = vector.multi_reduction <add>, %77, %cst_33 [0] : vector<4x8x32xf32> to vector<8x32xf32>
    %c0_34 = arith.constant 0 : index
    %c0_35 = arith.constant 0 : index
    %c0_36 = arith.constant 0 : index
    %79 = vector.load %arg9[%c0_34, %c0_35, %c0_36] : memref<2x1x32xf32, #tpu.memory_space<vmem>>, vector<1x1x32xf32>
    %80 = vector.shape_cast %79 : vector<1x1x32xf32> to vector<1x32xf32>
    %81 = vector.broadcast %80 : vector<1x32xf32> to vector<8x32xf32>
    %82 = arith.addf %78, %81 : vector<8x32xf32>
    %83 = arith.addf %11, %82 : vector<8x32xf32>
    %c0_37 = arith.constant 0 : index
    %c0_38 = arith.constant 0 : index
    %c0_39 = arith.constant 0 : index
    %84 = vector.load %arg10[%c0_37, %c0_38, %c0_39] : memref<2x1x32xf32, #tpu.memory_space<vmem>>, vector<1x1x32xf32>
    %85 = vector.shape_cast %84 : vector<1x1x32xf32> to vector<1x32xf32>
    %c0_40 = arith.constant 0 : index
    %c0_41 = arith.constant 0 : index
    %c0_42 = arith.constant 0 : index
    %86 = vector.load %arg11[%c0_40, %c0_41, %c0_42] : memref<2x1x32xf32, #tpu.memory_space<vmem>>, vector<1x1x32xf32>
    %87 = vector.shape_cast %86 : vector<1x1x32xf32> to vector<1x32xf32>
    %cst_43 = arith.constant dense<0.000000e+00> : vector<8xf32>
    %88 = vector.multi_reduction <add>, %83, %cst_43 [1] : vector<8x32xf32> to vector<8xf32>
    %89 = vector.shape_cast %88 : vector<8xf32> to vector<8x1xf32>
    %cst_44 = arith.constant 3.200000e+01 : f32
    %90 = vector.broadcast %cst_44 : f32 to vector<8x1xf32>
    %91 = arith.divf %89, %90 : vector<8x1xf32>
    %92 = vector.broadcast %91 : vector<8x1xf32> to vector<8x32xf32>
    %93 = arith.subf %83, %92 : vector<8x32xf32>
    %94 = arith.mulf %93, %93 : vector<8x32xf32>
    %cst_45 = arith.constant dense<0.000000e+00> : vector<8xf32>
    %95 = vector.multi_reduction <add>, %94, %cst_45 [1] : vector<8x32xf32> to vector<8xf32>
    %96 = vector.shape_cast %95 : vector<8xf32> to vector<8x1xf32>
    %cst_46 = arith.constant 3.200000e+01 : f32
    %97 = vector.broadcast %cst_46 : f32 to vector<8x1xf32>
    %98 = arith.divf %96, %97 : vector<8x1xf32>
    %99 = vector.broadcast %91 : vector<8x1xf32> to vector<8x32xf32>
    %100 = arith.subf %83, %99 : vector<8x32xf32>
    %cst_47 = arith.constant 9.99999974E-6 : f32
    %101 = vector.broadcast %cst_47 : f32 to vector<8x1xf32>
    %102 = arith.addf %98, %101 : vector<8x1xf32>
    %103 = math.rsqrt %102 : vector<8x1xf32>
    %104 = vector.broadcast %103 : vector<8x1xf32> to vector<8x32xf32>
    %105 = arith.mulf %100, %104 : vector<8x32xf32>
    %106 = vector.broadcast %85 : vector<1x32xf32> to vector<8x32xf32>
    %107 = arith.mulf %105, %106 : vector<8x32xf32>
    %108 = vector.broadcast %87 : vector<1x32xf32> to vector<8x32xf32>
    %109 = arith.addf %107, %108 : vector<8x32xf32>
    %110 = arith.truncf %109 : vector<8x32xf32> to vector<8x32xbf16>
    %c0_48 = arith.constant 0 : index
    %c0_49 = arith.constant 0 : index
    %c0_50 = arith.constant 0 : index
    %111 = vector.load %arg12[%c0_48, %c0_49, %c0_50] : memref<2x32x128xbf16, #tpu.memory_space<vmem>>, vector<1x32x128xbf16>
    %112 = vector.shape_cast %111 : vector<1x32x128xbf16> to vector<32x128xbf16>
    %cst_51 = arith.constant dense<0.000000e+00> : vector<8x128xf32>
    %113 = tpu.matmul %110, %112, %cst_51 {dimension_numbers = #tpu.dot_dimension_numbers<[1], [0], [0], [1], [0, 0, 1, 1], [], []>} : vector<8x32xbf16>, vector<32x128xbf16>, vector<8x128xf32> -> vector<8x128xf32>
    %c0_52 = arith.constant 0 : index
    %c0_53 = arith.constant 0 : index
    %c0_54 = arith.constant 0 : index
    %114 = vector.load %arg13[%c0_52, %c0_53, %c0_54] : memref<2x1x128xf32, #tpu.memory_space<vmem>>, vector<1x1x128xf32>
    %115 = vector.shape_cast %114 : vector<1x1x128xf32> to vector<1x128xf32>
    %116 = vector.broadcast %115 : vector<1x128xf32> to vector<8x128xf32>
    %117 = arith.addf %113, %116 : vector<8x128xf32>
    %cst_55 = arith.constant 0.000000e+00 : f32
    %118 = vector.broadcast %cst_55 : f32 to vector<8x128xf32>
    %119 = arith.maximumf %117, %118 : vector<8x128xf32>
    %120 = arith.truncf %119 : vector<8x128xf32> to vector<8x128xbf16>
    %c0_56 = arith.constant 0 : index
    %c0_57 = arith.constant 0 : index
    %c0_58 = arith.constant 0 : index
    %121 = vector.load %arg14[%c0_56, %c0_57, %c0_58] : memref<2x128x32xbf16, #tpu.memory_space<vmem>>, vector<1x128x32xbf16>
    %122 = vector.shape_cast %121 : vector<1x128x32xbf16> to vector<128x32xbf16>
    %cst_59 = arith.constant dense<0.000000e+00> : vector<8x32xf32>
    %123 = tpu.matmul %120, %122, %cst_59 {dimension_numbers = #tpu.dot_dimension_numbers<[1], [0], [0], [1], [0, 0, 1, 1], [], []>} : vector<8x128xbf16>, vector<128x32xbf16>, vector<8x32xf32> -> vector<8x32xf32>
    %c0_60 = arith.constant 0 : index
    %c0_61 = arith.constant 0 : index
    %c0_62 = arith.constant 0 : index
    %124 = vector.load %arg15[%c0_60, %c0_61, %c0_62] : memref<2x1x32xf32, #tpu.memory_space<vmem>>, vector<1x1x32xf32>
    %125 = vector.shape_cast %124 : vector<1x1x32xf32> to vector<1x32xf32>
    %126 = vector.broadcast %125 : vector<1x32xf32> to vector<8x32xf32>
    %127 = arith.addf %123, %126 : vector<8x32xf32>
    %128 = arith.addf %83, %127 : vector<8x32xf32>
    %c1 = arith.constant 1 : index
    %c0_63 = arith.constant 0 : index
    %c0_64 = arith.constant 0 : index
    %129 = vector.load %arg5[%c1, %c0_63, %c0_64] : memref<2x1x32xf32, #tpu.memory_space<vmem>>, vector<1x1x32xf32>
    %130 = vector.shape_cast %129 : vector<1x1x32xf32> to vector<1x32xf32>
    %c1_65 = arith.constant 1 : index
    %c0_66 = arith.constant 0 : index
    %c0_67 = arith.constant 0 : index
    %131 = vector.load %arg6[%c1_65, %c0_66, %c0_67] : memref<2x1x32xf32, #tpu.memory_space<vmem>>, vector<1x1x32xf32>
    %132 = vector.shape_cast %131 : vector<1x1x32xf32> to vector<1x32xf32>
    %cst_68 = arith.constant dense<0.000000e+00> : vector<8xf32>
    %133 = vector.multi_reduction <add>, %128, %cst_68 [1] : vector<8x32xf32> to vector<8xf32>
    %134 = vector.shape_cast %133 : vector<8xf32> to vector<8x1xf32>
    %cst_69 = arith.constant 3.200000e+01 : f32
    %135 = vector.broadcast %cst_69 : f32 to vector<8x1xf32>
    %136 = arith.divf %134, %135 : vector<8x1xf32>
    %137 = vector.broadcast %136 : vector<8x1xf32> to vector<8x32xf32>
    %138 = arith.subf %128, %137 : vector<8x32xf32>
    %139 = arith.mulf %138, %138 : vector<8x32xf32>
    %cst_70 = arith.constant dense<0.000000e+00> : vector<8xf32>
    %140 = vector.multi_reduction <add>, %139, %cst_70 [1] : vector<8x32xf32> to vector<8xf32>
    %141 = vector.shape_cast %140 : vector<8xf32> to vector<8x1xf32>
    %cst_71 = arith.constant 3.200000e+01 : f32
    %142 = vector.broadcast %cst_71 : f32 to vector<8x1xf32>
    %143 = arith.divf %141, %142 : vector<8x1xf32>
    %144 = vector.broadcast %136 : vector<8x1xf32> to vector<8x32xf32>
    %145 = arith.subf %128, %144 : vector<8x32xf32>
    %cst_72 = arith.constant 9.99999974E-6 : f32
    %146 = vector.broadcast %cst_72 : f32 to vector<8x1xf32>
    %147 = arith.addf %143, %146 : vector<8x1xf32>
    %148 = math.rsqrt %147 : vector<8x1xf32>
    %149 = vector.broadcast %148 : vector<8x1xf32> to vector<8x32xf32>
    %150 = arith.mulf %145, %149 : vector<8x32xf32>
    %151 = vector.broadcast %130 : vector<1x32xf32> to vector<8x32xf32>
    %152 = arith.mulf %150, %151 : vector<8x32xf32>
    %153 = vector.broadcast %132 : vector<1x32xf32> to vector<8x32xf32>
    %154 = arith.addf %152, %153 : vector<8x32xf32>
    %155 = arith.truncf %154 : vector<8x32xf32> to vector<8x32xbf16>
    %156 = vector.shape_cast %155 : vector<8x32xbf16> to vector<1x8x32xbf16>
    %157 = vector.shape_cast %156 : vector<1x8x32xbf16> to vector<1x8x32xbf16>
    %158 = vector.broadcast %157 : vector<1x8x32xbf16> to vector<12x8x32xbf16>
    %c1_73 = arith.constant 1 : index
    %c0_74 = arith.constant 0 : index
    %c0_75 = arith.constant 0 : index
    %c0_76 = arith.constant 0 : index
    %159 = vector.load %arg7[%c1_73, %c0_74, %c0_75, %c0_76] : memref<2x12x32x8xbf16, #tpu.memory_space<vmem>>, vector<1x12x32x8xbf16>
    %160 = vector.shape_cast %159 : vector<1x12x32x8xbf16> to vector<12x32x8xbf16>
    "tpu.trace_start"() <{level = 10 : i32, message = "ntc,ncd->ntd"}> : () -> ()
    %cst_77 = arith.constant dense<0.000000e+00> : vector<12x8x8xf32>
    %161 = tpu.matmul %158, %160, %cst_77 {dimension_numbers = #tpu.dot_dimension_numbers<[2], [1], [1], [2], [0, 0, 0, 1, 1, 2], [0], [0]>} : vector<12x8x32xbf16>, vector<12x32x8xbf16>, vector<12x8x8xf32> -> vector<12x8x8xf32>
    "tpu.trace_stop"() : () -> ()
    %162 = vector.extract_strided_slice %161 {offsets = [0, 0, 0], sizes = [4, 8, 8], strides = [1, 1, 1]} : vector<12x8x8xf32> to vector<4x8x8xf32>
    %163 = vector.extract_strided_slice %161 {offsets = [4, 0, 0], sizes = [4, 8, 8], strides = [1, 1, 1]} : vector<12x8x8xf32> to vector<4x8x8xf32>
    %164 = vector.extract_strided_slice %161 {offsets = [8, 0, 0], sizes = [4, 8, 8], strides = [1, 1, 1]} : vector<12x8x8xf32> to vector<4x8x8xf32>
    %165 = arith.truncf %162 : vector<4x8x8xf32> to vector<4x8x8xbf16>
    %166 = arith.truncf %163 : vector<4x8x8xf32> to vector<4x8x8xbf16>
    "tpu.trace_start"() <{level = 10 : i32, message = "ntd,nsd->nts"}> : () -> ()
    %cst_78 = arith.constant dense<0.000000e+00> : vector<4x8x8xf32>
    %167 = tpu.matmul %165, %166, %cst_78 {dimension_numbers = #tpu.dot_dimension_numbers<[2], [2], [1], [1], [0, 0, 0, 1, 1, 1], [0], [0]>} : vector<4x8x8xbf16>, vector<4x8x8xbf16>, vector<4x8x8xf32> -> vector<4x8x8xf32>
    "tpu.trace_stop"() : () -> ()
    %cst_79 = arith.constant 0.353553385 : f32
    %168 = vector.broadcast %cst_79 : f32 to vector<4x8x8xf32>
    %169 = arith.mulf %167, %168 : vector<4x8x8xf32>
    %170 = vector.shape_cast %14 : vector<8x8xi1> to vector<1x8x8xi1>
    %cst_80 = arith.constant -1.000000e+30 : f32
    %171 = vector.shape_cast %170 : vector<1x8x8xi1> to vector<1x8x8xi1>
    %172 = vector.broadcast %171 : vector<1x8x8xi1> to vector<4x8x8xi1>
    %173 = vector.broadcast %cst_80 : f32 to vector<4x8x8xf32>
    %174 = arith.select %172, %169, %173 : vector<4x8x8xi1>, vector<4x8x8xf32>
    %cst_81 = arith.constant dense<0xFF800000> : vector<4x8xf32>
    %175 = vector.multi_reduction <maximumf>, %174, %cst_81 [2] : vector<4x8x8xf32> to vector<4x8xf32>
    %176 = vector.shape_cast %175 : vector<4x8xf32> to vector<4x8x1xf32>
    %177 = vector.broadcast %176 : vector<4x8x1xf32> to vector<4x8x8xf32>
    %178 = arith.subf %174, %177 : vector<4x8x8xf32>
    %179 = math.exp %178 : vector<4x8x8xf32>
    %cst_82 = arith.constant dense<0.000000e+00> : vector<4x8xf32>
    %180 = vector.multi_reduction <add>, %179, %cst_82 [2] : vector<4x8x8xf32> to vector<4x8xf32>
    %181 = vector.shape_cast %180 : vector<4x8xf32> to vector<4x8x1xf32>
    %182 = tpu.reciprocal %181 {approx = true} : vector<4x8x1xf32> -> vector<4x8x1xf32>
    %183 = vector.broadcast %182 : vector<4x8x1xf32> to vector<4x8x8xf32>
    %184 = arith.mulf %179, %183 : vector<4x8x8xf32>
    %185 = arith.truncf %184 : vector<4x8x8xf32> to vector<4x8x8xbf16>
    %186 = arith.truncf %164 : vector<4x8x8xf32> to vector<4x8x8xbf16>
    "tpu.trace_start"() <{level = 10 : i32, message = "nts,nsd->ntd"}> : () -> ()
    %cst_83 = arith.constant dense<0.000000e+00> : vector<4x8x8xf32>
    %187 = tpu.matmul %185, %186, %cst_83 {dimension_numbers = #tpu.dot_dimension_numbers<[2], [1], [1], [2], [0, 0, 0, 1, 1, 2], [0], [0]>} : vector<4x8x8xbf16>, vector<4x8x8xbf16>, vector<4x8x8xf32> -> vector<4x8x8xf32>
    "tpu.trace_stop"() : () -> ()
    %188 = arith.truncf %187 : vector<4x8x8xf32> to vector<4x8x8xbf16>
    %c1_84 = arith.constant 1 : index
    %c0_85 = arith.constant 0 : index
    %c0_86 = arith.constant 0 : index
    %c0_87 = arith.constant 0 : index
    %189 = vector.load %arg8[%c1_84, %c0_85, %c0_86, %c0_87] : memref<2x4x8x32xbf16, #tpu.memory_space<vmem>>, vector<1x4x8x32xbf16>
    %190 = vector.shape_cast %189 : vector<1x4x8x32xbf16> to vector<4x8x32xbf16>
    "tpu.trace_start"() <{level = 10 : i32, message = "ntd,ndc->ntc"}> : () -> ()
    %cst_88 = arith.constant dense<0.000000e+00> : vector<4x8x32xf32>
    %191 = tpu.matmul %188, %190, %cst_88 {dimension_numbers = #tpu.dot_dimension_numbers<[2], [1], [1], [2], [0, 0, 0, 1, 1, 2], [0], [0]>} : vector<4x8x8xbf16>, vector<4x8x32xbf16>, vector<4x8x32xf32> -> vector<4x8x32xf32>
    "tpu.trace_stop"() : () -> ()
    %cst_89 = arith.constant dense<0.000000e+00> : vector<8x32xf32>
    %192 = vector.multi_reduction <add>, %191, %cst_89 [0] : vector<4x8x32xf32> to vector<8x32xf32>
    %c1_90 = arith.constant 1 : index
    %c0_91 = arith.constant 0 : index
    %c0_92 = arith.constant 0 : index
    %193 = vector.load %arg9[%c1_90, %c0_91, %c0_92] : memref<2x1x32xf32, #tpu.memory_space<vmem>>, vector<1x1x32xf32>
    %194 = vector.shape_cast %193 : vector<1x1x32xf32> to vector<1x32xf32>
    %195 = vector.broadcast %194 : vector<1x32xf32> to vector<8x32xf32>
    %196 = arith.addf %192, %195 : vector<8x32xf32>
    %197 = arith.addf %128, %196 : vector<8x32xf32>
    %c1_93 = arith.constant 1 : index
    %c0_94 = arith.constant 0 : index
    %c0_95 = arith.constant 0 : index
    %198 = vector.load %arg10[%c1_93, %c0_94, %c0_95] : memref<2x1x32xf32, #tpu.memory_space<vmem>>, vector<1x1x32xf32>
    %199 = vector.shape_cast %198 : vector<1x1x32xf32> to vector<1x32xf32>
    %c1_96 = arith.constant 1 : index
    %c0_97 = arith.constant 0 : index
    %c0_98 = arith.constant 0 : index
    %200 = vector.load %arg11[%c1_96, %c0_97, %c0_98] : memref<2x1x32xf32, #tpu.memory_space<vmem>>, vector<1x1x32xf32>
    %201 = vector.shape_cast %200 : vector<1x1x32xf32> to vector<1x32xf32>
    %cst_99 = arith.constant dense<0.000000e+00> : vector<8xf32>
    %202 = vector.multi_reduction <add>, %197, %cst_99 [1] : vector<8x32xf32> to vector<8xf32>
    %203 = vector.shape_cast %202 : vector<8xf32> to vector<8x1xf32>
    %cst_100 = arith.constant 3.200000e+01 : f32
    %204 = vector.broadcast %cst_100 : f32 to vector<8x1xf32>
    %205 = arith.divf %203, %204 : vector<8x1xf32>
    %206 = vector.broadcast %205 : vector<8x1xf32> to vector<8x32xf32>
    %207 = arith.subf %197, %206 : vector<8x32xf32>
    %208 = arith.mulf %207, %207 : vector<8x32xf32>
    %cst_101 = arith.constant dense<0.000000e+00> : vector<8xf32>
    %209 = vector.multi_reduction <add>, %208, %cst_101 [1] : vector<8x32xf32> to vector<8xf32>
    %210 = vector.shape_cast %209 : vector<8xf32> to vector<8x1xf32>
    %cst_102 = arith.constant 3.200000e+01 : f32
    %211 = vector.broadcast %cst_102 : f32 to vector<8x1xf32>
    %212 = arith.divf %210, %211 : vector<8x1xf32>
    %213 = vector.broadcast %205 : vector<8x1xf32> to vector<8x32xf32>
    %214 = arith.subf %197, %213 : vector<8x32xf32>
    %cst_103 = arith.constant 9.99999974E-6 : f32
    %215 = vector.broadcast %cst_103 : f32 to vector<8x1xf32>
    %216 = arith.addf %212, %215 : vector<8x1xf32>
    %217 = math.rsqrt %216 : vector<8x1xf32>
    %218 = vector.broadcast %217 : vector<8x1xf32> to vector<8x32xf32>
    %219 = arith.mulf %214, %218 : vector<8x32xf32>
    %220 = vector.broadcast %199 : vector<1x32xf32> to vector<8x32xf32>
    %221 = arith.mulf %219, %220 : vector<8x32xf32>
    %222 = vector.broadcast %201 : vector<1x32xf32> to vector<8x32xf32>
    %223 = arith.addf %221, %222 : vector<8x32xf32>
    %224 = arith.truncf %223 : vector<8x32xf32> to vector<8x32xbf16>
    %c1_104 = arith.constant 1 : index
    %c0_105 = arith.constant 0 : index
    %c0_106 = arith.constant 0 : index
    %225 = vector.load %arg12[%c1_104, %c0_105, %c0_106] : memref<2x32x128xbf16, #tpu.memory_space<vmem>>, vector<1x32x128xbf16>
    %226 = vector.shape_cast %225 : vector<1x32x128xbf16> to vector<32x128xbf16>
    %cst_107 = arith.constant dense<0.000000e+00> : vector<8x128xf32>
    %227 = tpu.matmul %224, %226, %cst_107 {dimension_numbers = #tpu.dot_dimension_numbers<[1], [0], [0], [1], [0, 0, 1, 1], [], []>} : vector<8x32xbf16>, vector<32x128xbf16>, vector<8x128xf32> -> vector<8x128xf32>
    %c1_108 = arith.constant 1 : index
    %c0_109 = arith.constant 0 : index
    %c0_110 = arith.constant 0 : index
    %228 = vector.load %arg13[%c1_108, %c0_109, %c0_110] : memref<2x1x128xf32, #tpu.memory_space<vmem>>, vector<1x1x128xf32>
    %229 = vector.shape_cast %228 : vector<1x1x128xf32> to vector<1x128xf32>
    %230 = vector.broadcast %229 : vector<1x128xf32> to vector<8x128xf32>
    %231 = arith.addf %227, %230 : vector<8x128xf32>
    %cst_111 = arith.constant 0.000000e+00 : f32
    %232 = vector.broadcast %cst_111 : f32 to vector<8x128xf32>
    %233 = arith.maximumf %231, %232 : vector<8x128xf32>
    %234 = arith.truncf %233 : vector<8x128xf32> to vector<8x128xbf16>
    %c1_112 = arith.constant 1 : index
    %c0_113 = arith.constant 0 : index
    %c0_114 = arith.constant 0 : index
    %235 = vector.load %arg14[%c1_112, %c0_113, %c0_114] : memref<2x128x32xbf16, #tpu.memory_space<vmem>>, vector<1x128x32xbf16>
    %236 = vector.shape_cast %235 : vector<1x128x32xbf16> to vector<128x32xbf16>
    %cst_115 = arith.constant dense<0.000000e+00> : vector<8x32xf32>
    %237 = tpu.matmul %234, %236, %cst_115 {dimension_numbers = #tpu.dot_dimension_numbers<[1], [0], [0], [1], [0, 0, 1, 1], [], []>} : vector<8x128xbf16>, vector<128x32xbf16>, vector<8x32xf32> -> vector<8x32xf32>
    %c1_116 = arith.constant 1 : index
    %c0_117 = arith.constant 0 : index
    %c0_118 = arith.constant 0 : index
    %238 = vector.load %arg15[%c1_116, %c0_117, %c0_118] : memref<2x1x32xf32, #tpu.memory_space<vmem>>, vector<1x1x32xf32>
    %239 = vector.shape_cast %238 : vector<1x1x32xf32> to vector<1x32xf32>
    %240 = vector.broadcast %239 : vector<1x32xf32> to vector<8x32xf32>
    %241 = arith.addf %237, %240 : vector<8x32xf32>
    %242 = arith.addf %197, %241 : vector<8x32xf32>
    %c0_119 = arith.constant 0 : index
    %c0_120 = arith.constant 0 : index
    %243 = vector.load %arg16[%c0_119, %c0_120] : memref<1x32xf32, #tpu.memory_space<vmem>>, vector<1x32xf32>
    %c0_121 = arith.constant 0 : index
    %c0_122 = arith.constant 0 : index
    %244 = vector.load %arg17[%c0_121, %c0_122] : memref<1x32xf32, #tpu.memory_space<vmem>>, vector<1x32xf32>
    %cst_123 = arith.constant dense<0.000000e+00> : vector<8xf32>
    %245 = vector.multi_reduction <add>, %242, %cst_123 [1] : vector<8x32xf32> to vector<8xf32>
    %246 = vector.shape_cast %245 : vector<8xf32> to vector<8x1xf32>
    %cst_124 = arith.constant 3.200000e+01 : f32
    %247 = vector.broadcast %cst_124 : f32 to vector<8x1xf32>
    %248 = arith.divf %246, %247 : vector<8x1xf32>
    %249 = vector.broadcast %248 : vector<8x1xf32> to vector<8x32xf32>
    %250 = arith.subf %242, %249 : vector<8x32xf32>
    %251 = arith.mulf %250, %250 : vector<8x32xf32>
    %cst_125 = arith.constant dense<0.000000e+00> : vector<8xf32>
    %252 = vector.multi_reduction <add>, %251, %cst_125 [1] : vector<8x32xf32> to vector<8xf32>
    %253 = vector.shape_cast %252 : vector<8xf32> to vector<8x1xf32>
    %cst_126 = arith.constant 3.200000e+01 : f32
    %254 = vector.broadcast %cst_126 : f32 to vector<8x1xf32>
    %255 = arith.divf %253, %254 : vector<8x1xf32>
    %256 = vector.broadcast %248 : vector<8x1xf32> to vector<8x32xf32>
    %257 = arith.subf %242, %256 : vector<8x32xf32>
    %cst_127 = arith.constant 9.99999974E-6 : f32
    %258 = vector.broadcast %cst_127 : f32 to vector<8x1xf32>
    %259 = arith.addf %255, %258 : vector<8x1xf32>
    %260 = math.rsqrt %259 : vector<8x1xf32>
    %261 = vector.broadcast %260 : vector<8x1xf32> to vector<8x32xf32>
    %262 = arith.mulf %257, %261 : vector<8x32xf32>
    %263 = vector.broadcast %243 : vector<1x32xf32> to vector<8x32xf32>
    %264 = arith.mulf %262, %263 : vector<8x32xf32>
    %265 = vector.broadcast %244 : vector<1x32xf32> to vector<8x32xf32>
    %266 = arith.addf %264, %265 : vector<8x32xf32>
    %267 = arith.truncf %266 : vector<8x32xf32> to vector<8x32xbf16>
    %c0_128 = arith.constant 0 : index
    %c0_129 = arith.constant 0 : index
    %268 = vector.load %arg18[%c0_128, %c0_129] : memref<32x128xbf16, #tpu.memory_space<vmem>>, vector<32x128xbf16>
    %cst_130 = arith.constant dense<0.000000e+00> : vector<8x128xf32>
    %269 = tpu.matmul %267, %268, %cst_130 {dimension_numbers = #tpu.dot_dimension_numbers<[1], [0], [0], [1], [0, 0, 1, 1], [], []>} : vector<8x32xbf16>, vector<32x128xbf16>, vector<8x128xf32> -> vector<8x128xf32>
    %c0_131 = arith.constant 0 : index
    %c0_132 = arith.constant 0 : index
    %270 = vector.load %arg19[%c0_131, %c0_132] : memref<1x128xf32, #tpu.memory_space<vmem>>, vector<1x128xf32>
    %271 = vector.broadcast %270 : vector<1x128xf32> to vector<8x128xf32>
    %272 = arith.addf %269, %271 : vector<8x128xf32>
    %273 = vector.shape_cast %272 : vector<8x128xf32> to vector<1x8x128xf32>
    %c0_133 = arith.constant 0 : index
    %c0_134 = arith.constant 0 : index
    %c0_135 = arith.constant 0 : index
    %274 = vector.load %arg20[%c0_133, %c0_134, %c0_135] : memref<1x8x128xf32, #tpu.memory_space<vmem>>, vector<1x8x128xf32>
    tpu.vector_store %arg20[%c0_133, %c0_134, %c0_135], %273 {strides = array<i32>} : memref<1x8x128xf32, #tpu.memory_space<vmem>>, vector<1x8x128xf32>,
    %c0_136 = arith.constant 0 : index
    %c0_137 = arith.constant 0 : index
    %c0_138 = arith.constant 0 : index
    %275 = vector.load %arg2[%c0_136, %c0_137, %c0_138] : memref<1x8x1xi32, #tpu.memory_space<vmem>>, vector<1x8x1xi32>
    %276 = vector.shape_cast %275 : vector<1x8x1xi32> to vector<8x1xi32>
    %277 = tpu.iota {dimensions = array<i32: 1>} : vector<8x128xi32>
    %c64_i32 = arith.constant 64 : i32
    %278 = vector.broadcast %c64_i32 : i32 to vector<8x128xi32>
    %279 = arith.cmpi slt, %277, %278 : vector<8x128xi32>
    %cst_139 = arith.constant -1.000000e+30 : f32
    %280 = vector.broadcast %cst_139 : f32 to vector<8x128xf32>
    %281 = arith.select %279, %272, %280 : vector<8x128xi1>, vector<8x128xf32>
    %cst_140 = arith.constant dense<0xFF800000> : vector<8xf32>
    %282 = vector.multi_reduction <maximumf>, %281, %cst_140 [1] : vector<8x128xf32> to vector<8xf32>
    %283 = vector.shape_cast %282 : vector<8xf32> to vector<8x1xf32>
    %284 = vector.broadcast %283 : vector<8x1xf32> to vector<8x128xf32>
    %285 = arith.subf %281, %284 : vector<8x128xf32>
    %286 = math.exp %285 : vector<8x128xf32>
    %cst_141 = arith.constant dense<0.000000e+00> : vector<8xf32>
    %287 = vector.multi_reduction <add>, %286, %cst_141 [1] : vector<8x128xf32> to vector<8xf32>
    %288 = vector.shape_cast %287 : vector<8xf32> to vector<8x1xf32>
    %289 = math.log %288 : vector<8x1xf32>
    %290 = arith.addf %283, %289 : vector<8x1xf32>
    %291 = vector.broadcast %276 : vector<8x1xi32> to vector<8x128xi32>
    %292 = arith.cmpi eq, %277, %291 : vector<8x128xi32>
    %293 = arith.extui %292 : vector<8x128xi1> to vector<8x128xi32>
    %294 = arith.sitofp %293 : vector<8x128xi32> to vector<8x128xf32>
    %295 = arith.mulf %294, %272 : vector<8x128xf32>
    %cst_142 = arith.constant dense<0.000000e+00> : vector<8xf32>
    %296 = vector.multi_reduction <add>, %295, %cst_142 [1] : vector<8x128xf32> to vector<8xf32>
    %297 = vector.shape_cast %296 : vector<8xf32> to vector<8x1xf32>
    %298 = arith.subf %290, %297 : vector<8x1xf32>
    %cst_143 = arith.constant dense<0.000000e+00> : vector<1xf32>
    %299 = vector.multi_reduction <add>, %298, %cst_143 [0] : vector<8x1xf32> to vector<1xf32>
    %300 = vector.shape_cast %299 : vector<1xf32> to vector<1x1xf32>
    %301 = vector.shape_cast %300 : vector<1x1xf32> to vector<1x1x1xf32>
    %c0_144 = arith.constant 0 : index
    %c0_145 = arith.constant 0 : index
    %c0_146 = arith.constant 0 : index
    %302 = vector.load %arg21[%c0_144, %c0_145, %c0_146] : memref<1x1x1xf32, #tpu.memory_space<vmem>>, vector<1x1x1xf32>
    tpu.vector_store %arg21[%c0_144, %c0_145, %c0_146], %301 {strides = array<i32>} : memref<1x1x1xf32, #tpu.memory_space<vmem>>, vector<1x1x1xf32>,
    return
  }
  func.func @transform_0(%arg0: i32) -> (i32, i32, i32) {
    %c0_i32 = arith.constant 0 : i32
    %c0_i32_0 = arith.constant 0 : i32
    %c0_i32_1 = arith.constant 0 : i32
    return %arg0, %c0_i32, %c0_i32_0 : i32, i32, i32
  }
  func.func @transform_1(%arg0: i32) -> (i32, i32, i32) {
    %c0_i32 = arith.constant 0 : i32
    %c0_i32_0 = arith.constant 0 : i32
    %c0_i32_1 = arith.constant 0 : i32
    return %arg0, %c0_i32, %c0_i32_0 : i32, i32, i32
  }
  func.func @transform_2(%arg0: i32) -> (i32, i32) {
    %c0_i32 = arith.constant 0 : i32
    %c0_i32_0 = arith.constant 0 : i32
    %c0_i32_1 = arith.constant 0 : i32
    return %c0_i32, %c0_i32_0 : i32, i32
  }
  func.func @transform_3(%arg0: i32) -> (i32, i32) {
    %c0_i32 = arith.constant 0 : i32
    %c0_i32_0 = arith.constant 0 : i32
    %c0_i32_1 = arith.constant 0 : i32
    return %c0_i32, %c0_i32_0 : i32, i32
  }
  func.func @transform_4(%arg0: i32) -> (i32, i32, i32) {
    %c0_i32 = arith.constant 0 : i32
    %c0_i32_0 = arith.constant 0 : i32
    %c0_i32_1 = arith.constant 0 : i32
    %c0_i32_2 = arith.constant 0 : i32
    return %c0_i32, %c0_i32_0, %c0_i32_1 : i32, i32, i32
  }
  func.func @transform_5(%arg0: i32) -> (i32, i32, i32) {
    %c0_i32 = arith.constant 0 : i32
    %c0_i32_0 = arith.constant 0 : i32
    %c0_i32_1 = arith.constant 0 : i32
    %c0_i32_2 = arith.constant 0 : i32
    return %c0_i32, %c0_i32_0, %c0_i32_1 : i32, i32, i32
  }
  func.func @transform_6(%arg0: i32) -> (i32, i32, i32, i32) {
    %c0_i32 = arith.constant 0 : i32
    %c0_i32_0 = arith.constant 0 : i32
    %c0_i32_1 = arith.constant 0 : i32
    %c0_i32_2 = arith.constant 0 : i32
    %c0_i32_3 = arith.constant 0 : i32
    return %c0_i32, %c0_i32_0, %c0_i32_1, %c0_i32_2 : i32, i32, i32, i32
  }
  func.func @transform_7(%arg0: i32) -> (i32, i32, i32, i32) {
    %c0_i32 = arith.constant 0 : i32
    %c0_i32_0 = arith.constant 0 : i32
    %c0_i32_1 = arith.constant 0 : i32
    %c0_i32_2 = arith.constant 0 : i32
    %c0_i32_3 = arith.constant 0 : i32
    return %c0_i32, %c0_i32_0, %c0_i32_1, %c0_i32_2 : i32, i32, i32, i32
  }
  func.func @transform_8(%arg0: i32) -> (i32, i32, i32) {
    %c0_i32 = arith.constant 0 : i32
    %c0_i32_0 = arith.constant 0 : i32
    %c0_i32_1 = arith.constant 0 : i32
    %c0_i32_2 = arith.constant 0 : i32
    return %c0_i32, %c0_i32_0, %c0_i32_1 : i32, i32, i32
  }
  func.func @transform_9(%arg0: i32) -> (i32, i32, i32) {
    %c0_i32 = arith.constant 0 : i32
    %c0_i32_0 = arith.constant 0 : i32
    %c0_i32_1 = arith.constant 0 : i32
    %c0_i32_2 = arith.constant 0 : i32
    return %c0_i32, %c0_i32_0, %c0_i32_1 : i32, i32, i32
  }
  func.func @transform_10(%arg0: i32) -> (i32, i32, i32) {
    %c0_i32 = arith.constant 0 : i32
    %c0_i32_0 = arith.constant 0 : i32
    %c0_i32_1 = arith.constant 0 : i32
    %c0_i32_2 = arith.constant 0 : i32
    return %c0_i32, %c0_i32_0, %c0_i32_1 : i32, i32, i32
  }
  func.func @transform_11(%arg0: i32) -> (i32, i32, i32) {
    %c0_i32 = arith.constant 0 : i32
    %c0_i32_0 = arith.constant 0 : i32
    %c0_i32_1 = arith.constant 0 : i32
    %c0_i32_2 = arith.constant 0 : i32
    return %c0_i32, %c0_i32_0, %c0_i32_1 : i32, i32, i32
  }
  func.func @transform_12(%arg0: i32) -> (i32, i32, i32) {
    %c0_i32 = arith.constant 0 : i32
    %c0_i32_0 = arith.constant 0 : i32
    %c0_i32_1 = arith.constant 0 : i32
    %c0_i32_2 = arith.constant 0 : i32
    return %c0_i32, %c0_i32_0, %c0_i32_1 : i32, i32, i32
  }
  func.func @transform_13(%arg0: i32) -> (i32, i32, i32) {
    %c0_i32 = arith.constant 0 : i32
    %c0_i32_0 = arith.constant 0 : i32
    %c0_i32_1 = arith.constant 0 : i32
    %c0_i32_2 = arith.constant 0 : i32
    return %c0_i32, %c0_i32_0, %c0_i32_1 : i32, i32, i32
  }
  func.func @transform_14(%arg0: i32) -> (i32, i32, i32) {
    %c0_i32 = arith.constant 0 : i32
    %c0_i32_0 = arith.constant 0 : i32
    %c0_i32_1 = arith.constant 0 : i32
    %c0_i32_2 = arith.constant 0 : i32
    return %c0_i32, %c0_i32_0, %c0_i32_1 : i32, i32, i32
  }
  func.func @transform_15(%arg0: i32) -> (i32, i32) {
    %c0_i32 = arith.constant 0 : i32
    %c0_i32_0 = arith.constant 0 : i32
    %c0_i32_1 = arith.constant 0 : i32
    return %c0_i32, %c0_i32_0 : i32, i32
  }
  func.func @transform_16(%arg0: i32) -> (i32, i32) {
    %c0_i32 = arith.constant 0 : i32
    %c0_i32_0 = arith.constant 0 : i32
    %c0_i32_1 = arith.constant 0 : i32
    return %c0_i32, %c0_i32_0 : i32, i32
  }
  func.func @transform_17(%arg0: i32) -> (i32, i32) {
    %c0_i32 = arith.constant 0 : i32
    %c0_i32_0 = arith.constant 0 : i32
    %c0_i32_1 = arith.constant 0 : i32
    return %c0_i32, %c0_i32_0 : i32, i32
  }
  func.func @transform_18(%arg0: i32) -> (i32, i32) {
    %c0_i32 = arith.constant 0 : i32
    %c0_i32_0 = arith.constant 0 : i32
    %c0_i32_1 = arith.constant 0 : i32
    return %c0_i32, %c0_i32_0 : i32, i32
  }
  func.func @transform_19(%arg0: i32) -> (i32, i32, i32) {
    %c0_i32 = arith.constant 0 : i32
    %c0_i32_0 = arith.constant 0 : i32
    %c0_i32_1 = arith.constant 0 : i32
    return %arg0, %c0_i32, %c0_i32_0 : i32, i32, i32
  }
  func.func @transform_20(%arg0: i32) -> (i32, i32, i32) {
    %c0_i32 = arith.constant 0 : i32
    %c0_i32_0 = arith.constant 0 : i32
    %c0_i32_1 = arith.constant 0 : i32
    return %arg0, %c0_i32, %c0_i32_0 : i32, i32, i32
  }
}

</mosaic_0001>

<llo_original>
// kernel: _forward_jit.1
$region0: #{_forward_jit.1}
  #allocation0 [shape = 'u32[]', space=smem, size = 0x4, offset = 0x4, fixed_abs, tag = 'smem constant byte address 0x4 - core index']
  #allocation1 [shape = 'u32[72,128]{1,0:T(1,128)}', space=vmem, size = 0x9000, scoped, tag = 'internal scratch']
  %s0 = inlined_call_operand.vmem [shape: s32[2,8,1], index: 0, kind: input, shape index: {}]
  %s1 = inlined_call_operand.vmem [shape: s32[2,8,1], index: 1, kind: input, shape index: {}]
  %s2 = inlined_call_operand.vmem [shape: bf16[64,32], index: 2, kind: input, shape index: {}]
  %s3 = inlined_call_operand.vmem [shape: f32[8,32], index: 3, kind: input, shape index: {}]
  %s4 = inlined_call_operand.vmem [shape: f32[2,1,32], index: 4, kind: input, shape index: {}]
  %s5 = inlined_call_operand.vmem [shape: f32[2,1,32], index: 5, kind: input, shape index: {}]
  %s6 = inlined_call_operand.vmem [shape: bf16[2,12,32,8], index: 6, kind: input, shape index: {}]
  %s7 = inlined_call_operand.vmem [shape: bf16[2,4,8,32], index: 7, kind: input, shape index: {}]
  %s8 = inlined_call_operand.vmem [shape: f32[2,1,32], index: 8, kind: input, shape index: {}]
  %s9 = inlined_call_operand.vmem [shape: f32[2,1,32], index: 9, kind: input, shape index: {}]
  %s10 = inlined_call_operand.vmem [shape: f32[2,1,32], index: 10, kind: input, shape index: {}]
  %s11 = inlined_call_operand.vmem [shape: bf16[2,32,128], index: 11, kind: input, shape index: {}]
  %s12 = inlined_call_operand.vmem [shape: f32[2,1,128], index: 12, kind: input, shape index: {}]
  %s13 = inlined_call_operand.vmem [shape: bf16[2,128,32], index: 13, kind: input, shape index: {}]
  %s14 = inlined_call_operand.vmem [shape: f32[2,1,32], index: 14, kind: input, shape index: {}]
  %s15 = inlined_call_operand.vmem [shape: f32[1,32], index: 15, kind: input, shape index: {}]
  %s16 = inlined_call_operand.vmem [shape: f32[1,32], index: 16, kind: input, shape index: {}]
  %s17 = inlined_call_operand.vmem [shape: bf16[32,128], index: 17, kind: input, shape index: {}]
  %s18 = inlined_call_operand.vmem [shape: f32[1,128], index: 18, kind: input, shape index: {}]
  %s19 = inlined_call_operand.hbm [shape: f32[2,8,128], index: 19, kind: output, shape index: {0}]
  %s20 = inlined_call_operand.vmem [shape: f32[2,1,1], index: 20, kind: output, shape index: {1}]
  %21 = xla_tuple %s19, %s20
  %s22 = sld [smem:[#allocation0]]
  $region117: #{_forward_jit.1} parent=0
    _
  %s24 = ssub.s32 1, %s22
  %s25 = scalar_select 0, %s24, %s22
  $region1: #{_forward_jit.1} parent=0
    #allocation2 [shape = 'u8[8192]{0}', space=vmem, size = 0x2000, scoped, tag = 'output window, operand 0']
    #allocation3 [shape = 's32[2]{0}', space=sflag, size = 0x8, scoped, tag = 'scoped memory for _forward_jit.1']
    %26 = vsyncpa [#allocation3], 0
    %s27 = scalar_lea.sflag [#allocation3], 1
    %28 = vsyncpa %s27, 0
    loop: start=0, step=1, limit=4
    $region2: #{_forward_jit.1} parent=1 // loop_pre_header
      _
    $region3: #{_forward_jit.1} parent=1 // loop_header
      %s30 = sphi 0, %s34
      %p31 = scmp.ge.s32.totalorder %s30, 4
      %s40 = sphi 0, %s42
      %s43 = sphi 0, %s40
      %s44 = sphi 0, %s43
      %s60 = sphi 0, %s44
      %s66 = sphi 0, %s68
      %s69 = sphi 0, %s66
      %s70 = sphi 0, %s69
      %s86 = sphi 0, %s70
      %s90 = sphi 0, %s90
      %s92 = sphi 0, %s90
      %s93 = sphi 0, %s92
      %s107 = sphi 0, %s93
      %s111 = sphi 0, %s111
      %s113 = sphi 0, %s111
      %s114 = sphi 0, %s113
      %s128 = sphi 0, %s114
      %s132 = sphi 0, %s132
      %s134 = sphi 0, %s132
      %s135 = sphi 0, %s134
      %s149 = sphi 0, %s135
      %s153 = sphi 0, %s153
      %s155 = sphi 0, %s153
      %s156 = sphi 0, %s155
      %s170 = sphi 0, %s156
      %s174 = sphi 0, %s174
      %s176 = sphi 0, %s174
      %s177 = sphi 0, %s176
      %s191 = sphi 0, %s177
      %s195 = sphi 0, %s195
      %s197 = sphi 0, %s195
      %s198 = sphi 0, %s197
      %s212 = sphi 0, %s198
      %s216 = sphi 0, %s216
      %s218 = sphi 0, %s216
      %s219 = sphi 0, %s218
      %s233 = sphi 0, %s219
      %s237 = sphi 0, %s237
      %s239 = sphi 0, %s237
      %s240 = sphi 0, %s239
      %s254 = sphi 0, %s240
      %s258 = sphi 0, %s258
      %s260 = sphi 0, %s258
      %s261 = sphi 0, %s260
      %s275 = sphi 0, %s261
      %s279 = sphi 0, %s279
      %s281 = sphi 0, %s279
      %s282 = sphi 0, %s281
      %s296 = sphi 0, %s282
      %s300 = sphi 0, %s300
      %s302 = sphi 0, %s300
      %s303 = sphi 0, %s302
      %s317 = sphi 0, %s303
      %s321 = sphi 0, %s321
      %s323 = sphi 0, %s321
      %s324 = sphi 0, %s323
      %s338 = sphi 0, %s324
      %s342 = sphi 0, %s342
      %s344 = sphi 0, %s342
      %s345 = sphi 0, %s344
      %s359 = sphi 0, %s345
      %s363 = sphi 0, %s363
      %s365 = sphi 0, %s363
      %s366 = sphi 0, %s365
      %s380 = sphi 0, %s366
      %s384 = sphi 0, %s384
      %s386 = sphi 0, %s384
      %s387 = sphi 0, %s386
      %s401 = sphi 0, %s387
      %s405 = sphi 0, %s405
      %s407 = sphi 0, %s405
      %s408 = sphi 0, %s407
      %s422 = sphi 0, %s408
      %s426 = sphi 0, %s426
      %s428 = sphi 0, %s426
      %s429 = sphi 0, %s428
      %s443 = sphi 0, %s429
      %s449 = sphi 0, %s451
      %s452 = sphi 0, %s449
      %s453 = sphi 0, %s452
      %s469 = sphi 0, %s453
      %s475 = sphi 0, %s477
      %s478 = sphi 0, %s475
      %s479 = sphi 0, %s478
      %s495 = sphi 0, %s479
    $region4: #{_forward_jit.1} parent=1 // loop_header_branch
      %33 = sbr.rel (%p31) target = $region8
    $region5: #{_forward_jit.1} parent=1 // loop_body
      %s35 = ssub.s32 %s30, 1
      %s36 = ssub.s32 %s30, 2
      %s37 = sadd.s32 %s30, 1
      %s38 = ssub.s32 %s30, %s37
      %p39 = scmp.eq.s32.totalorder %s38, 0
      %s41 = sadd.s32 %s40, 1
      %s42 = scalar_select %p39, %s40, %s41
      %p45 = pneg %p39
      %p46 = scmp.eq.s32.totalorder %s30, 1
      %p47 = por %p45, %p46
      %p48 = scmp.ne.s32.totalorder %s40, %s43
      %p49 = scmp.eq.s32.totalorder %s30, 0
      %p50 = por %p48, %p49
      %p51 = scmp.ne.s32.totalorder %s40, %s43
      %p52 = scmp.eq.s32.totalorder %s35, 1
      %p53 = por %p51, %p52
      %p54 = scmp.ne.s32.totalorder %s43, %s44
      %p55 = scmp.eq.s32.totalorder %s35, 0
      %p56 = por %p54, %p55
      %p57 = scmp.ne.s32.totalorder %s43, %s44
      %p58 = scmp.eq.s32.totalorder %s36, 1
      %p59 = por %p57, %p58
      %p61 = scmp.ne.s32.totalorder %s44, %s60
      %p62 = scmp.eq.s32.totalorder %s36, 0
      %p63 = por %p61, %p62
      %s64 = ssub.s32 %s30, %s37
      %p65 = scmp.eq.s32.totalorder %s64, 0
      %s67 = sadd.s32 %s66, 1
      %s68 = scalar_select %p65, %s66, %s67
      %p71 = pneg %p65
      %p72 = scmp.eq.s32.totalorder %s30, 1
      %p73 = por %p71, %p72
      %p74 = scmp.ne.s32.totalorder %s66, %s69
      %p75 = scmp.eq.s32.totalorder %s30, 0
      %p76 = por %p74, %p75
      %p77 = scmp.ne.s32.totalorder %s66, %s69
      %p78 = scmp.eq.s32.totalorder %s35, 1
      %p79 = por %p77, %p78
      %p80 = scmp.ne.s32.totalorder %s69, %s70
      %p81 = scmp.eq.s32.totalorder %s35, 0
      %p82 = por %p80, %p81
      %p83 = scmp.ne.s32.totalorder %s69, %s70
      %p84 = scmp.eq.s32.totalorder %s36, 1
      %p85 = por %p83, %p84
      %p87 = scmp.ne.s32.totalorder %s70, %s86
      %p88 = scmp.eq.s32.totalorder %s36, 0
      %p89 = por %p87, %p88
      %s91 = sadd.s32 %s90, 1
      %p94 = scmp.eq.s32.totalorder %s30, 1
      %p95 = scmp.ne.s32.totalorder %s90, %s92
      %p96 = scmp.eq.s32.totalorder %s30, 0
      %p97 = por %p95, %p96
      %p98 = scmp.ne.s32.totalorder %s90, %s92
      %p99 = scmp.eq.s32.totalorder %s35, 1
      %p100 = por %p98, %p99
      %p101 = scmp.ne.s32.totalorder %s92, %s93
      %p102 = scmp.eq.s32.totalorder %s35, 0
      %p103 = por %p101, %p102
      %p104 = scmp.ne.s32.totalorder %s92, %s93
      %p105 = scmp.eq.s32.totalorder %s36, 1
      %p106 = por %p104, %p105
      %p108 = scmp.ne.s32.totalorder %s93, %s107
      %p109 = scmp.eq.s32.totalorder %s36, 0
      %p110 = por %p108, %p109
      %s112 = sadd.s32 %s111, 1
      %p115 = scmp.eq.s32.totalorder %s30, 1
      %p116 = scmp.ne.s32.totalorder %s111, %s113
      %p117 = scmp.eq.s32.totalorder %s30, 0
      %p118 = por %p116, %p117
      %p119 = scmp.ne.s32.totalorder %s111, %s113
      %p120 = scmp.eq.s32.totalorder %s35, 1
      %p121 = por %p119, %p120
      %p122 = scmp.ne.s32.totalorder %s113, %s114
      %p123 = scmp.eq.s32.totalorder %s35, 0
      %p124 = por %p122, %p123
      %p125 = scmp.ne.s32.totalorder %s113, %s114
      %p126 = scmp.eq.s32.totalorder %s36, 1
      %p127 = por %p125, %p126
      %p129 = scmp.ne.s32.totalorder %s114, %s128
      %p130 = scmp.eq.s32.totalorder %s36, 0
      %p131 = por %p129, %p130
      %s133 = sadd.s32 %s132, 1
      %p136 = scmp.eq.s32.totalorder %s30, 1
      %p137 = scmp.ne.s32.totalorder %s132, %s134
      %p138 = scmp.eq.s32.totalorder %s30, 0
      %p139 = por %p137, %p138
      %p140 = scmp.ne.s32.totalorder %s132, %s134
      %p141 = scmp.eq.s32.totalorder %s35, 1
      %p142 = por %p140, %p141
      %p143 = scmp.ne.s32.totalorder %s134, %s135
      %p144 = scmp.eq.s32.totalorder %s35, 0
      %p145 = por %p143, %p144
      %p146 = scmp.ne.s32.totalorder %s134, %s135
      %p147 = scmp.eq.s32.totalorder %s36, 1
      %p148 = por %p146, %p147
      %p150 = scmp.ne.s32.totalorder %s135, %s149
      %p151 = scmp.eq.s32.totalorder %s36, 0
      %p152 = por %p150, %p151
      %s154 = sadd.s32 %s153, 1
      %p157 = scmp.eq.s32.totalorder %s30, 1
      %p158 = scmp.ne.s32.totalorder %s153, %s155
      %p159 = scmp.eq.s32.totalorder %s30, 0
      %p160 = por %p158, %p159
      %p161 = scmp.ne.s32.totalorder %s153, %s155
      %p162 = scmp.eq.s32.totalorder %s35, 1
      %p163 = por %p161, %p162
      %p164 = scmp.ne.s32.totalorder %s155, %s156
      %p165 = scmp.eq.s32.totalorder %s35, 0
      %p166 = por %p164, %p165
      %p167 = scmp.ne.s32.totalorder %s155, %s156
      %p168 = scmp.eq.s32.totalorder %s36, 1
      %p169 = por %p167, %p168
      %p171 = scmp.ne.s32.totalorder %s156, %s170
      %p172 = scmp.eq.s32.totalorder %s36, 0
      %p173 = por %p171, %p172
      %s175 = sadd.s32 %s174, 1
      %p178 = scmp.eq.s32.totalorder %s30, 1
      %p179 = scmp.ne.s32.totalorder %s174, %s176
      %p180 = scmp.eq.s32.totalorder %s30, 0
      %p181 = por %p179, %p180
      %p182 = scmp.ne.s32.totalorder %s174, %s176
      %p183 = scmp.eq.s32.totalorder %s35, 1
      %p184 = por %p182, %p183
      %p185 = scmp.ne.s32.totalorder %s176, %s177
      %p186 = scmp.eq.s32.totalorder %s35, 0
      %p187 = por %p185, %p186
      %p188 = scmp.ne.s32.totalorder %s176, %s177
      %p189 = scmp.eq.s32.totalorder %s36, 1
      %p190 = por %p188, %p189
      %p192 = scmp.ne.s32.totalorder %s177, %s191
      %p193 = scmp.eq.s32.totalorder %s36, 0
      %p194 = por %p192, %p193
      %s196 = sadd.s32 %s195, 1
      %p199 = scmp.eq.s32.totalorder %s30, 1
      %p200 = scmp.ne.s32.totalorder %s195, %s197
      %p201 = scmp.eq.s32.totalorder %s30, 0
      %p202 = por %p200, %p201
      %p203 = scmp.ne.s32.totalorder %s195, %s197
      %p204 = scmp.eq.s32.totalorder %s35, 1
      %p205 = por %p203, %p204
      %p206 = scmp.ne.s32.totalorder %s197, %s198
      %p207 = scmp.eq.s32.totalorder %s35, 0
      %p208 = por %p206, %p207
      %p209 = scmp.ne.s32.totalorder %s197, %s198
      %p210 = scmp.eq.s32.totalorder %s36, 1
      %p211 = por %p209, %p210
      %p213 = scmp.ne.s32.totalorder %s198, %s212
      %p214 = scmp.eq.s32.totalorder %s36, 0
      %p215 = por %p213, %p214
      %s217 = sadd.s32 %s216, 1
      %p220 = scmp.eq.s32.totalorder %s30, 1
      %p221 = scmp.ne.s32.totalorder %s216, %s218
      %p222 = scmp.eq.s32.totalorder %s30, 0
      %p223 = por %p221, %p222
      %p224 = scmp.ne.s32.totalorder %s216, %s218
      %p225 = scmp.eq.s32.totalorder %s35, 1
      %p226 = por %p224, %p225
      %p227 = scmp.ne.s32.totalorder %s218, %s219
      %p228 = scmp.eq.s32.totalorder %s35, 0
      %p229 = por %p227, %p228
      %p230 = scmp.ne.s32.totalorder %s218, %s219
      %p231 = scmp.eq.s32.totalorder %s36, 1
      %p232 = por %p230, %p231
      %p234 = scmp.ne.s32.totalorder %s219, %s233
      %p235 = scmp.eq.s32.totalorder %s36, 0
      %p236 = por %p234, %p235
      %s238 = sadd.s32 %s237, 1
      %p241 = scmp.eq.s32.totalorder %s30, 1
      %p242 = scmp.ne.s32.totalorder %s237, %s239
      %p243 = scmp.eq.s32.totalorder %s30, 0
      %p244 = por %p242, %p243
      %p245 = scmp.ne.s32.totalorder %s237, %s239
      %p246 = scmp.eq.s32.totalorder %s35, 1
      %p247 = por %p245, %p246
      %p248 = scmp.ne.s32.totalorder %s239, %s240
      %p249 = scmp.eq.s32.totalorder %s35, 0
      %p250 = por %p248, %p249
      %p251 = scmp.ne.s32.totalorder %s239, %s240
      %p252 = scmp.eq.s32.totalorder %s36, 1
      %p253 = por %p251, %p252
      %p255 = scmp.ne.s32.totalorder %s240, %s254
      %p256 = scmp.eq.s32.totalorder %s36, 0
      %p257 = por %p255, %p256
      %s259 = sadd.s32 %s258, 1
      %p262 = scmp.eq.s32.totalorder %s30, 1
      %p263 = scmp.ne.s32.totalorder %s258, %s260
      %p264 = scmp.eq.s32.totalorder %s30, 0
      %p265 = por %p263, %p264
      %p266 = scmp.ne.s32.totalorder %s258, %s260
      %p267 = scmp.eq.s32.totalorder %s35, 1
      %p268 = por %p266, %p267
      %p269 = scmp.ne.s32.totalorder %s260, %s261
      %p270 = scmp.eq.s32.totalorder %s35, 0
      %p271 = por %p269, %p270
      %p272 = scmp.ne.s32.totalorder %s260, %s261
      %p273 = scmp.eq.s32.totalorder %s36, 1
      %p274 = por %p272, %p273
      %p276 = scmp.ne.s32.totalorder %s261, %s275
      %p277 = scmp.eq.s32.totalorder %s36, 0
      %p278 = por %p276, %p277
      %s280 = sadd.s32 %s279, 1
      %p283 = scmp.eq.s32.totalorder %s30, 1
      %p284 = scmp.ne.s32.totalorder %s279, %s281
      %p285 = scmp.eq.s32.totalorder %s30, 0
      %p286 = por %p284, %p285
      %p287 = scmp.ne.s32.totalorder %s279, %s281
      %p288 = scmp.eq.s32.totalorder %s35, 1
      %p289 = por %p287, %p288
      %p290 = scmp.ne.s32.totalorder %s281, %s282
      %p291 = scmp.eq.s32.totalorder %s35, 0
      %p292 = por %p290, %p291
      %p293 = scmp.ne.s32.totalorder %s281, %s282
      %p294 = scmp.eq.s32.totalorder %s36, 1
      %p295 = por %p293, %p294
      %p297 = scmp.ne.s32.totalorder %s282, %s296
      %p298 = scmp.eq.s32.totalorder %s36, 0
      %p299 = por %p297, %p298
      %s301 = sadd.s32 %s300, 1
      %p304 = scmp.eq.s32.totalorder %s30, 1
      %p305 = scmp.ne.s32.totalorder %s300, %s302
      %p306 = scmp.eq.s32.totalorder %s30, 0
      %p307 = por %p305, %p306
      %p308 = scmp.ne.s32.totalorder %s300, %s302
      %p309 = scmp.eq.s32.totalorder %s35, 1
      %p310 = por %p308, %p309
      %p311 = scmp.ne.s32.totalorder %s302, %s303
      %p312 = scmp.eq.s32.totalorder %s35, 0
      %p313 = por %p311, %p312
      %p314 = scmp.ne.s32.totalorder %s302, %s303
      %p315 = scmp.eq.s32.totalorder %s36, 1
      %p316 = por %p314, %p315
      %p318 = scmp.ne.s32.totalorder %s303, %s317
      %p319 = scmp.eq.s32.totalorder %s36, 0
      %p320 = por %p318, %p319
      %s322 = sadd.s32 %s321, 1
      %p325 = scmp.eq.s32.totalorder %s30, 1
      %p326 = scmp.ne.s32.totalorder %s321, %s323
      %p327 = scmp.eq.s32.totalorder %s30, 0
      %p328 = por %p326, %p327
      %p329 = scmp.ne.s32.totalorder %s321, %s323
      %p330 = scmp.eq.s32.totalorder %s35, 1
      %p331 = por %p329, %p330
      %p332 = scmp.ne.s32.totalorder %s323, %s324
      %p333 = scmp.eq.s32.totalorder %s35, 0
      %p334 = por %p332, %p333
      %p335 = scmp.ne.s32.totalorder %s323, %s324
      %p336 = scmp.eq.s32.totalorder %s36, 1
      %p337 = por %p335, %p336
      %p339 = scmp.ne.s32.totalorder %s324, %s338
      %p340 = scmp.eq.s32.totalorder %s36, 0
      %p341 = por %p339, %p340
      %s343 = sadd.s32 %s342, 1
      %p346 = scmp.eq.s32.totalorder %s30, 1
      %p347 = scmp.ne.s32.totalorder %s342, %s344
      %p348 = scmp.eq.s32.totalorder %s30, 0
      %p349 = por %p347, %p348
      %p350 = scmp.ne.s32.totalorder %s342, %s344
      %p351 = scmp.eq.s32.totalorder %s35, 1
      %p352 = por %p350, %p351
      %p353 = scmp.ne.s32.totalorder %s344, %s345
      %p354 = scmp.eq.s32.totalorder %s35, 0
      %p355 = por %p353, %p354
      %p356 = scmp.ne.s32.totalorder %s344, %s345
      %p357 = scmp.eq.s32.totalorder %s36, 1
      %p358 = por %p356, %p357
      %p360 = scmp.ne.s32.totalorder %s345, %s359
      %p361 = scmp.eq.s32.totalorder %s36, 0
      %p362 = por %p360, %p361
      %s364 = sadd.s32 %s363, 1
      %p367 = scmp.eq.s32.totalorder %s30, 1
      %p368 = scmp.ne.s32.totalorder %s363, %s365
      %p369 = scmp.eq.s32.totalorder %s30, 0
      %p370 = por %p368, %p369
      %p371 = scmp.ne.s32.totalorder %s363, %s365
      %p372 = scmp.eq.s32.totalorder %s35, 1
      %p373 = por %p371, %p372
      %p374 = scmp.ne.s32.totalorder %s365, %s366
      %p375 = scmp.eq.s32.totalorder %s35, 0
      %p376 = por %p374, %p375
      %p377 = scmp.ne.s32.totalorder %s365, %s366
      %p378 = scmp.eq.s32.totalorder %s36, 1
      %p379 = por %p377, %p378
      %p381 = scmp.ne.s32.totalorder %s366, %s380
      %p382 = scmp.eq.s32.totalorder %s36, 0
      %p383 = por %p381, %p382
      %s385 = sadd.s32 %s384, 1
      %p388 = scmp.eq.s32.totalorder %s30, 1
      %p389 = scmp.ne.s32.totalorder %s384, %s386
      %p390 = scmp.eq.s32.totalorder %s30, 0
      %p391 = por %p389, %p390
      %p392 = scmp.ne.s32.totalorder %s384, %s386
      %p393 = scmp.eq.s32.totalorder %s35, 1
      %p394 = por %p392, %p393
      %p395 = scmp.ne.s32.totalorder %s386, %s387
      %p396 = scmp.eq.s32.totalorder %s35, 0
      %p397 = por %p395, %p396
      %p398 = scmp.ne.s32.totalorder %s386, %s387
      %p399 = scmp.eq.s32.totalorder %s36, 1
      %p400 = por %p398, %p399
      %p402 = scmp.ne.s32.totalorder %s387, %s401
      %p403 = scmp.eq.s32.totalorder %s36, 0
      %p404 = por %p402, %p403
      %s406 = sadd.s32 %s405, 1
      %p409 = scmp.eq.s32.totalorder %s30, 1
      %p410 = scmp.ne.s32.totalorder %s405, %s407
      %p411 = scmp.eq.s32.totalorder %s30, 0
      %p412 = por %p410, %p411
      %p413 = scmp.ne.s32.totalorder %s405, %s407
      %p414 = scmp.eq.s32.totalorder %s35, 1
      %p415 = por %p413, %p414
      %p416 = scmp.ne.s32.totalorder %s407, %s408
      %p417 = scmp.eq.s32.totalorder %s35, 0
      %p418 = por %p416, %p417
      %p419 = scmp.ne.s32.totalorder %s407, %s408
      %p420 = scmp.eq.s32.totalorder %s36, 1
      %p421 = por %p419, %p420
      %p423 = scmp.ne.s32.totalorder %s408, %s422
      %p424 = scmp.eq.s32.totalorder %s36, 0
      %p425 = por %p423, %p424
      %s427 = sadd.s32 %s426, 1
      %p430 = scmp.eq.s32.totalorder %s30, 1
      %p431 = scmp.ne.s32.totalorder %s426, %s428
      %p432 = scmp.eq.s32.totalorder %s30, 0
      %p433 = por %p431, %p432
      %p434 = scmp.ne.s32.totalorder %s426, %s428
      %p435 = scmp.eq.s32.totalorder %s35, 1
      %p436 = por %p434, %p435
      %p437 = scmp.ne.s32.totalorder %s428, %s429
      %p438 = scmp.eq.s32.totalorder %s35, 0
      %p439 = por %p437, %p438
      %p440 = scmp.ne.s32.totalorder %s428, %s429
      %p441 = scmp.eq.s32.totalorder %s36, 1
      %p442 = por %p440, %p441
      %p444 = scmp.ne.s32.totalorder %s429, %s443
      %p445 = scmp.eq.s32.totalorder %s36, 0
      %p446 = por %p444, %p445
      %s447 = ssub.s32 %s30, %s37
      %p448 = scmp.eq.s32.totalorder %s447, 0
      %s450 = sadd.s32 %s449, 1
      %s451 = scalar_select %p448, %s449, %s450
      %p454 = pneg %p448
      %p455 = scmp.eq.s32.totalorder %s30, 1
      %p456 = por %p454, %p455
      %p457 = scmp.ne.s32.totalorder %s449, %s452
      %p458 = scmp.eq.s32.totalorder %s30, 0
      %p459 = por %p457, %p458
      %p460 = scmp.ne.s32.totalorder %s449, %s452
      %p461 = scmp.eq.s32.totalorder %s35, 1
      %p462 = por %p460, %p461
      %p463 = scmp.ne.s32.totalorder %s452, %s453
      %p464 = scmp.eq.s32.totalorder %s35, 0
      %p465 = por %p463, %p464
      %p466 = scmp.ne.s32.totalorder %s452, %s453
      %p467 = scmp.eq.s32.totalorder %s36, 1
      %p468 = por %p466, %p467
      %p470 = scmp.ne.s32.totalorder %s453, %s469
      %p471 = scmp.eq.s32.totalorder %s36, 0
      %p472 = por %p470, %p471
      %s473 = ssub.s32 %s30, %s37
      %p474 = scmp.eq.s32.totalorder %s473, 0
      %s476 = sadd.s32 %s475, 1
      %s477 = scalar_select %p474, %s475, %s476
      %p480 = pneg %p474
      %p481 = scmp.eq.s32.totalorder %s30, 1
      %p482 = por %p480, %p481
      %p483 = scmp.ne.s32.totalorder %s475, %s478
      %p484 = scmp.eq.s32.totalorder %s30, 0
      %p485 = por %p483, %p484
      %p486 = scmp.ne.s32.totalorder %s475, %s478
      %p487 = scmp.eq.s32.totalorder %s35, 1
      %p488 = por %p486, %p487
      %p489 = scmp.ne.s32.totalorder %s478, %s479
      %p490 = scmp.eq.s32.totalorder %s35, 0
      %p491 = por %p489, %p490
      %p492 = scmp.ne.s32.totalorder %s478, %s479
      %p493 = scmp.eq.s32.totalorder %s36, 1
      %p494 = por %p492, %p493
      %p496 = scmp.ne.s32.totalorder %s479, %s495
      %p497 = scmp.eq.s32.totalorder %s36, 0
      %p498 = por %p496, %p497
      %p499 = scmp.le.s32.totalorder 1, %s30
      %p500 = scmp.lt.s32.totalorder %s30, 3
      %p501 = pnand %p499, %p500
      %p502 = pneg %p501
      // Predicated region
      $region9: #{_forward_jit.1} parent=5 // pred_check
        _
      $region10: #{_forward_jit.1} parent=5 // pred_check_branch
        %504 = sbr.rel (%p501) target = $region12
      $region11: #{_forward_jit.1} parent=5 // pred_region
        %s505 = ssub.s32 %s30, 1
        // Predicated region
        $region13: #{_forward_jit.1} parent=11 // pred_check
          %p506 = pneg %p103
        $region14: #{_forward_jit.1} parent=11 // pred_check_branch
          %508 = sbr.rel (%p506) target = $region16
        $region15: #{_forward_jit.1} parent=11 // pred_region
          _
        $region16: #{_forward_jit.1} parent=11 // pred_fallthru
          _
        // Predicated region
        $region17: #{_forward_jit.1} parent=11 // pred_check
          %p509 = pneg %p124
        $region18: #{_forward_jit.1} parent=11 // pred_check_branch
          %511 = sbr.rel (%p509) target = $region20
        $region19: #{_forward_jit.1} parent=11 // pred_region
          _
        $region20: #{_forward_jit.1} parent=11 // pred_fallthru
          _
        // Predicated region
        $region21: #{_forward_jit.1} parent=11 // pred_check
          %p512 = pneg %p145
        $region22: #{_forward_jit.1} parent=11 // pred_check_branch
          %514 = sbr.rel (%p512) target = $region24
        $region23: #{_forward_jit.1} parent=11 // pred_region
          _
        $region24: #{_forward_jit.1} parent=11 // pred_fallthru
          _
        // Predicated region
        $region25: #{_forward_jit.1} parent=11 // pred_check
          %p515 = pneg %p166
        $region26: #{_forward_jit.1} parent=11 // pred_check_branch
          %517 = sbr.rel (%p515) target = $region28
        $region27: #{_forward_jit.1} parent=11 // pred_region
          _
        $region28: #{_forward_jit.1} parent=11 // pred_fallthru
          _
        // Predicated region
        $region29: #{_forward_jit.1} parent=11 // pred_check
          %p518 = pneg %p187
        $region30: #{_forward_jit.1} parent=11 // pred_check_branch
          %520 = sbr.rel (%p518) target = $region32
        $region31: #{_forward_jit.1} parent=11 // pred_region
          _
        $region32: #{_forward_jit.1} parent=11 // pred_fallthru
          _
        // Predicated region
        $region33: #{_forward_jit.1} parent=11 // pred_check
          %p521 = pneg %p208
        $region34: #{_forward_jit.1} parent=11 // pred_check_branch
          %523 = sbr.rel (%p521) target = $region36
        $region35: #{_forward_jit.1} parent=11 // pred_region
          _
        $region36: #{_forward_jit.1} parent=11 // pred_fallthru
          _
        // Predicated region
        $region37: #{_forward_jit.1} parent=11 // pred_check
          %p524 = pneg %p229
        $region38: #{_forward_jit.1} parent=11 // pred_check_branch
          %526 = sbr.rel (%p524) target = $region40
        $region39: #{_forward_jit.1} parent=11 // pred_region
          _
        $region40: #{_forward_jit.1} parent=11 // pred_fallthru
          _
        // Predicated region
        $region41: #{_forward_jit.1} parent=11 // pred_check
          %p527 = pneg %p250
        $region42: #{_forward_jit.1} parent=11 // pred_check_branch
          %529 = sbr.rel (%p527) target = $region44
        $region43: #{_forward_jit.1} parent=11 // pred_region
          _
        $region44: #{_forward_jit.1} parent=11 // pred_fallthru
          _
        // Predicated region
        $region45: #{_forward_jit.1} parent=11 // pred_check
          %p530 = pneg %p271
        $region46: #{_forward_jit.1} parent=11 // pred_check_branch
          %532 = sbr.rel (%p530) target = $region48
        $region47: #{_forward_jit.1} parent=11 // pred_region
          _
        $region48: #{_forward_jit.1} parent=11 // pred_fallthru
          _
        // Predicated region
        $region49: #{_forward_jit.1} parent=11 // pred_check
          %p533 = pneg %p292
        $region50: #{_forward_jit.1} parent=11 // pred_check_branch
          %535 = sbr.rel (%p533) target = $region52
        $region51: #{_forward_jit.1} parent=11 // pred_region
          _
        $region52: #{_forward_jit.1} parent=11 // pred_fallthru
          _
        // Predicated region
        $region53: #{_forward_jit.1} parent=11 // pred_check
          %p536 = pneg %p313
        $region54: #{_forward_jit.1} parent=11 // pred_check_branch
          %538 = sbr.rel (%p536) target = $region56
        $region55: #{_forward_jit.1} parent=11 // pred_region
          _
        $region56: #{_forward_jit.1} parent=11 // pred_fallthru
          _
        // Predicated region
        $region57: #{_forward_jit.1} parent=11 // pred_check
          %p539 = pneg %p334
        $region58: #{_forward_jit.1} parent=11 // pred_check_branch
          %541 = sbr.rel (%p539) target = $region60
        $region59: #{_forward_jit.1} parent=11 // pred_region
          _
        $region60: #{_forward_jit.1} parent=11 // pred_fallthru
          _
        // Predicated region
        $region61: #{_forward_jit.1} parent=11 // pred_check
          %p542 = pneg %p355
        $region62: #{_forward_jit.1} parent=11 // pred_check_branch
          %544 = sbr.rel (%p542) target = $region64
        $region63: #{_forward_jit.1} parent=11 // pred_region
          _
        $region64: #{_forward_jit.1} parent=11 // pred_fallthru
          _
        // Predicated region
        $region65: #{_forward_jit.1} parent=11 // pred_check
          %p545 = pneg %p376
        $region66: #{_forward_jit.1} parent=11 // pred_check_branch
          %547 = sbr.rel (%p545) target = $region68
        $region67: #{_forward_jit.1} parent=11 // pred_region
          _
        $region68: #{_forward_jit.1} parent=11 // pred_fallthru
          _
        // Predicated region
        $region69: #{_forward_jit.1} parent=11 // pred_check
          %p548 = pneg %p397
        $region70: #{_forward_jit.1} parent=11 // pred_check_branch
          %550 = sbr.rel (%p548) target = $region72
        $region71: #{_forward_jit.1} parent=11 // pred_region
          _
        $region72: #{_forward_jit.1} parent=11 // pred_fallthru
          _
        // Predicated region
        $region73: #{_forward_jit.1} parent=11 // pred_check
          %p551 = pneg %p418
        $region74: #{_forward_jit.1} parent=11 // pred_check_branch
          %553 = sbr.rel (%p551) target = $region76
        $region75: #{_forward_jit.1} parent=11 // pred_region
          _
        $region76: #{_forward_jit.1} parent=11 // pred_fallthru
          _
        // Predicated region
        $region77: #{_forward_jit.1} parent=11 // pred_check
          %p554 = pneg %p439
        $region78: #{_forward_jit.1} parent=11 // pred_check_branch
          %556 = sbr.rel (%p554) target = $region80
        $region79: #{_forward_jit.1} parent=11 // pred_region
          _
        $region80: #{_forward_jit.1} parent=11 // pred_fallthru
          _
      $region12: #{_forward_jit.1} parent=5 // pred_fallthru
        _
      %p557 = scmp.lt.s32.totalorder %s30, 2
      // Predicated region
      $region81: #{_forward_jit.1} parent=5 // pred_check
        %p558 = pneg %p557
      $region82: #{_forward_jit.1} parent=5 // pred_check_branch
        %560 = sbr.rel (%p558) target = $region84
      $region83: #{_forward_jit.1} parent=5 // pred_region
        // Predicated region
        $region85: #{_forward_jit.1} parent=83 // pred_check
          %p561 = pneg %p50
        $region86: #{_forward_jit.1} parent=83 // pred_check_branch
          %563 = sbr.rel (%p561) target = $region88
        $region87: #{_forward_jit.1} parent=83 // pred_region
          %p564 = scmp.lt.s32.totalorder %s30, 1
          %s565 = scalar_select %p564, %s30, 1
          %s566 = smul.addr %s565, 8
          %s567 = scalar_lea.vmem %s0, %s566
        $region88: #{_forward_jit.1} parent=83 // pred_fallthru
          _
        // Predicated region
        $region89: #{_forward_jit.1} parent=83 // pred_check
          %p568 = pneg %p76
        $region90: #{_forward_jit.1} parent=83 // pred_check_branch
          %570 = sbr.rel (%p568) target = $region92
        $region91: #{_forward_jit.1} parent=83 // pred_region
          %p571 = scmp.lt.s32.totalorder %s30, 1
          %s572 = scalar_select %p571, %s30, 1
          %s573 = smul.addr %s572, 8
          %s574 = scalar_lea.vmem %s1, %s573
        $region92: #{_forward_jit.1} parent=83 // pred_fallthru
          _
      $region84: #{_forward_jit.1} parent=5 // pred_fallthru
        _
      %p575 = scmp.le.s32.totalorder 1, %s30
      %p576 = scmp.lt.s32.totalorder %s30, 3
      %p577 = pnand %p575, %p576
      %p578 = pneg %p577
      // Predicated region
      $region93: #{_forward_jit.1} parent=5 // pred_check
        _
      $region94: #{_forward_jit.1} parent=5 // pred_check_branch
        %580 = sbr.rel (%p577) target = $region96
      $region95: #{_forward_jit.1} parent=5 // pred_region
        %s581 = ssub.s32 %s30, 1
        %p582 = scmp.lt.s32.totalorder %s35, 1
        %s583 = scalar_select %p582, %s35, 1
        %s584 = smul.addr %s583, 8
        %s585 = scalar_lea.vmem %s0, %s584
        %p586 = pneg %p56
        %p587 = pneg %p53
        %p588 = scmp.lt.s32.totalorder %s35, 1
        %s589 = scalar_select %p588, %s35, 1
        %s590 = smul.addr %s589, 8
        %s591 = scalar_lea.vmem %s1, %s590
        %p592 = pneg %p82
        %p593 = pneg %p79
        %p594 = pneg %p103
        %p595 = pneg %p100
        %p596 = pneg %p124
        %p597 = pneg %p121
        %p598 = pneg %p145
        %p599 = pneg %p142
        %p600 = pneg %p166
        %p601 = pneg %p163
        %p602 = pneg %p187
        %p603 = pneg %p184
        %p604 = pneg %p208
        %p605 = pneg %p205
        %p606 = pneg %p229
        %p607 = pneg %p226
        %p608 = pneg %p250
        %p609 = pneg %p247
        %p610 = pneg %p271
        %p611 = pneg %p268
        %p612 = pneg %p292
        %p613 = pneg %p289
        %p614 = pneg %p313
        %p615 = pneg %p310
        %p616 = pneg %p334
        %p617 = pneg %p331
        %p618 = pneg %p355
        %p619 = pneg %p352
        %p620 = pneg %p376
        %p621 = pneg %p373
        %p622 = pneg %p397
        %p623 = pneg %p394
        %p624 = pneg %p418
        %p625 = pneg %p415
        %p626 = pneg %p439
        %p627 = pneg %p436
        %p628 = pneg %p465
        %p629 = pneg %p462
        %s630 = sand.u32 %s452, 1
        %s631 = scalar_lea.sflag [#allocation3], %s630
        %s632 = sand.u32 %s452, 1
        %s633 = smul.addr %s632, 8
        %s634 = scalar_lea.vmem [#allocation2], %s633
        %p635 = pneg %p491
        %p636 = pneg %p488
        %p637 = scmp.lt.s32.totalorder %s35, 1
        %s638 = scalar_select %p637, %s35, 1
        %s639 = scalar_lea.vmem %s20, %s638
        %p640 = scmp.lt.s32.totalorder %s35, 1
        %s641 = scalar_select %p640, %s35, 1
        %s642 = smul.addr %s641, 8
        %s643 = scalar_lea.vmem %s0, %s642
        %p644 = scmp.lt.s32.totalorder %s35, 1
        %s645 = scalar_select %p644, %s35, 1
        %s646 = smul.addr %s645, 8
        %s647 = scalar_lea.vmem %s1, %s646
        %p648 = scmp.lt.s32.totalorder %s35, 1
        %s649 = scalar_select %p648, %s35, 1
        %s650 = scalar_lea.vmem %s20, %s649
        %v652 = vld [vmem:[%s643] sm:$0xff]
        %v653 = vlaneseq
        %v654 = vand.u32 %v653, 127
        %655 = vset.pattern.permute.xlu0 0
        %656 = vperm.xlu0 %655, %v652
        %v657 = vpop.permute.xlu0 %656
        %vm658 = vcmp.eq.s32.totalorder %v654, %v657
        %v659 = vsel %vm658, 1, 0
        %v660 = vcvt.s32.f32 %v659
        %v661 = vpack.c.bf16 %v660, %v660
        %v662 = vld [vmem:[%s2] sm:$0xf]
        %v663 = vld [vmem:[%s2 + $0x4] sm:$0xf]
        %v664 = vld [vmem:[%s2 + $0x8] sm:$0xf]
        %v665 = vld [vmem:[%s2 + $0xc] sm:$0xf]
        %v666 = vld [vmem:[%s2 + $0x10] sm:$0xf]
        %v667 = vld [vmem:[%s2 + $0x14] sm:$0xf]
        %v668 = vld [vmem:[%s2 + $0x18] sm:$0xf]
        %v669 = vld [vmem:[%s2 + $0x1c] sm:$0xf]
        %v670 = vld [vmem:[%s3] sm:$0xff]
        %v679 = vunpack.c.l.b16 %v662
        %v680 = vunpack.c.l.b16 %v663
        %v681 = vunpack.c.l.b16 %v664
        %v682 = vunpack.c.l.b16 %v665
        %v683 = vunpack.c.l.b16 %v666
        %v684 = vunpack.c.l.b16 %v667
        %v685 = vunpack.c.l.b16 %v668
        %v686 = vunpack.c.l.b16 %v669
        %v687 = vpack.c.b16 %v680, %v679
        %v688 = vpack.c.b16 %v682, %v681
        %v689 = vpack.c.b16 %v684, %v683
        %v690 = vpack.c.b16 %v686, %v685
        %vm695 = vcmask 523264
        %v697 = vsel %vm695, %v661, 0
        %699 = vmatpush.bf16.msra.mxu0 0
        %700 = vmatpush.bf16.msra.mxu0 0
        %701 = vmatpush.bf16.msra.mxu0 0
        %702 = vmatpush.bf16.msra.mxu0 0
        %703 = vmatpush.bf16.msra.mxu0 %v690
        %704 = vmatpush.bf16.msra.mxu0 %v689
        %705 = vmatpush.bf16.msra.mxu0 %v688
        %706 = vmatpush.bf16.msra.mxu0 %v687
        %707 = vmatmul.bf16.gmra.mxu0 %v697
        %v708 = vpop.f32.mrf.mxu0
        %v709 = vadd.f32 %v670, %v708
        %v710 = vpop.f32.mrf.mxu0
        %711 = vdwg.mxu0
        %v712 = vlaneseq
        %v713 = vshrl.u32 %v712, 7
        %vm714 = vcmp.ge.s32.totalorder %v713, %v654
        %v715 = vld [vmem:[%s4] sm:$0x1]
        %v716 = vld [vmem:[%s5] sm:$0x1]
        %vm717 = vcmask 261120
        %v718 = vsel %vm717, %v709, 0.0
        %719 = vadd.xlane.f32.xlu0 %v718
        %v720 = vpop.xlane.xlu0 %719
        %v721 = vrcp.pop 32.0
        %v722 = vmul.f32 32.0, %v721
        %v723 = vsub.f32 1.0, %v722
        %v724 = vmul.f32 %v721, %v723
        %v725 = vadd.f32 %v721, %v724
        %vm726 = vweird.f32 %v721
        %v727 = vsel %vm726, %v721, %v725
        %v728 = vmul.f32 %v720, %v727
        %v729 = vsub.f32 %v709, %v728
        %v730 = vmul.f32 %v729, %v729
        %v731 = vsel %vm717, %v730, 0.0
        %732 = vadd.xlane.f32.xlu0 %v731
        %v733 = vpop.xlane.xlu0 %732
        %v734 = vmul.f32 %v733, %v727
        %v735 = vadd.f32 %v734, 1e-05
        %v736 = vrsqrt.pop %v735
        %v737 = vmul.f32 %v736, %v735
        %v738 = vmul.f32 %v737, %v736
        %v739 = vmul.f32 0.5, %v738
        %v740 = vsub.f32 1.5, %v739
        %v741 = vmul.f32 %v736, %v740
        %vm742 = vweird.f32 %v735
        %vm743 = vweird.f32 %v736
        %vm744 = vmor %vm742, %vm743
        %v745 = vsel %vm744, %v736, %v741
        %v746 = vmul.f32 %v729, %v745
        %v748 = vperm.slane %v715, 0
        %v750 = vmul.f32 %v746, %v748
        %v752 = vperm.slane %v716, 0
        %v754 = vadd.f32 %v750, %v752
        %v755 = vpack.c.bf16 %v754, %v754
        %v756 = vld [vmem:[%s6] sm:$0xf]
        %v757 = vld [vmem:[%s6 + $0x4] sm:$0xf]
        %v758 = vld [vmem:[%s6 + $0x8] sm:$0xf]
        %v759 = vld [vmem:[%s6 + $0xc] sm:$0xf]
        %v760 = vld [vmem:[%s6 + $0x10] sm:$0xf]
        %v761 = vld [vmem:[%s6 + $0x14] sm:$0xf]
        %v762 = vld [vmem:[%s6 + $0x18] sm:$0xf]
        %v763 = vld [vmem:[%s6 + $0x1c] sm:$0xf]
        %v764 = vld [vmem:[%s6 + $0x20] sm:$0xf]
        %v765 = vld [vmem:[%s6 + $0x24] sm:$0xf]
        %v766 = vld [vmem:[%s6 + $0x28] sm:$0xf]
        %v767 = vld [vmem:[%s6 + $0x2c] sm:$0xf]
        %v768 = vld [vmem:[%s6 + $0x30] sm:$0xf]
        %v769 = vld [vmem:[%s6 + $0x34] sm:$0xf]
        %v770 = vld [vmem:[%s6 + $0x38] sm:$0xf]
        %v771 = vld [vmem:[%s6 + $0x3c] sm:$0xf]
        %v772 = vld [vmem:[%s6 + $0x40] sm:$0xf]
        %v773 = vld [vmem:[%s6 + $0x44] sm:$0xf]
        %v774 = vld [vmem:[%s6 + $0x48] sm:$0xf]
        %v775 = vld [vmem:[%s6 + $0x4c] sm:$0xf]
        %v776 = vld [vmem:[%s6 + $0x50] sm:$0xf]
        %v777 = vld [vmem:[%s6 + $0x54] sm:$0xf]
        %v778 = vld [vmem:[%s6 + $0x58] sm:$0xf]
        %v779 = vld [vmem:[%s6 + $0x5c] sm:$0xf]
        %v780 = vld [vmem:[%s6 + $0x60] sm:$0xf]
        %v781 = vld [vmem:[%s6 + $0x64] sm:$0xf]
        %v782 = vld [vmem:[%s6 + $0x68] sm:$0xf]
        %v783 = vld [vmem:[%s6 + $0x6c] sm:$0xf]
        %v784 = vld [vmem:[%s6 + $0x70] sm:$0xf]
        %v785 = vld [vmem:[%s6 + $0x74] sm:$0xf]
        %v786 = vld [vmem:[%s6 + $0x78] sm:$0xf]
        %v787 = vld [vmem:[%s6 + $0x7c] sm:$0xf]
        %v788 = vld [vmem:[%s6 + $0x80] sm:$0xf]
        %v789 = vld [vmem:[%s6 + $0x84] sm:$0xf]
        %v790 = vld [vmem:[%s6 + $0x88] sm:$0xf]
        %v791 = vld [vmem:[%s6 + $0x8c] sm:$0xf]
        %v792 = vld [vmem:[%s6 + $0x90] sm:$0xf]
        %v793 = vld [vmem:[%s6 + $0x94] sm:$0xf]
        %v794 = vld [vmem:[%s6 + $0x98] sm:$0xf]
        %v795 = vld [vmem:[%s6 + $0x9c] sm:$0xf]
        %v796 = vld [vmem:[%s6 + $0xa0] sm:$0xf]
        %v797 = vld [vmem:[%s6 + $0xa4] sm:$0xf]
        %v798 = vld [vmem:[%s6 + $0xa8] sm:$0xf]
        %v799 = vld [vmem:[%s6 + $0xac] sm:$0xf]
        %v800 = vld [vmem:[%s6 + $0xb0] sm:$0xf]
        %v801 = vld [vmem:[%s6 + $0xb4] sm:$0xf]
        %v802 = vld [vmem:[%s6 + $0xb8] sm:$0xf]
        %v803 = vld [vmem:[%s6 + $0xbc] sm:$0xf]
        %v808 = vunpack.c.l.b16 %v756
        %v809 = vunpack.c.l.b16 %v757
        %v810 = vunpack.c.l.b16 %v758
        %v811 = vunpack.c.l.b16 %v759
        %v812 = vpack.c.b16 %v809, %v808
        %v813 = vpack.c.b16 %v811, %v810
        %v817 = vsel %vm717, %v755, 0
        %819 = vmatpush.bf16.msra.mxu0 0
        %820 = vmatpush.bf16.msra.mxu0 0
        %821 = vmatpush.bf16.msra.mxu0 0
        %822 = vmatpush.bf16.msra.mxu0 0
        %823 = vmatpush.bf16.msra.mxu0 0
        %824 = vmatpush.bf16.msra.mxu0 0
        %825 = vmatpush.bf16.msra.mxu0 %v813
        %826 = vmatpush.bf16.msra.mxu0 %v812
        %827 = vmatmul.bf16.gmra.mxu0 %v817
        %v828 = vpop.f32.mrf.mxu0
        %v829 = vadd.f32 0.0, %v828
        %v830 = vpop.f32.mrf.mxu0
        %831 = vdwg.mxu0
        %v836 = vunpack.c.l.b16 %v760
        %v837 = vunpack.c.l.b16 %v761
        %v838 = vunpack.c.l.b16 %v762
        %v839 = vunpack.c.l.b16 %v763
        %v840 = vpack.c.b16 %v837, %v836
        %v841 = vpack.c.b16 %v839, %v838
        %844 = vmatpush.bf16.msra.mxu0 0
        %845 = vmatpush.bf16.msra.mxu0 0
        %846 = vmatpush.bf16.msra.mxu0 0
        %847 = vmatpush.bf16.msra.mxu0 0
        %848 = vmatpush.bf16.msra.mxu0 0
        %849 = vmatpush.bf16.msra.mxu0 0
        %850 = vmatpush.bf16.msra.mxu0 %v841
        %851 = vmatpush.bf16.msra.mxu0 %v840
        %852 = vmatmul.bf16.gmra.mxu0 %v817
        %v853 = vpop.f32.mrf.mxu0
        %v854 = vadd.f32 0.0, %v853
        %v855 = vpop.f32.mrf.mxu0
        %856 = vdwg.mxu0
        %v861 = vunpack.c.l.b16 %v764
        %v862 = vunpack.c.l.b16 %v765
        %v863 = vunpack.c.l.b16 %v766
        %v864 = vunpack.c.l.b16 %v767
        %v865 = vpack.c.b16 %v862, %v861
        %v866 = vpack.c.b16 %v864, %v863
        %869 = vmatpush.bf16.msra.mxu0 0
        %870 = vmatpush.bf16.msra.mxu0 0
        %871 = vmatpush.bf16.msra.mxu0 0
        %872 = vmatpush.bf16.msra.mxu0 0
        %873 = vmatpush.bf16.msra.mxu0 0
        %874 = vmatpush.bf16.msra.mxu0 0
        %875 = vmatpush.bf16.msra.mxu0 %v866
        %876 = vmatpush.bf16.msra.mxu0 %v865
        %877 = vmatmul.bf16.gmra.mxu0 %v817
        %v878 = vpop.f32.mrf.mxu0
        %v879 = vadd.f32 0.0, %v878
        %v880 = vpop.f32.mrf.mxu0
        %881 = vdwg.mxu0
        %v886 = vunpack.c.l.b16 %v768
        %v887 = vunpack.c.l.b16 %v769
        %v888 = vunpack.c.l.b16 %v770
        %v889 = vunpack.c.l.b16 %v771
        %v890 = vpack.c.b16 %v887, %v886
        %v891 = vpack.c.b16 %v889, %v888
        %894 = vmatpush.bf16.msra.mxu0 0
        %895 = vmatpush.bf16.msra.mxu0 0
        %896 = vmatpush.bf16.msra.mxu0 0
        %897 = vmatpush.bf16.msra.mxu0 0
        %898 = vmatpush.bf16.msra.mxu0 0
        %899 = vmatpush.bf16.msra.mxu0 0
        %900 = vmatpush.bf16.msra.mxu0 %v891
        %901 = vmatpush.bf16.msra.mxu0 %v890
        %902 = vmatmul.bf16.gmra.mxu0 %v817
        %v903 = vpop.f32.mrf.mxu0
        %v904 = vadd.f32 0.0, %v903
        %v905 = vpop.f32.mrf.mxu0
        %906 = vdwg.mxu0
        %v911 = vunpack.c.l.b16 %v772
        %v912 = vunpack.c.l.b16 %v773
        %v913 = vunpack.c.l.b16 %v774
        %v914 = vunpack.c.l.b16 %v775
        %v915 = vpack.c.b16 %v912, %v911
        %v916 = vpack.c.b16 %v914, %v913
        %919 = vmatpush.bf16.msra.mxu0 0
        %920 = vmatpush.bf16.msra.mxu0 0
        %921 = vmatpush.bf16.msra.mxu0 0
        %922 = vmatpush.bf16.msra.mxu0 0
        %923 = vmatpush.bf16.msra.mxu0 0
        %924 = vmatpush.bf16.msra.mxu0 0
        %925 = vmatpush.bf16.msra.mxu0 %v916
        %926 = vmatpush.bf16.msra.mxu0 %v915
        %927 = vmatmul.bf16.gmra.mxu0 %v817
        %v928 = vpop.f32.mrf.mxu0
        %v929 = vadd.f32 0.0, %v928
        %v930 = vpop.f32.mrf.mxu0
        %931 = vdwg.mxu0
        %v936 = vunpack.c.l.b16 %v776
        %v937 = vunpack.c.l.b16 %v777
        %v938 = vunpack.c.l.b16 %v778
        %v939 = vunpack.c.l.b16 %v779
        %v940 = vpack.c.b16 %v937, %v936
        %v941 = vpack.c.b16 %v939, %v938
        %944 = vmatpush.bf16.msra.mxu0 0
        %945 = vmatpush.bf16.msra.mxu0 0
        %946 = vmatpush.bf16.msra.mxu0 0
        %947 = vmatpush.bf16.msra.mxu0 0
        %948 = vmatpush.bf16.msra.mxu0 0
        %949 = vmatpush.bf16.msra.mxu0 0
        %950 = vmatpush.bf16.msra.mxu0 %v941
        %951 = vmatpush.bf16.msra.mxu0 %v940
        %952 = vmatmul.bf16.gmra.mxu0 %v817
        %v953 = vpop.f32.mrf.mxu0
        %v954 = vadd.f32 0.0, %v953
        %v955 = vpop.f32.mrf.mxu0
        %956 = vdwg.mxu0
        %v961 = vunpack.c.l.b16 %v780
        %v962 = vunpack.c.l.b16 %v781
        %v963 = vunpack.c.l.b16 %v782
        %v964 = vunpack.c.l.b16 %v783
        %v965 = vpack.c.b16 %v962, %v961
        %v966 = vpack.c.b16 %v964, %v963
        %969 = vmatpush.bf16.msra.mxu0 0
        %970 = vmatpush.bf16.msra.mxu0 0
        %971 = vmatpush.bf16.msra.mxu0 0
        %972 = vmatpush.bf16.msra.mxu0 0
        %973 = vmatpush.bf16.msra.mxu0 0
        %974 = vmatpush.bf16.msra.mxu0 0
        %975 = vmatpush.bf16.msra.mxu0 %v966
        %976 = vmatpush.bf16.msra.mxu0 %v965
        %977 = vmatmul.bf16.gmra.mxu0 %v817
        %v978 = vpop.f32.mrf.mxu0
        %v979 = vadd.f32 0.0, %v978
        %v980 = vpop.f32.mrf.mxu0
        %981 = vdwg.mxu0
        %v986 = vunpack.c.l.b16 %v784
        %v987 = vunpack.c.l.b16 %v785
        %v988 = vunpack.c.l.b16 %v786
        %v989 = vunpack.c.l.b16 %v787
        %v990 = vpack.c.b16 %v987, %v986
        %v991 = vpack.c.b16 %v989, %v988
        %994 = vmatpush.bf16.msra.mxu0 0
        %995 = vmatpush.bf16.msra.mxu0 0
        %996 = vmatpush.bf16.msra.mxu0 0
        %997 = vmatpush.bf16.msra.mxu0 0
        %998 = vmatpush.bf16.msra.mxu0 0
        %999 = vmatpush.bf16.msra.mxu0 0
        %1000 = vmatpush.bf16.msra.mxu0 %v991
        %1001 = vmatpush.bf16.msra.mxu0 %v990
        %1002 = vmatmul.bf16.gmra.mxu0 %v817
        %v1003 = vpop.f32.mrf.mxu0
        %v1004 = vadd.f32 0.0, %v1003
        %v1005 = vpop.f32.mrf.mxu0
        %1006 = vdwg.mxu0
        %v1011 = vunpack.c.l.b16 %v788
        %v1012 = vunpack.c.l.b16 %v789
        %v1013 = vunpack.c.l.b16 %v790
        %v1014 = vunpack.c.l.b16 %v791
        %v1015 = vpack.c.b16 %v1012, %v1011
        %v1016 = vpack.c.b16 %v1014, %v1013
        %1019 = vmatpush.bf16.msra.mxu0 0
        %1020 = vmatpush.bf16.msra.mxu0 0
        %1021 = vmatpush.bf16.msra.mxu0 0
        %1022 = vmatpush.bf16.msra.mxu0 0
        %1023 = vmatpush.bf16.msra.mxu0 0
        %1024 = vmatpush.bf16.msra.mxu0 0
        %1025 = vmatpush.bf16.msra.mxu0 %v1016
        %1026 = vmatpush.bf16.msra.mxu0 %v1015
        %1027 = vmatmul.bf16.gmra.mxu0 %v817
        %v1028 = vpop.f32.mrf.mxu0
        %v1029 = vadd.f32 0.0, %v1028
        %v1030 = vpop.f32.mrf.mxu0
        %1031 = vdwg.mxu0
        %v1036 = vunpack.c.l.b16 %v792
        %v1037 = vunpack.c.l.b16 %v793
        %v1038 = vunpack.c.l.b16 %v794
        %v1039 = vunpack.c.l.b16 %v795
        %v1040 = vpack.c.b16 %v1037, %v1036
        %v1041 = vpack.c.b16 %v1039, %v1038
        %1044 = vmatpush.bf16.msra.mxu0 0
        %1045 = vmatpush.bf16.msra.mxu0 0
        %1046 = vmatpush.bf16.msra.mxu0 0
        %1047 = vmatpush.bf16.msra.mxu0 0
        %1048 = vmatpush.bf16.msra.mxu0 0
        %1049 = vmatpush.bf16.msra.mxu0 0
        %1050 = vmatpush.bf16.msra.mxu0 %v1041
        %1051 = vmatpush.bf16.msra.mxu0 %v1040
        %1052 = vmatmul.bf16.gmra.mxu0 %v817
        %v1053 = vpop.f32.mrf.mxu0
        %v1054 = vadd.f32 0.0, %v1053
        %v1055 = vpop.f32.mrf.mxu0
        %1056 = vdwg.mxu0
        %v1061 = vunpack.c.l.b16 %v796
        %v1062 = vunpack.c.l.b16 %v797
        %v1063 = vunpack.c.l.b16 %v798
        %v1064 = vunpack.c.l.b16 %v799
        %v1065 = vpack.c.b16 %v1062, %v1061
        %v1066 = vpack.c.b16 %v1064, %v1063
        %1069 = vmatpush.bf16.msra.mxu0 0
        %1070 = vmatpush.bf16.msra.mxu0 0
        %1071 = vmatpush.bf16.msra.mxu0 0
        %1072 = vmatpush.bf16.msra.mxu0 0
        %1073 = vmatpush.bf16.msra.mxu0 0
        %1074 = vmatpush.bf16.msra.mxu0 0
        %1075 = vmatpush.bf16.msra.mxu0 %v1066
        %1076 = vmatpush.bf16.msra.mxu0 %v1065
        %1077 = vmatmul.bf16.gmra.mxu0 %v817
        %v1078 = vpop.f32.mrf.mxu0
        %v1079 = vadd.f32 0.0, %v1078
        %v1080 = vpop.f32.mrf.mxu0
        %1081 = vdwg.mxu0
        %v1086 = vunpack.c.l.b16 %v800
        %v1087 = vunpack.c.l.b16 %v801
        %v1088 = vunpack.c.l.b16 %v802
        %v1089 = vunpack.c.l.b16 %v803
        %v1090 = vpack.c.b16 %v1087, %v1086
        %v1091 = vpack.c.b16 %v1089, %v1088
        %1094 = vmatpush.bf16.msra.mxu0 0
        %1095 = vmatpush.bf16.msra.mxu0 0
        %1096 = vmatpush.bf16.msra.mxu0 0
        %1097 = vmatpush.bf16.msra.mxu0 0
        %1098 = vmatpush.bf16.msra.mxu0 0
        %1099 = vmatpush.bf16.msra.mxu0 0
        %1100 = vmatpush.bf16.msra.mxu0 %v1091
        %1101 = vmatpush.bf16.msra.mxu0 %v1090
        %1102 = vmatmul.bf16.gmra.mxu0 %v817
        %v1103 = vpop.f32.mrf.mxu0
        %v1104 = vadd.f32 0.0, %v1103
        %v1105 = vpop.f32.mrf.mxu0
        %1106 = vdwg.mxu0
        %v1107 = vpack.c.bf16 %v829, %v829
        %v1108 = vpack.c.bf16 %v854, %v854
        %v1109 = vpack.c.bf16 %v879, %v879
        %v1110 = vpack.c.bf16 %v904, %v904
        %v1111 = vpack.c.bf16 %v929, %v929
        %v1112 = vpack.c.bf16 %v954, %v954
        %v1113 = vpack.c.bf16 %v979, %v979
        %v1114 = vpack.c.bf16 %v1004, %v1004
        %vm1115 = vcmask 64512
        %v1117 = vsel %vm1115, %v1107, 0
        %v1120 = vsel %vm1115, %v1111, 0
        %1122 = vmatpush.bf16.xpose.msra.mxu0 0
        %1123 = vmatpush.bf16.xpose.msra.mxu0 0
        %1124 = vmatpush.bf16.xpose.msra.mxu0 0
        %1125 = vmatpush.bf16.xpose.msra.mxu0 0
        %1126 = vmatpush.bf16.xpose.msra.mxu0 0
        %1127 = vmatpush.bf16.xpose.msra.mxu0 0
        %1128 = vmatpush.bf16.xpose.msra.mxu0 0
        %1129 = vmatpush.bf16.xpose.msra.mxu0 %v1120
        %1130 = vmatmul.bf16.gmra.mxu0 %v1117
        %v1131 = vpop.f32.mrf.mxu0
        %v1132 = vadd.f32 0.0, %v1131
        %v1133 = vpop.f32.mrf.mxu0
        %1134 = vdwg.mxu0
        %v1136 = vsel %vm1115, %v1108, 0
        %v1139 = vsel %vm1115, %v1112, 0
        %1141 = vmatpush.bf16.xpose.msra.mxu0 0
        %1142 = vmatpush.bf16.xpose.msra.mxu0 0
        %1143 = vmatpush.bf16.xpose.msra.mxu0 0
        %1144 = vmatpush.bf16.xpose.msra.mxu0 0
        %1145 = vmatpush.bf16.xpose.msra.mxu0 0
        %1146 = vmatpush.bf16.xpose.msra.mxu0 0
        %1147 = vmatpush.bf16.xpose.msra.mxu0 0
        %1148 = vmatpush.bf16.xpose.msra.mxu0 %v1139
        %1149 = vmatmul.bf16.gmra.mxu0 %v1136
        %v1150 = vpop.f32.mrf.mxu0
        %v1151 = vadd.f32 0.0, %v1150
        %v1152 = vpop.f32.mrf.mxu0
        %1153 = vdwg.mxu0
        %v1155 = vsel %vm1115, %v1109, 0
        %v1158 = vsel %vm1115, %v1113, 0
        %1160 = vmatpush.bf16.xpose.msra.mxu0 0
        %1161 = vmatpush.bf16.xpose.msra.mxu0 0
        %1162 = vmatpush.bf16.xpose.msra.mxu0 0
        %1163 = vmatpush.bf16.xpose.msra.mxu0 0
        %1164 = vmatpush.bf16.xpose.msra.mxu0 0
        %1165 = vmatpush.bf16.xpose.msra.mxu0 0
        %1166 = vmatpush.bf16.xpose.msra.mxu0 0
        %1167 = vmatpush.bf16.xpose.msra.mxu0 %v1158
        %1168 = vmatmul.bf16.gmra.mxu0 %v1155
        %v1169 = vpop.f32.mrf.mxu0
        %v1170 = vadd.f32 0.0, %v1169
        %v1171 = vpop.f32.mrf.mxu0
        %1172 = vdwg.mxu0
        %v1174 = vsel %vm1115, %v1110, 0
        %v1177 = vsel %vm1115, %v1114, 0
        %1179 = vmatpush.bf16.xpose.msra.mxu0 0
        %1180 = vmatpush.bf16.xpose.msra.mxu0 0
        %1181 = vmatpush.bf16.xpose.msra.mxu0 0
        %1182 = vmatpush.bf16.xpose.msra.mxu0 0
        %1183 = vmatpush.bf16.xpose.msra.mxu0 0
        %1184 = vmatpush.bf16.xpose.msra.mxu0 0
        %1185 = vmatpush.bf16.xpose.msra.mxu0 0
        %1186 = vmatpush.bf16.xpose.msra.mxu0 %v1177
        %1187 = vmatmul.bf16.gmra.mxu0 %v1174
        %v1188 = vpop.f32.mrf.mxu0
        %v1189 = vadd.f32 0.0, %v1188
        %v1190 = vpop.f32.mrf.mxu0
        %1191 = vdwg.mxu0
        %v1192 = vmul.f32 %v1132, 0.35355338
        %v1193 = vmul.f32 %v1151, 0.35355338
        %v1194 = vmul.f32 %v1170, 0.35355338
        %v1195 = vmul.f32 %v1189, 0.35355338
        %v1196 = vsel %vm714, 1, 0
        %vm1197 = vcmp.eq.s32.totalorder %v1196, 1
        %v1198 = vsel %vm1197, %v1192, -1e+30
        %v1199 = vsel %vm1197, %v1193, -1e+30
        %v1200 = vsel %vm1197, %v1194, -1e+30
        %v1201 = vsel %vm1197, %v1195, -1e+30
        %v1202 = vsel %vm1115, %v1198, -inf
        %1203 = vmax.xlane.f32.xlu0 %v1202
        %v1204 = vpop.xlane.xlu0 %1203
        %v1205 = vsel %vm1115, %v1199, -inf
        %1206 = vmax.xlane.f32.xlu0 %v1205
        %v1207 = vpop.xlane.xlu0 %1206
        %v1208 = vsel %vm1115, %v1200, -inf
        %1209 = vmax.xlane.f32.xlu0 %v1208
        %v1210 = vpop.xlane.xlu0 %1209
        %v1211 = vsel %vm1115, %v1201, -inf
        %1212 = vmax.xlane.f32.xlu0 %v1211
        %v1213 = vpop.xlane.xlu0 %1212
        %v1214 = vsub.f32 %v1198, %v1204
        %v1215 = vsub.f32 %v1199, %v1207
        %v1216 = vsub.f32 %v1200, %v1210
        %v1217 = vsub.f32 %v1201, %v1213
        %v1218 = vmul.f32 %v1214, 1.442695
        %v1219 = vpow.pop %v1218
        %v1220 = vmul.f32 %v1215, 1.442695
        %v1221 = vpow.pop %v1220
        %v1222 = vmul.f32 %v1216, 1.442695
        %v1223 = vpow.pop %v1222
        %v1224 = vmul.f32 %v1217, 1.442695
        %v1225 = vpow.pop %v1224
        %v1226 = vsel %vm1115, %v1219, 0.0
        %1227 = vadd.xlane.f32.xlu0 %v1226
        %v1228 = vpop.xlane.xlu0 %1227
        %v1229 = vsel %vm1115, %v1221, 0.0
        %1230 = vadd.xlane.f32.xlu0 %v1229
        %v1231 = vpop.xlane.xlu0 %1230
        %v1232 = vsel %vm1115, %v1223, 0.0
        %1233 = vadd.xlane.f32.xlu0 %v1232
        %v1234 = vpop.xlane.xlu0 %1233
        %v1235 = vsel %vm1115, %v1225, 0.0
        %1236 = vadd.xlane.f32.xlu0 %v1235
        %v1237 = vpop.xlane.xlu0 %1236
        %v1238 = vrcp.pop %v1228
        %v1239 = vrcp.pop %v1231
        %v1240 = vrcp.pop %v1234
        %v1241 = vrcp.pop %v1237
        %v1242 = vmul.f32 %v1219, %v1238
        %v1243 = vmul.f32 %v1221, %v1239
        %v1244 = vmul.f32 %v1223, %v1240
        %v1245 = vmul.f32 %v1225, %v1241
        %v1246 = vpack.c.bf16 %v1242, %v1242
        %v1247 = vpack.c.bf16 %v1243, %v1243
        %v1248 = vpack.c.bf16 %v1244, %v1244
        %v1249 = vpack.c.bf16 %v1245, %v1245
        %v1250 = vpack.c.bf16 %v1029, %v1029
        %v1251 = vpack.c.bf16 %v1054, %v1054
        %v1252 = vpack.c.bf16 %v1079, %v1079
        %v1253 = vpack.c.bf16 %v1104, %v1104
        %v1255 = vsel %vm1115, %v1246, 0
        %vm1257 = vcmask 1043456
        %v1259 = vsel %vm1257, %v1250, 0
        %1261 = vmatpush.bf16.msra.mxu0 0
        %1262 = vmatpush.bf16.msra.mxu0 0
        %1263 = vmatpush.bf16.msra.mxu0 0
        %1264 = vmatpush.bf16.msra.mxu0 0
        %1265 = vmatpush.bf16.msra.mxu0 0
        %1266 = vmatpush.bf16.msra.mxu0 0
        %1267 = vmatpush.bf16.msra.mxu0 0
        %1268 = vmatpush.bf16.msra.mxu0 %v1259
        %1269 = vmatmul.bf16.gmra.mxu0 %v1255
        %v1270 = vpop.f32.mrf.mxu0
        %v1271 = vadd.f32 0.0, %v1270
        %v1272 = vpop.f32.mrf.mxu0
        %1273 = vdwg.mxu0
        %v1275 = vsel %vm1115, %v1247, 0
        %v1278 = vsel %vm1257, %v1251, 0
        %1280 = vmatpush.bf16.msra.mxu0 0
        %1281 = vmatpush.bf16.msra.mxu0 0
        %1282 = vmatpush.bf16.msra.mxu0 0
        %1283 = vmatpush.bf16.msra.mxu0 0
        %1284 = vmatpush.bf16.msra.mxu0 0
        %1285 = vmatpush.bf16.msra.mxu0 0
        %1286 = vmatpush.bf16.msra.mxu0 0
        %1287 = vmatpush.bf16.msra.mxu0 %v1278
        %1288 = vmatmul.bf16.gmra.mxu0 %v1275
        %v1289 = vpop.f32.mrf.mxu0
        %v1290 = vadd.f32 0.0, %v1289
        %v1291 = vpop.f32.mrf.mxu0
        %1292 = vdwg.mxu0
        %v1294 = vsel %vm1115, %v1248, 0
        %v1297 = vsel %vm1257, %v1252, 0
        %1299 = vmatpush.bf16.msra.mxu0 0
        %1300 = vmatpush.bf16.msra.mxu0 0
        %1301 = vmatpush.bf16.msra.mxu0 0
        %1302 = vmatpush.bf16.msra.mxu0 0
        %1303 = vmatpush.bf16.msra.mxu0 0
        %1304 = vmatpush.bf16.msra.mxu0 0
        %1305 = vmatpush.bf16.msra.mxu0 0
        %1306 = vmatpush.bf16.msra.mxu0 %v1297
        %1307 = vmatmul.bf16.gmra.mxu0 %v1294
        %v1308 = vpop.f32.mrf.mxu0
        %v1309 = vadd.f32 0.0, %v1308
        %v1310 = vpop.f32.mrf.mxu0
        %1311 = vdwg.mxu0
        %v1313 = vsel %vm1115, %v1249, 0
        %v1316 = vsel %vm1257, %v1253, 0
        %1318 = vmatpush.bf16.msra.mxu0 0
        %1319 = vmatpush.bf16.msra.mxu0 0
        %1320 = vmatpush.bf16.msra.mxu0 0
        %1321 = vmatpush.bf16.msra.mxu0 0
        %1322 = vmatpush.bf16.msra.mxu0 0
        %1323 = vmatpush.bf16.msra.mxu0 0
        %1324 = vmatpush.bf16.msra.mxu0 0
        %1325 = vmatpush.bf16.msra.mxu0 %v1316
        %1326 = vmatmul.bf16.gmra.mxu0 %v1313
        %v1327 = vpop.f32.mrf.mxu0
        %v1328 = vadd.f32 0.0, %v1327
        %v1329 = vpop.f32.mrf.mxu0
        %1330 = vdwg.mxu0
        %v1331 = vpack.c.bf16 %v1271, %v1271
        %v1332 = vpack.c.bf16 %v1290, %v1290
        %v1333 = vpack.c.bf16 %v1309, %v1309
        %v1334 = vpack.c.bf16 %v1328, %v1328
        %v1335 = vld [vmem:[%s7] sm:$0xf]
        %v1336 = vld [vmem:[%s7 + $0x4] sm:$0xf]
        %v1337 = vld [vmem:[%s7 + $0x8] sm:$0xf]
        %v1338 = vld [vmem:[%s7 + $0xc] sm:$0xf]
        %v1340 = vsel %vm1115, %v1331, 0
        %v1343 = vsel %vm1257, %v1335, 0
        %1345 = vmatpush.bf16.msra.mxu0 0
        %1346 = vmatpush.bf16.msra.mxu0 0
        %1347 = vmatpush.bf16.msra.mxu0 0
        %1348 = vmatpush.bf16.msra.mxu0 0
        %1349 = vmatpush.bf16.msra.mxu0 0
        %1350 = vmatpush.bf16.msra.mxu0 0
        %1351 = vmatpush.bf16.msra.mxu0 0
        %1352 = vmatpush.bf16.msra.mxu0 %v1343
        %1353 = vmatmul.bf16.gmra.mxu0 %v1340
        %v1354 = vpop.f32.mrf.mxu0
        %v1355 = vadd.f32 0.0, %v1354
        %v1356 = vpop.f32.mrf.mxu0
        %1357 = vdwg.mxu0
        %v1359 = vsel %vm1115, %v1332, 0
        %v1362 = vsel %vm1257, %v1336, 0
        %1364 = vmatpush.bf16.msra.mxu0 0
        %1365 = vmatpush.bf16.msra.mxu0 0
        %1366 = vmatpush.bf16.msra.mxu0 0
        %1367 = vmatpush.bf16.msra.mxu0 0
        %1368 = vmatpush.bf16.msra.mxu0 0
        %1369 = vmatpush.bf16.msra.mxu0 0
        %1370 = vmatpush.bf16.msra.mxu0 0
        %1371 = vmatpush.bf16.msra.mxu0 %v1362
        %1372 = vmatmul.bf16.gmra.mxu0 %v1359
        %v1373 = vpop.f32.mrf.mxu0
        %v1374 = vadd.f32 0.0, %v1373
        %v1375 = vpop.f32.mrf.mxu0
        %1376 = vdwg.mxu0
        %v1378 = vsel %vm1115, %v1333, 0
        %v1381 = vsel %vm1257, %v1337, 0
        %1383 = vmatpush.bf16.msra.mxu0 0
        %1384 = vmatpush.bf16.msra.mxu0 0
        %1385 = vmatpush.bf16.msra.mxu0 0
        %1386 = vmatpush.bf16.msra.mxu0 0
        %1387 = vmatpush.bf16.msra.mxu0 0
        %1388 = vmatpush.bf16.msra.mxu0 0
        %1389 = vmatpush.bf16.msra.mxu0 0
        %1390 = vmatpush.bf16.msra.mxu0 %v1381
        %1391 = vmatmul.bf16.gmra.mxu0 %v1378
        %v1392 = vpop.f32.mrf.mxu0
        %v1393 = vadd.f32 0.0, %v1392
        %v1394 = vpop.f32.mrf.mxu0
        %1395 = vdwg.mxu0
        %v1397 = vsel %vm1115, %v1334, 0
        %v1400 = vsel %vm1257, %v1338, 0
        %1402 = vmatpush.bf16.msra.mxu0 0
        %1403 = vmatpush.bf16.msra.mxu0 0
        %1404 = vmatpush.bf16.msra.mxu0 0
        %1405 = vmatpush.bf16.msra.mxu0 0
        %1406 = vmatpush.bf16.msra.mxu0 0
        %1407 = vmatpush.bf16.msra.mxu0 0
        %1408 = vmatpush.bf16.msra.mxu0 0
        %1409 = vmatpush.bf16.msra.mxu0 %v1400
        %1410 = vmatmul.bf16.gmra.mxu0 %v1397
        %v1411 = vpop.f32.mrf.mxu0
        %v1412 = vadd.f32 0.0, %v1411
        %v1413 = vpop.f32.mrf.mxu0
        %1414 = vdwg.mxu0
        %v1415 = vsel %vm717, %v1355, 0.0
        %v1416 = vsel %vm717, %v1374, 0.0
        %v1417 = vadd.f32 %v1415, %v1416
        %v1418 = vsel %vm717, %v1393, 0.0
        %v1419 = vadd.f32 %v1417, %v1418
        %v1420 = vsel %vm717, %v1412, 0.0
        %v1421 = vadd.f32 %v1419, %v1420
        %v1422 = vld [vmem:[%s8] sm:$0x1]
        %v1424 = vperm.slane %v1422, 0
        %v1426 = vadd.f32 %v1421, %v1424
        %v1427 = vadd.f32 %v709, %v1426
        %v1428 = vld [vmem:[%s9] sm:$0x1]
        %v1429 = vld [vmem:[%s10] sm:$0x1]
        %v1430 = vsel %vm717, %v1427, 0.0
        %1431 = vadd.xlane.f32.xlu0 %v1430
        %v1432 = vpop.xlane.xlu0 %1431
        %v1433 = vmul.f32 %v1432, %v727
        %v1434 = vsub.f32 %v1427, %v1433
        %v1435 = vmul.f32 %v1434, %v1434
        %v1436 = vsel %vm717, %v1435, 0.0
        %1437 = vadd.xlane.f32.xlu0 %v1436
        %v1438 = vpop.xlane.xlu0 %1437
        %v1439 = vmul.f32 %v1438, %v727
        %v1440 = vadd.f32 %v1439, 1e-05
        %v1441 = vrsqrt.pop %v1440
        %v1442 = vmul.f32 %v1441, %v1440
        %v1443 = vmul.f32 %v1442, %v1441
        %v1444 = vmul.f32 0.5, %v1443
        %v1445 = vsub.f32 1.5, %v1444
        %v1446 = vmul.f32 %v1441, %v1445
        %vm1447 = vweird.f32 %v1440
        %vm1448 = vweird.f32 %v1441
        %vm1449 = vmor %vm1447, %vm1448
        %v1450 = vsel %vm1449, %v1441, %v1446
        %v1451 = vmul.f32 %v1434, %v1450
        %v1453 = vperm.slane %v1428, 0
        %v1455 = vmul.f32 %v1451, %v1453
        %v1457 = vperm.slane %v1429, 0
        %v1459 = vadd.f32 %v1455, %v1457
        %v1460 = vpack.c.bf16 %v1459, %v1459
        %v1461 = vld [vmem:[%s11] sm:$0xf]
        %v1462 = vld [vmem:[%s11 + $0x4] sm:$0xf]
        %v1463 = vld [vmem:[%s11 + $0x8] sm:$0xf]
        %v1464 = vld [vmem:[%s11 + $0xc] sm:$0xf]
        %v1465 = vld [vmem:[%s12] sm:$0x1]
        %v1467 = vperm.slane %v1465, 0
        %v1473 = vunpack.c.l.b16 %v1461
        %v1474 = vunpack.c.l.b16 %v1462
        %v1475 = vunpack.c.l.b16 %v1463
        %v1476 = vunpack.c.l.b16 %v1464
        %v1477 = vpack.c.b16 %v1474, %v1473
        %v1478 = vpack.c.b16 %v1476, %v1475
        %v1482 = vsel %vm717, %v1460, 0
        %1484 = vmatpush.bf16.msra.mxu0 0
        %1485 = vmatpush.bf16.msra.mxu0 0
        %1486 = vmatpush.bf16.msra.mxu0 0
        %1487 = vmatpush.bf16.msra.mxu0 0
        %1488 = vmatpush.bf16.msra.mxu0 0
        %1489 = vmatpush.bf16.msra.mxu0 0
        %1490 = vmatpush.bf16.msra.mxu0 %v1478
        %1491 = vmatpush.bf16.msra.mxu0 %v1477
        %1492 = vmatmul.bf16.gmra.mxu0 %v1482
        %v1493 = vpop.f32.mrf.mxu0
        %v1494 = vadd.f32 %v1467, %v1493
        %v1495 = vpop.f32.mrf.mxu0
        %1496 = vdwg.mxu0
        %v1497 = vmax.f32 %v1494, 0.0
        %v1498 = vpack.c.bf16 %v1497, %v1497
        %v1499 = vld [vmem:[%s13] sm:$0xf]
        %v1500 = vld [vmem:[%s13 + $0x4] sm:$0xf]
        %v1501 = vld [vmem:[%s13 + $0x8] sm:$0xf]
        %v1502 = vld [vmem:[%s13 + $0xc] sm:$0xf]
        %v1503 = vld [vmem:[%s13 + $0x10] sm:$0xf]
        %v1504 = vld [vmem:[%s13 + $0x14] sm:$0xf]
        %v1505 = vld [vmem:[%s13 + $0x18] sm:$0xf]
        %v1506 = vld [vmem:[%s13 + $0x1c] sm:$0xf]
        %v1507 = vld [vmem:[%s13 + $0x20] sm:$0xf]
        %v1508 = vld [vmem:[%s13 + $0x24] sm:$0xf]
        %v1509 = vld [vmem:[%s13 + $0x28] sm:$0xf]
        %v1510 = vld [vmem:[%s13 + $0x2c] sm:$0xf]
        %v1511 = vld [vmem:[%s13 + $0x30] sm:$0xf]
        %v1512 = vld [vmem:[%s13 + $0x34] sm:$0xf]
        %v1513 = vld [vmem:[%s13 + $0x38] sm:$0xf]
        %v1514 = vld [vmem:[%s13 + $0x3c] sm:$0xf]
        %v1515 = vld [vmem:[%s14] sm:$0x1]
        %v1517 = vperm.slane %v1515, 0
        %v1535 = vunpack.c.l.b16 %v1499
        %v1536 = vunpack.c.l.b16 %v1500
        %v1537 = vunpack.c.l.b16 %v1501
        %v1538 = vunpack.c.l.b16 %v1502
        %v1539 = vunpack.c.l.b16 %v1503
        %v1540 = vunpack.c.l.b16 %v1504
        %v1541 = vunpack.c.l.b16 %v1505
        %v1542 = vunpack.c.l.b16 %v1506
        %v1543 = vunpack.c.l.b16 %v1507
        %v1544 = vunpack.c.l.b16 %v1508
        %v1545 = vunpack.c.l.b16 %v1509
        %v1546 = vunpack.c.l.b16 %v1510
        %v1547 = vunpack.c.l.b16 %v1511
        %v1548 = vunpack.c.l.b16 %v1512
        %v1549 = vunpack.c.l.b16 %v1513
        %v1550 = vunpack.c.l.b16 %v1514
        %v1551 = vpack.c.b16 %v1536, %v1535
        %v1552 = vpack.c.b16 %v1538, %v1537
        %v1553 = vpack.c.b16 %v1540, %v1539
        %v1554 = vpack.c.b16 %v1542, %v1541
        %v1555 = vpack.c.b16 %v1544, %v1543
        %v1556 = vpack.c.b16 %v1546, %v1545
        %v1557 = vpack.c.b16 %v1548, %v1547
        %v1558 = vpack.c.b16 %v1550, %v1549
        %1567 = vmatpush.bf16.msra.mxu0 %v1558
        %1568 = vmatpush.bf16.msra.mxu0 %v1557
        %1569 = vmatpush.bf16.msra.mxu0 %v1556
        %1570 = vmatpush.bf16.msra.mxu0 %v1555
        %1571 = vmatpush.bf16.msra.mxu0 %v1554
        %1572 = vmatpush.bf16.msra.mxu0 %v1553
        %1573 = vmatpush.bf16.msra.mxu0 %v1552
        %1574 = vmatpush.bf16.msra.mxu0 %v1551
        %1575 = vmatmul.bf16.gmra.mxu0 %v1498
        %v1576 = vpop.f32.mrf.mxu0
        %v1577 = vadd.f32 %v1517, %v1576
        %v1578 = vpop.f32.mrf.mxu0
        %1579 = vdwg.mxu0
        %v1580 = vadd.f32 %v1427, %v1577
        %s1581 = scalar_lea.vmem %s4, 1
        %v1582 = vld [vmem:[%s1581] sm:$0x1]
        %s1583 = scalar_lea.vmem %s5, 1
        %v1584 = vld [vmem:[%s1583] sm:$0x1]
        %v1585 = vsel %vm717, %v1580, 0.0
        %1586 = vadd.xlane.f32.xlu0 %v1585
        %v1587 = vpop.xlane.xlu0 %1586
        %v1588 = vmul.f32 %v1587, %v727
        %v1589 = vsub.f32 %v1580, %v1588
        %v1590 = vmul.f32 %v1589, %v1589
        %v1591 = vsel %vm717, %v1590, 0.0
        %1592 = vadd.xlane.f32.xlu0 %v1591
        %v1593 = vpop.xlane.xlu0 %1592
        %v1594 = vmul.f32 %v1593, %v727
        %v1595 = vadd.f32 %v1594, 1e-05
        %v1596 = vrsqrt.pop %v1595
        %v1597 = vmul.f32 %v1596, %v1595
        %v1598 = vmul.f32 %v1597, %v1596
        %v1599 = vmul.f32 0.5, %v1598
        %v1600 = vsub.f32 1.5, %v1599
        %v1601 = vmul.f32 %v1596, %v1600
        %vm1602 = vweird.f32 %v1595
        %vm1603 = vweird.f32 %v1596
        %vm1604 = vmor %vm1602, %vm1603
        %v1605 = vsel %vm1604, %v1596, %v1601
        %v1606 = vmul.f32 %v1589, %v1605
        %v1608 = vperm.slane %v1582, 0
        %v1610 = vmul.f32 %v1606, %v1608
        %v1612 = vperm.slane %v1584, 0
        %v1614 = vadd.f32 %v1610, %v1612
        %v1615 = vpack.c.bf16 %v1614, %v1614
        %s1616 = scalar_lea.vmem %s6, 192
        %v1617 = vld [vmem:[%s1616] sm:$0xf]
        %v1618 = vld [vmem:[%s1616 + $0x4] sm:$0xf]
        %v1619 = vld [vmem:[%s1616 + $0x8] sm:$0xf]
        %v1620 = vld [vmem:[%s1616 + $0xc] sm:$0xf]
        %v1621 = vld [vmem:[%s1616 + $0x10] sm:$0xf]
        %v1622 = vld [vmem:[%s1616 + $0x14] sm:$0xf]
        %v1623 = vld [vmem:[%s1616 + $0x18] sm:$0xf]
        %v1624 = vld [vmem:[%s1616 + $0x1c] sm:$0xf]
        %v1625 = vld [vmem:[%s1616 + $0x20] sm:$0xf]
        %v1626 = vld [vmem:[%s1616 + $0x24] sm:$0xf]
        %v1627 = vld [vmem:[%s1616 + $0x28] sm:$0xf]
        %v1628 = vld [vmem:[%s1616 + $0x2c] sm:$0xf]
        %v1629 = vld [vmem:[%s1616 + $0x30] sm:$0xf]
        %v1630 = vld [vmem:[%s1616 + $0x34] sm:$0xf]
        %v1631 = vld [vmem:[%s1616 + $0x38] sm:$0xf]
        %v1632 = vld [vmem:[%s1616 + $0x3c] sm:$0xf]
        %v1633 = vld [vmem:[%s1616 + $0x40] sm:$0xf]
        %v1634 = vld [vmem:[%s1616 + $0x44] sm:$0xf]
        %v1635 = vld [vmem:[%s1616 + $0x48] sm:$0xf]
        %v1636 = vld [vmem:[%s1616 + $0x4c] sm:$0xf]
        %v1637 = vld [vmem:[%s1616 + $0x50] sm:$0xf]
        %v1638 = vld [vmem:[%s1616 + $0x54] sm:$0xf]
        %v1639 = vld [vmem:[%s1616 + $0x58] sm:$0xf]
        %v1640 = vld [vmem:[%s1616 + $0x5c] sm:$0xf]
        %v1641 = vld [vmem:[%s1616 + $0x60] sm:$0xf]
        %v1642 = vld [vmem:[%s1616 + $0x64] sm:$0xf]
        %v1643 = vld [vmem:[%s1616 + $0x68] sm:$0xf]
        %v1644 = vld [vmem:[%s1616 + $0x6c] sm:$0xf]
        %v1645 = vld [vmem:[%s1616 + $0x70] sm:$0xf]
        %v1646 = vld [vmem:[%s1616 + $0x74] sm:$0xf]
        %v1647 = vld [vmem:[%s1616 + $0x78] sm:$0xf]
        %v1648 = vld [vmem:[%s1616 + $0x7c] sm:$0xf]
        %v1649 = vld [vmem:[%s1616 + $0x80] sm:$0xf]
        %v1650 = vld [vmem:[%s1616 + $0x84] sm:$0xf]
        %v1651 = vld [vmem:[%s1616 + $0x88] sm:$0xf]
        %v1652 = vld [vmem:[%s1616 + $0x8c] sm:$0xf]
        %v1653 = vld [vmem:[%s1616 + $0x90] sm:$0xf]
        %v1654 = vld [vmem:[%s1616 + $0x94] sm:$0xf]
        %v1655 = vld [vmem:[%s1616 + $0x98] sm:$0xf]
        %v1656 = vld [vmem:[%s1616 + $0x9c] sm:$0xf]
        %v1657 = vld [vmem:[%s1616 + $0xa0] sm:$0xf]
        %v1658 = vld [vmem:[%s1616 + $0xa4] sm:$0xf]
        %v1659 = vld [vmem:[%s1616 + $0xa8] sm:$0xf]
        %v1660 = vld [vmem:[%s1616 + $0xac] sm:$0xf]
        %v1661 = vld [vmem:[%s1616 + $0xb0] sm:$0xf]
        %v1662 = vld [vmem:[%s1616 + $0xb4] sm:$0xf]
        %v1663 = vld [vmem:[%s1616 + $0xb8] sm:$0xf]
        %v1664 = vld [vmem:[%s1616 + $0xbc] sm:$0xf]
        %v1669 = vunpack.c.l.b16 %v1617
        %v1670 = vunpack.c.l.b16 %v1618
        %v1671 = vunpack.c.l.b16 %v1619
        %v1672 = vunpack.c.l.b16 %v1620
        %v1673 = vpack.c.b16 %v1670, %v1669
        %v1674 = vpack.c.b16 %v1672, %v1671
        %v1678 = vsel %vm717, %v1615, 0
        %1680 = vmatpush.bf16.msra.mxu0 0
        %1681 = vmatpush.bf16.msra.mxu0 0
        %1682 = vmatpush.bf16.msra.mxu0 0
        %1683 = vmatpush.bf16.msra.mxu0 0
        %1684 = vmatpush.bf16.msra.mxu0 0
        %1685 = vmatpush.bf16.msra.mxu0 0
        %1686 = vmatpush.bf16.msra.mxu0 %v1674
        %1687 = vmatpush.bf16.msra.mxu0 %v1673
        %1688 = vmatmul.bf16.gmra.mxu0 %v1678
        %v1689 = vpop.f32.mrf.mxu0
        %v1690 = vadd.f32 0.0, %v1689
        %v1691 = vpop.f32.mrf.mxu0
        %1692 = vdwg.mxu0
        %v1697 = vunpack.c.l.b16 %v1621
        %v1698 = vunpack.c.l.b16 %v1622
        %v1699 = vunpack.c.l.b16 %v1623
        %v1700 = vunpack.c.l.b16 %v1624
        %v1701 = vpack.c.b16 %v1698, %v1697
        %v1702 = vpack.c.b16 %v1700, %v1699
        %1705 = vmatpush.bf16.msra.mxu0 0
        %1706 = vmatpush.bf16.msra.mxu0 0
        %1707 = vmatpush.bf16.msra.mxu0 0
        %1708 = vmatpush.bf16.msra.mxu0 0
        %1709 = vmatpush.bf16.msra.mxu0 0
        %1710 = vmatpush.bf16.msra.mxu0 0
        %1711 = vmatpush.bf16.msra.mxu0 %v1702
        %1712 = vmatpush.bf16.msra.mxu0 %v1701
        %1713 = vmatmul.bf16.gmra.mxu0 %v1678
        %v1714 = vpop.f32.mrf.mxu0
        %v1715 = vadd.f32 0.0, %v1714
        %v1716 = vpop.f32.mrf.mxu0
        %1717 = vdwg.mxu0
        %v1722 = vunpack.c.l.b16 %v1625
        %v1723 = vunpack.c.l.b16 %v1626
        %v1724 = vunpack.c.l.b16 %v1627
        %v1725 = vunpack.c.l.b16 %v1628
        %v1726 = vpack.c.b16 %v1723, %v1722
        %v1727 = vpack.c.b16 %v1725, %v1724
        %1730 = vmatpush.bf16.msra.mxu0 0
        %1731 = vmatpush.bf16.msra.mxu0 0
        %1732 = vmatpush.bf16.msra.mxu0 0
        %1733 = vmatpush.bf16.msra.mxu0 0
        %1734 = vmatpush.bf16.msra.mxu0 0
        %1735 = vmatpush.bf16.msra.mxu0 0
        %1736 = vmatpush.bf16.msra.mxu0 %v1727
        %1737 = vmatpush.bf16.msra.mxu0 %v1726
        %1738 = vmatmul.bf16.gmra.mxu0 %v1678
        %v1739 = vpop.f32.mrf.mxu0
        %v1740 = vadd.f32 0.0, %v1739
        %v1741 = vpop.f32.mrf.mxu0
        %1742 = vdwg.mxu0
        %v1747 = vunpack.c.l.b16 %v1629
        %v1748 = vunpack.c.l.b16 %v1630
        %v1749 = vunpack.c.l.b16 %v1631
        %v1750 = vunpack.c.l.b16 %v1632
        %v1751 = vpack.c.b16 %v1748, %v1747
        %v1752 = vpack.c.b16 %v1750, %v1749
        %1755 = vmatpush.bf16.msra.mxu0 0
        %1756 = vmatpush.bf16.msra.mxu0 0
        %1757 = vmatpush.bf16.msra.mxu0 0
        %1758 = vmatpush.bf16.msra.mxu0 0
        %1759 = vmatpush.bf16.msra.mxu0 0
        %1760 = vmatpush.bf16.msra.mxu0 0
        %1761 = vmatpush.bf16.msra.mxu0 %v1752
        %1762 = vmatpush.bf16.msra.mxu0 %v1751
        %1763 = vmatmul.bf16.gmra.mxu0 %v1678
        %v1764 = vpop.f32.mrf.mxu0
        %v1765 = vadd.f32 0.0, %v1764
        %v1766 = vpop.f32.mrf.mxu0
        %1767 = vdwg.mxu0
        %v1772 = vunpack.c.l.b16 %v1633
        %v1773 = vunpack.c.l.b16 %v1634
        %v1774 = vunpack.c.l.b16 %v1635
        %v1775 = vunpack.c.l.b16 %v1636
        %v1776 = vpack.c.b16 %v1773, %v1772
        %v1777 = vpack.c.b16 %v1775, %v1774
        %1780 = vmatpush.bf16.msra.mxu0 0
        %1781 = vmatpush.bf16.msra.mxu0 0
        %1782 = vmatpush.bf16.msra.mxu0 0
        %1783 = vmatpush.bf16.msra.mxu0 0
        %1784 = vmatpush.bf16.msra.mxu0 0
        %1785 = vmatpush.bf16.msra.mxu0 0
        %1786 = vmatpush.bf16.msra.mxu0 %v1777
        %1787 = vmatpush.bf16.msra.mxu0 %v1776
        %1788 = vmatmul.bf16.gmra.mxu0 %v1678
        %v1789 = vpop.f32.mrf.mxu0
        %v1790 = vadd.f32 0.0, %v1789
        %v1791 = vpop.f32.mrf.mxu0
        %1792 = vdwg.mxu0
        %v1797 = vunpack.c.l.b16 %v1637
        %v1798 = vunpack.c.l.b16 %v1638
        %v1799 = vunpack.c.l.b16 %v1639
        %v1800 = vunpack.c.l.b16 %v1640
        %v1801 = vpack.c.b16 %v1798, %v1797
        %v1802 = vpack.c.b16 %v1800, %v1799
        %1805 = vmatpush.bf16.msra.mxu0 0
        %1806 = vmatpush.bf16.msra.mxu0 0
        %1807 = vmatpush.bf16.msra.mxu0 0
        %1808 = vmatpush.bf16.msra.mxu0 0
        %1809 = vmatpush.bf16.msra.mxu0 0
        %1810 = vmatpush.bf16.msra.mxu0 0
        %1811 = vmatpush.bf16.msra.mxu0 %v1802
        %1812 = vmatpush.bf16.msra.mxu0 %v1801
        %1813 = vmatmul.bf16.gmra.mxu0 %v1678
        %v1814 = vpop.f32.mrf.mxu0
        %v1815 = vadd.f32 0.0, %v1814
        %v1816 = vpop.f32.mrf.mxu0
        %1817 = vdwg.mxu0
        %v1822 = vunpack.c.l.b16 %v1641
        %v1823 = vunpack.c.l.b16 %v1642
        %v1824 = vunpack.c.l.b16 %v1643
        %v1825 = vunpack.c.l.b16 %v1644
        %v1826 = vpack.c.b16 %v1823, %v1822
        %v1827 = vpack.c.b16 %v1825, %v1824
        %1830 = vmatpush.bf16.msra.mxu0 0
        %1831 = vmatpush.bf16.msra.mxu0 0
        %1832 = vmatpush.bf16.msra.mxu0 0
        %1833 = vmatpush.bf16.msra.mxu0 0
        %1834 = vmatpush.bf16.msra.mxu0 0
        %1835 = vmatpush.bf16.msra.mxu0 0
        %1836 = vmatpush.bf16.msra.mxu0 %v1827
        %1837 = vmatpush.bf16.msra.mxu0 %v1826
        %1838 = vmatmul.bf16.gmra.mxu0 %v1678
        %v1839 = vpop.f32.mrf.mxu0
        %v1840 = vadd.f32 0.0, %v1839
        %v1841 = vpop.f32.mrf.mxu0
        %1842 = vdwg.mxu0
        %v1847 = vunpack.c.l.b16 %v1645
        %v1848 = vunpack.c.l.b16 %v1646
        %v1849 = vunpack.c.l.b16 %v1647
        %v1850 = vunpack.c.l.b16 %v1648
        %v1851 = vpack.c.b16 %v1848, %v1847
        %v1852 = vpack.c.b16 %v1850, %v1849
        %1855 = vmatpush.bf16.msra.mxu0 0
        %1856 = vmatpush.bf16.msra.mxu0 0
        %1857 = vmatpush.bf16.msra.mxu0 0
        %1858 = vmatpush.bf16.msra.mxu0 0
        %1859 = vmatpush.bf16.msra.mxu0 0
        %1860 = vmatpush.bf16.msra.mxu0 0
        %1861 = vmatpush.bf16.msra.mxu0 %v1852
        %1862 = vmatpush.bf16.msra.mxu0 %v1851
        %1863 = vmatmul.bf16.gmra.mxu0 %v1678
        %v1864 = vpop.f32.mrf.mxu0
        %v1865 = vadd.f32 0.0, %v1864
        %v1866 = vpop.f32.mrf.mxu0
        %1867 = vdwg.mxu0
        %v1872 = vunpack.c.l.b16 %v1649
        %v1873 = vunpack.c.l.b16 %v1650
        %v1874 = vunpack.c.l.b16 %v1651
        %v1875 = vunpack.c.l.b16 %v1652
        %v1876 = vpack.c.b16 %v1873, %v1872
        %v1877 = vpack.c.b16 %v1875, %v1874
        %1880 = vmatpush.bf16.msra.mxu0 0
        %1881 = vmatpush.bf16.msra.mxu0 0
        %1882 = vmatpush.bf16.msra.mxu0 0
        %1883 = vmatpush.bf16.msra.mxu0 0
        %1884 = vmatpush.bf16.msra.mxu0 0
        %1885 = vmatpush.bf16.msra.mxu0 0
        %1886 = vmatpush.bf16.msra.mxu0 %v1877
        %1887 = vmatpush.bf16.msra.mxu0 %v1876
        %1888 = vmatmul.bf16.gmra.mxu0 %v1678
        %v1889 = vpop.f32.mrf.mxu0
        %v1890 = vadd.f32 0.0, %v1889
        %v1891 = vpop.f32.mrf.mxu0
        %1892 = vdwg.mxu0
        %v1897 = vunpack.c.l.b16 %v1653
        %v1898 = vunpack.c.l.b16 %v1654
        %v1899 = vunpack.c.l.b16 %v1655
        %v1900 = vunpack.c.l.b16 %v1656
        %v1901 = vpack.c.b16 %v1898, %v1897
        %v1902 = vpack.c.b16 %v1900, %v1899
        %1905 = vmatpush.bf16.msra.mxu0 0
        %1906 = vmatpush.bf16.msra.mxu0 0
        %1907 = vmatpush.bf16.msra.mxu0 0
        %1908 = vmatpush.bf16.msra.mxu0 0
        %1909 = vmatpush.bf16.msra.mxu0 0
        %1910 = vmatpush.bf16.msra.mxu0 0
        %1911 = vmatpush.bf16.msra.mxu0 %v1902
        %1912 = vmatpush.bf16.msra.mxu0 %v1901
        %1913 = vmatmul.bf16.gmra.mxu0 %v1678
        %v1914 = vpop.f32.mrf.mxu0
        %v1915 = vadd.f32 0.0, %v1914
        %v1916 = vpop.f32.mrf.mxu0
        %1917 = vdwg.mxu0
        %v1922 = vunpack.c.l.b16 %v1657
        %v1923 = vunpack.c.l.b16 %v1658
        %v1924 = vunpack.c.l.b16 %v1659
        %v1925 = vunpack.c.l.b16 %v1660
        %v1926 = vpack.c.b16 %v1923, %v1922
        %v1927 = vpack.c.b16 %v1925, %v1924
        %1930 = vmatpush.bf16.msra.mxu0 0
        %1931 = vmatpush.bf16.msra.mxu0 0
        %1932 = vmatpush.bf16.msra.mxu0 0
        %1933 = vmatpush.bf16.msra.mxu0 0
        %1934 = vmatpush.bf16.msra.mxu0 0
        %1935 = vmatpush.bf16.msra.mxu0 0
        %1936 = vmatpush.bf16.msra.mxu0 %v1927
        %1937 = vmatpush.bf16.msra.mxu0 %v1926
        %1938 = vmatmul.bf16.gmra.mxu0 %v1678
        %v1939 = vpop.f32.mrf.mxu0
        %v1940 = vadd.f32 0.0, %v1939
        %v1941 = vpop.f32.mrf.mxu0
        %1942 = vdwg.mxu0
        %v1947 = vunpack.c.l.b16 %v1661
        %v1948 = vunpack.c.l.b16 %v1662
        %v1949 = vunpack.c.l.b16 %v1663
        %v1950 = vunpack.c.l.b16 %v1664
        %v1951 = vpack.c.b16 %v1948, %v1947
        %v1952 = vpack.c.b16 %v1950, %v1949
        %1955 = vmatpush.bf16.msra.mxu0 0
        %1956 = vmatpush.bf16.msra.mxu0 0
        %1957 = vmatpush.bf16.msra.mxu0 0
        %1958 = vmatpush.bf16.msra.mxu0 0
        %1959 = vmatpush.bf16.msra.mxu0 0
        %1960 = vmatpush.bf16.msra.mxu0 0
        %1961 = vmatpush.bf16.msra.mxu0 %v1952
        %1962 = vmatpush.bf16.msra.mxu0 %v1951
        %1963 = vmatmul.bf16.gmra.mxu0 %v1678
        %v1964 = vpop.f32.mrf.mxu0
        %v1965 = vadd.f32 0.0, %v1964
        %v1966 = vpop.f32.mrf.mxu0
        %1967 = vdwg.mxu0
        %v1968 = vpack.c.bf16 %v1690, %v1690
        %v1969 = vpack.c.bf16 %v1715, %v1715
        %v1970 = vpack.c.bf16 %v1740, %v1740
        %v1971 = vpack.c.bf16 %v1765, %v1765
        %v1972 = vpack.c.bf16 %v1790, %v1790
        %v1973 = vpack.c.bf16 %v1815, %v1815
        %v1974 = vpack.c.bf16 %v1840, %v1840
        %v1975 = vpack.c.bf16 %v1865, %v1865
        %v1977 = vsel %vm1115, %v1968, 0
        %v1980 = vsel %vm1115, %v1972, 0
        %1982 = vmatpush.bf16.xpose.msra.mxu0 0
        %1983 = vmatpush.bf16.xpose.msra.mxu0 0
        %1984 = vmatpush.bf16.xpose.msra.mxu0 0
        %1985 = vmatpush.bf16.xpose.msra.mxu0 0
        %1986 = vmatpush.bf16.xpose.msra.mxu0 0
        %1987 = vmatpush.bf16.xpose.msra.mxu0 0
        %1988 = vmatpush.bf16.xpose.msra.mxu0 0
        %1989 = vmatpush.bf16.xpose.msra.mxu0 %v1980
        %1990 = vmatmul.bf16.gmra.mxu0 %v1977
        %v1991 = vpop.f32.mrf.mxu0
        %v1992 = vadd.f32 0.0, %v1991
        %v1993 = vpop.f32.mrf.mxu0
        %1994 = vdwg.mxu0
        %v1996 = vsel %vm1115, %v1969, 0
        %v1999 = vsel %vm1115, %v1973, 0
        %2001 = vmatpush.bf16.xpose.msra.mxu0 0
        %2002 = vmatpush.bf16.xpose.msra.mxu0 0
        %2003 = vmatpush.bf16.xpose.msra.mxu0 0
        %2004 = vmatpush.bf16.xpose.msra.mxu0 0
        %2005 = vmatpush.bf16.xpose.msra.mxu0 0
        %2006 = vmatpush.bf16.xpose.msra.mxu0 0
        %2007 = vmatpush.bf16.xpose.msra.mxu0 0
        %2008 = vmatpush.bf16.xpose.msra.mxu0 %v1999
        %2009 = vmatmul.bf16.gmra.mxu0 %v1996
        %v2010 = vpop.f32.mrf.mxu0
        %v2011 = vadd.f32 0.0, %v2010
        %v2012 = vpop.f32.mrf.mxu0
        %2013 = vdwg.mxu0
        %v2015 = vsel %vm1115, %v1970, 0
        %v2018 = vsel %vm1115, %v1974, 0
        %2020 = vmatpush.bf16.xpose.msra.mxu0 0
        %2021 = vmatpush.bf16.xpose.msra.mxu0 0
        %2022 = vmatpush.bf16.xpose.msra.mxu0 0
        %2023 = vmatpush.bf16.xpose.msra.mxu0 0
        %2024 = vmatpush.bf16.xpose.msra.mxu0 0
        %2025 = vmatpush.bf16.xpose.msra.mxu0 0
        %2026 = vmatpush.bf16.xpose.msra.mxu0 0
        %2027 = vmatpush.bf16.xpose.msra.mxu0 %v2018
        %2028 = vmatmul.bf16.gmra.mxu0 %v2015
        %v2029 = vpop.f32.mrf.mxu0
        %v2030 = vadd.f32 0.0, %v2029
        %v2031 = vpop.f32.mrf.mxu0
        %2032 = vdwg.mxu0
        %v2034 = vsel %vm1115, %v1971, 0
        %v2037 = vsel %vm1115, %v1975, 0
        %2039 = vmatpush.bf16.xpose.msra.mxu0 0
        %2040 = vmatpush.bf16.xpose.msra.mxu0 0
        %2041 = vmatpush.bf16.xpose.msra.mxu0 0
        %2042 = vmatpush.bf16.xpose.msra.mxu0 0
        %2043 = vmatpush.bf16.xpose.msra.mxu0 0
        %2044 = vmatpush.bf16.xpose.msra.mxu0 0
        %2045 = vmatpush.bf16.xpose.msra.mxu0 0
        %2046 = vmatpush.bf16.xpose.msra.mxu0 %v2037
        %2047 = vmatmul.bf16.gmra.mxu0 %v2034
        %v2048 = vpop.f32.mrf.mxu0
        %v2049 = vadd.f32 0.0, %v2048
        %v2050 = vpop.f32.mrf.mxu0
        %2051 = vdwg.mxu0
        %v2052 = vmul.f32 %v1992, 0.35355338
        %v2053 = vmul.f32 %v2011, 0.35355338
        %v2054 = vmul.f32 %v2030, 0.35355338
        %v2055 = vmul.f32 %v2049, 0.35355338
        %v2056 = vsel %vm1197, %v2052, -1e+30
        %v2057 = vsel %vm1197, %v2053, -1e+30
        %v2058 = vsel %vm1197, %v2054, -1e+30
        %v2059 = vsel %vm1197, %v2055, -1e+30
        %v2060 = vsel %vm1115, %v2056, -inf
        %2061 = vmax.xlane.f32.xlu0 %v2060
        %v2062 = vpop.xlane.xlu0 %2061
        %v2063 = vsel %vm1115, %v2057, -inf
        %2064 = vmax.xlane.f32.xlu0 %v2063
        %v2065 = vpop.xlane.xlu0 %2064
        %v2066 = vsel %vm1115, %v2058, -inf
        %2067 = vmax.xlane.f32.xlu0 %v2066
        %v2068 = vpop.xlane.xlu0 %2067
        %v2069 = vsel %vm1115, %v2059, -inf
        %2070 = vmax.xlane.f32.xlu0 %v2069
        %v2071 = vpop.xlane.xlu0 %2070
        %v2072 = vsub.f32 %v2056, %v2062
        %v2073 = vsub.f32 %v2057, %v2065
        %v2074 = vsub.f32 %v2058, %v2068
        %v2075 = vsub.f32 %v2059, %v2071
        %v2076 = vmul.f32 %v2072, 1.442695
        %v2077 = vpow.pop %v2076
        %v2078 = vmul.f32 %v2073, 1.442695
        %v2079 = vpow.pop %v2078
        %v2080 = vmul.f32 %v2074, 1.442695
        %v2081 = vpow.pop %v2080
        %v2082 = vmul.f32 %v2075, 1.442695
        %v2083 = vpow.pop %v2082
        %v2084 = vsel %vm1115, %v2077, 0.0
        %2085 = vadd.xlane.f32.xlu0 %v2084
        %v2086 = vpop.xlane.xlu0 %2085
        %v2087 = vsel %vm1115, %v2079, 0.0
        %2088 = vadd.xlane.f32.xlu0 %v2087
        %v2089 = vpop.xlane.xlu0 %2088
        %v2090 = vsel %vm1115, %v2081, 0.0
        %2091 = vadd.xlane.f32.xlu0 %v2090
        %v2092 = vpop.xlane.xlu0 %2091
        %v2093 = vsel %vm1115, %v2083, 0.0
        %2094 = vadd.xlane.f32.xlu0 %v2093
        %v2095 = vpop.xlane.xlu0 %2094
        %v2096 = vrcp.pop %v2086
        %v2097 = vrcp.pop %v2089
        %v2098 = vrcp.pop %v2092
        %v2099 = vrcp.pop %v2095
        %v2100 = vmul.f32 %v2077, %v2096
        %v2101 = vmul.f32 %v2079, %v2097
        %v2102 = vmul.f32 %v2081, %v2098
        %v2103 = vmul.f32 %v2083, %v2099
        %v2104 = vpack.c.bf16 %v2100, %v2100
        %v2105 = vpack.c.bf16 %v2101, %v2101
        %v2106 = vpack.c.bf16 %v2102, %v2102
        %v2107 = vpack.c.bf16 %v2103, %v2103
        %v2108 = vpack.c.bf16 %v1890, %v1890
        %v2109 = vpack.c.bf16 %v1915, %v1915
        %v2110 = vpack.c.bf16 %v1940, %v1940
        %v2111 = vpack.c.bf16 %v1965, %v1965
        %v2113 = vsel %vm1115, %v2104, 0
        %v2116 = vsel %vm1257, %v2108, 0
        %2118 = vmatpush.bf16.msra.mxu0 0
        %2119 = vmatpush.bf16.msra.mxu0 0
        %2120 = vmatpush.bf16.msra.mxu0 0
        %2121 = vmatpush.bf16.msra.mxu0 0
        %2122 = vmatpush.bf16.msra.mxu0 0
        %2123 = vmatpush.bf16.msra.mxu0 0
        %2124 = vmatpush.bf16.msra.mxu0 0
        %2125 = vmatpush.bf16.msra.mxu0 %v2116
        %2126 = vmatmul.bf16.gmra.mxu0 %v2113
        %v2127 = vpop.f32.mrf.mxu0
        %v2128 = vadd.f32 0.0, %v2127
        %v2129 = vpop.f32.mrf.mxu0
        %2130 = vdwg.mxu0
        %v2132 = vsel %vm1115, %v2105, 0
        %v2135 = vsel %vm1257, %v2109, 0
        %2137 = vmatpush.bf16.msra.mxu0 0
        %2138 = vmatpush.bf16.msra.mxu0 0
        %2139 = vmatpush.bf16.msra.mxu0 0
        %2140 = vmatpush.bf16.msra.mxu0 0
        %2141 = vmatpush.bf16.msra.mxu0 0
        %2142 = vmatpush.bf16.msra.mxu0 0
        %2143 = vmatpush.bf16.msra.mxu0 0
        %2144 = vmatpush.bf16.msra.mxu0 %v2135
        %2145 = vmatmul.bf16.gmra.mxu0 %v2132
        %v2146 = vpop.f32.mrf.mxu0
        %v2147 = vadd.f32 0.0, %v2146
        %v2148 = vpop.f32.mrf.mxu0
        %2149 = vdwg.mxu0
        %v2151 = vsel %vm1115, %v2106, 0
        %v2154 = vsel %vm1257, %v2110, 0
        %2156 = vmatpush.bf16.msra.mxu0 0
        %2157 = vmatpush.bf16.msra.mxu0 0
        %2158 = vmatpush.bf16.msra.mxu0 0
        %2159 = vmatpush.bf16.msra.mxu0 0
        %2160 = vmatpush.bf16.msra.mxu0 0
        %2161 = vmatpush.bf16.msra.mxu0 0
        %2162 = vmatpush.bf16.msra.mxu0 0
        %2163 = vmatpush.bf16.msra.mxu0 %v2154
        %2164 = vmatmul.bf16.gmra.mxu0 %v2151
        %v2165 = vpop.f32.mrf.mxu0
        %v2166 = vadd.f32 0.0, %v2165
        %v2167 = vpop.f32.mrf.mxu0
        %2168 = vdwg.mxu0
        %v2170 = vsel %vm1115, %v2107, 0
        %v2173 = vsel %vm1257, %v2111, 0
        %2175 = vmatpush.bf16.msra.mxu0 0
        %2176 = vmatpush.bf16.msra.mxu0 0
        %2177 = vmatpush.bf16.msra.mxu0 0
        %2178 = vmatpush.bf16.msra.mxu0 0
        %2179 = vmatpush.bf16.msra.mxu0 0
        %2180 = vmatpush.bf16.msra.mxu0 0
        %2181 = vmatpush.bf16.msra.mxu0 0
        %2182 = vmatpush.bf16.msra.mxu0 %v2173
        %2183 = vmatmul.bf16.gmra.mxu0 %v2170
        %v2184 = vpop.f32.mrf.mxu0
        %v2185 = vadd.f32 0.0, %v2184
        %v2186 = vpop.f32.mrf.mxu0
        %2187 = vdwg.mxu0
        %v2188 = vpack.c.bf16 %v2128, %v2128
        %v2189 = vpack.c.bf16 %v2147, %v2147
        %v2190 = vpack.c.bf16 %v2166, %v2166
        %v2191 = vpack.c.bf16 %v2185, %v2185
        %s2192 = scalar_lea.vmem %s7, 16
        %v2193 = vld [vmem:[%s2192] sm:$0xf]
        %v2194 = vld [vmem:[%s2192 + $0x4] sm:$0xf]
        %v2195 = vld [vmem:[%s2192 + $0x8] sm:$0xf]
        %v2196 = vld [vmem:[%s2192 + $0xc] sm:$0xf]
        %v2198 = vsel %vm1115, %v2188, 0
        %v2201 = vsel %vm1257, %v2193, 0
        %2203 = vmatpush.bf16.msra.mxu0 0
        %2204 = vmatpush.bf16.msra.mxu0 0
        %2205 = vmatpush.bf16.msra.mxu0 0
        %2206 = vmatpush.bf16.msra.mxu0 0
        %2207 = vmatpush.bf16.msra.mxu0 0
        %2208 = vmatpush.bf16.msra.mxu0 0
        %2209 = vmatpush.bf16.msra.mxu0 0
        %2210 = vmatpush.bf16.msra.mxu0 %v2201
        %2211 = vmatmul.bf16.gmra.mxu0 %v2198
        %v2212 = vpop.f32.mrf.mxu0
        %v2213 = vadd.f32 0.0, %v2212
        %v2214 = vpop.f32.mrf.mxu0
        %2215 = vdwg.mxu0
        %v2217 = vsel %vm1115, %v2189, 0
        %v2220 = vsel %vm1257, %v2194, 0
        %2222 = vmatpush.bf16.msra.mxu0 0
        %2223 = vmatpush.bf16.msra.mxu0 0
        %2224 = vmatpush.bf16.msra.mxu0 0
        %2225 = vmatpush.bf16.msra.mxu0 0
        %2226 = vmatpush.bf16.msra.mxu0 0
        %2227 = vmatpush.bf16.msra.mxu0 0
        %2228 = vmatpush.bf16.msra.mxu0 0
        %2229 = vmatpush.bf16.msra.mxu0 %v2220
        %2230 = vmatmul.bf16.gmra.mxu0 %v2217
        %v2231 = vpop.f32.mrf.mxu0
        %v2232 = vadd.f32 0.0, %v2231
        %v2233 = vpop.f32.mrf.mxu0
        %2234 = vdwg.mxu0
        %v2236 = vsel %vm1115, %v2190, 0
        %v2239 = vsel %vm1257, %v2195, 0
        %2241 = vmatpush.bf16.msra.mxu0 0
        %2242 = vmatpush.bf16.msra.mxu0 0
        %2243 = vmatpush.bf16.msra.mxu0 0
        %2244 = vmatpush.bf16.msra.mxu0 0
        %2245 = vmatpush.bf16.msra.mxu0 0
        %2246 = vmatpush.bf16.msra.mxu0 0
        %2247 = vmatpush.bf16.msra.mxu0 0
        %2248 = vmatpush.bf16.msra.mxu0 %v2239
        %2249 = vmatmul.bf16.gmra.mxu0 %v2236
        %v2250 = vpop.f32.mrf.mxu0
        %v2251 = vadd.f32 0.0, %v2250
        %v2252 = vpop.f32.mrf.mxu0
        %2253 = vdwg.mxu0
        %v2255 = vsel %vm1115, %v2191, 0
        %v2258 = vsel %vm1257, %v2196, 0
        %2260 = vmatpush.bf16.msra.mxu0 0
        %2261 = vmatpush.bf16.msra.mxu0 0
        %2262 = vmatpush.bf16.msra.mxu0 0
        %2263 = vmatpush.bf16.msra.mxu0 0
        %2264 = vmatpush.bf16.msra.mxu0 0
        %2265 = vmatpush.bf16.msra.mxu0 0
        %2266 = vmatpush.bf16.msra.mxu0 0
        %2267 = vmatpush.bf16.msra.mxu0 %v2258
        %2268 = vmatmul.bf16.gmra.mxu0 %v2255
        %v2269 = vpop.f32.mrf.mxu0
        %v2270 = vadd.f32 0.0, %v2269
        %v2271 = vpop.f32.mrf.mxu0
        %2272 = vdwg.mxu0
        %v2273 = vsel %vm717, %v2213, 0.0
        %v2274 = vsel %vm717, %v2232, 0.0
        %v2275 = vadd.f32 %v2273, %v2274
        %v2276 = vsel %vm717, %v2251, 0.0
        %v2277 = vadd.f32 %v2275, %v2276
        %v2278 = vsel %vm717, %v2270, 0.0
        %v2279 = vadd.f32 %v2277, %v2278
        %s2280 = scalar_lea.vmem %s8, 1
        %v2281 = vld [vmem:[%s2280] sm:$0x1]
        %v2283 = vperm.slane %v2281, 0
        %v2285 = vadd.f32 %v2279, %v2283
        %v2286 = vadd.f32 %v1580, %v2285
        %s2287 = scalar_lea.vmem %s9, 1
        %v2288 = vld [vmem:[%s2287] sm:$0x1]
        %s2289 = scalar_lea.vmem %s10, 1
        %v2290 = vld [vmem:[%s2289] sm:$0x1]
        %v2291 = vsel %vm717, %v2286, 0.0
        %2292 = vadd.xlane.f32.xlu0 %v2291
        %v2293 = vpop.xlane.xlu0 %2292
        %v2294 = vmul.f32 %v2293, %v727
        %v2295 = vsub.f32 %v2286, %v2294
        %v2296 = vmul.f32 %v2295, %v2295
        %v2297 = vsel %vm717, %v2296, 0.0
        %2298 = vadd.xlane.f32.xlu0 %v2297
        %v2299 = vpop.xlane.xlu0 %2298
        %v2300 = vmul.f32 %v2299, %v727
        %v2301 = vadd.f32 %v2300, 1e-05
        %v2302 = vrsqrt.pop %v2301
        %v2303 = vmul.f32 %v2302, %v2301
        %v2304 = vmul.f32 %v2303, %v2302
        %v2305 = vmul.f32 0.5, %v2304
        %v2306 = vsub.f32 1.5, %v2305
        %v2307 = vmul.f32 %v2302, %v2306
        %vm2308 = vweird.f32 %v2301
        %vm2309 = vweird.f32 %v2302
        %vm2310 = vmor %vm2308, %vm2309
        %v2311 = vsel %vm2310, %v2302, %v2307
        %v2312 = vmul.f32 %v2295, %v2311
        %v2314 = vperm.slane %v2288, 0
        %v2316 = vmul.f32 %v2312, %v2314
        %v2318 = vperm.slane %v2290, 0
        %v2320 = vadd.f32 %v2316, %v2318
        %v2321 = vpack.c.bf16 %v2320, %v2320
        %s2322 = scalar_lea.vmem %s11, 16
        %v2323 = vld [vmem:[%s2322] sm:$0xf]
        %v2324 = vld [vmem:[%s2322 + $0x4] sm:$0xf]
        %v2325 = vld [vmem:[%s2322 + $0x8] sm:$0xf]
        %v2326 = vld [vmem:[%s2322 + $0xc] sm:$0xf]
        %s2327 = scalar_lea.vmem %s12, 1
        %v2328 = vld [vmem:[%s2327] sm:$0x1]
        %v2330 = vperm.slane %v2328, 0
        %v2336 = vunpack.c.l.b16 %v2323
        %v2337 = vunpack.c.l.b16 %v2324
        %v2338 = vunpack.c.l.b16 %v2325
        %v2339 = vunpack.c.l.b16 %v2326
        %v2340 = vpack.c.b16 %v2337, %v2336
        %v2341 = vpack.c.b16 %v2339, %v2338
        %v2345 = vsel %vm717, %v2321, 0
        %2347 = vmatpush.bf16.msra.mxu0 0
        %2348 = vmatpush.bf16.msra.mxu0 0
        %2349 = vmatpush.bf16.msra.mxu0 0
        %2350 = vmatpush.bf16.msra.mxu0 0
        %2351 = vmatpush.bf16.msra.mxu0 0
        %2352 = vmatpush.bf16.msra.mxu0 0
        %2353 = vmatpush.bf16.msra.mxu0 %v2341
        %2354 = vmatpush.bf16.msra.mxu0 %v2340
        %2355 = vmatmul.bf16.gmra.mxu0 %v2345
        %v2356 = vpop.f32.mrf.mxu0
        %v2357 = vadd.f32 %v2330, %v2356
        %v2358 = vpop.f32.mrf.mxu0
        %2359 = vdwg.mxu0
        %v2360 = vmax.f32 %v2357, 0.0
        %v2361 = vpack.c.bf16 %v2360, %v2360
        %s2362 = scalar_lea.vmem %s13, 64
        %v2363 = vld [vmem:[%s2362] sm:$0xf]
        %v2364 = vld [vmem:[%s2362 + $0x4] sm:$0xf]
        %v2365 = vld [vmem:[%s2362 + $0x8] sm:$0xf]
        %v2366 = vld [vmem:[%s2362 + $0xc] sm:$0xf]
        %v2367 = vld [vmem:[%s2362 + $0x10] sm:$0xf]
        %v2368 = vld [vmem:[%s2362 + $0x14] sm:$0xf]
        %v2369 = vld [vmem:[%s2362 + $0x18] sm:$0xf]
        %v2370 = vld [vmem:[%s2362 + $0x1c] sm:$0xf]
        %v2371 = vld [vmem:[%s2362 + $0x20] sm:$0xf]
        %v2372 = vld [vmem:[%s2362 + $0x24] sm:$0xf]
        %v2373 = vld [vmem:[%s2362 + $0x28] sm:$0xf]
        %v2374 = vld [vmem:[%s2362 + $0x2c] sm:$0xf]
        %v2375 = vld [vmem:[%s2362 + $0x30] sm:$0xf]
        %v2376 = vld [vmem:[%s2362 + $0x34] sm:$0xf]
        %v2377 = vld [vmem:[%s2362 + $0x38] sm:$0xf]
        %v2378 = vld [vmem:[%s2362 + $0x3c] sm:$0xf]
        %s2379 = scalar_lea.vmem %s14, 1
        %v2380 = vld [vmem:[%s2379] sm:$0x1]
        %v2382 = vperm.slane %v2380, 0
        %v2400 = vunpack.c.l.b16 %v2363
        %v2401 = vunpack.c.l.b16 %v2364
        %v2402 = vunpack.c.l.b16 %v2365
        %v2403 = vunpack.c.l.b16 %v2366
        %v2404 = vunpack.c.l.b16 %v2367
        %v2405 = vunpack.c.l.b16 %v2368
        %v2406 = vunpack.c.l.b16 %v2369
        %v2407 = vunpack.c.l.b16 %v2370
        %v2408 = vunpack.c.l.b16 %v2371
        %v2409 = vunpack.c.l.b16 %v2372
        %v2410 = vunpack.c.l.b16 %v2373
        %v2411 = vunpack.c.l.b16 %v2374
        %v2412 = vunpack.c.l.b16 %v2375
        %v2413 = vunpack.c.l.b16 %v2376
        %v2414 = vunpack.c.l.b16 %v2377
        %v2415 = vunpack.c.l.b16 %v2378
        %v2416 = vpack.c.b16 %v2401, %v2400
        %v2417 = vpack.c.b16 %v2403, %v2402
        %v2418 = vpack.c.b16 %v2405, %v2404
        %v2419 = vpack.c.b16 %v2407, %v2406
        %v2420 = vpack.c.b16 %v2409, %v2408
        %v2421 = vpack.c.b16 %v2411, %v2410
        %v2422 = vpack.c.b16 %v2413, %v2412
        %v2423 = vpack.c.b16 %v2415, %v2414
        %2432 = vmatpush.bf16.msra.mxu0 %v2423
        %2433 = vmatpush.bf16.msra.mxu0 %v2422
        %2434 = vmatpush.bf16.msra.mxu0 %v2421
        %2435 = vmatpush.bf16.msra.mxu0 %v2420
        %2436 = vmatpush.bf16.msra.mxu0 %v2419
        %2437 = vmatpush.bf16.msra.mxu0 %v2418
        %2438 = vmatpush.bf16.msra.mxu0 %v2417
        %2439 = vmatpush.bf16.msra.mxu0 %v2416
        %2440 = vmatmul.bf16.gmra.mxu0 %v2361
        %v2441 = vpop.f32.mrf.mxu0
        %v2442 = vadd.f32 %v2382, %v2441
        %v2443 = vpop.f32.mrf.mxu0
        %2444 = vdwg.mxu0
        %v2445 = vadd.f32 %v2286, %v2442
        %v2446 = vld [vmem:[%s15] sm:$0x1]
        %v2447 = vld [vmem:[%s16] sm:$0x1]
        %v2448 = vsel %vm717, %v2445, 0.0
        %2449 = vadd.xlane.f32.xlu0 %v2448
        %v2450 = vpop.xlane.xlu0 %2449
        %v2451 = vmul.f32 %v2450, %v727
        %v2452 = vsub.f32 %v2445, %v2451
        %v2453 = vmul.f32 %v2452, %v2452
        %v2454 = vsel %vm717, %v2453, 0.0
        %2455 = vadd.xlane.f32.xlu0 %v2454
        %v2456 = vpop.xlane.xlu0 %2455
        %v2457 = vmul.f32 %v2456, %v727
        %v2458 = vadd.f32 %v2457, 1e-05
        %v2459 = vrsqrt.pop %v2458
        %v2460 = vmul.f32 %v2459, %v2458
        %v2461 = vmul.f32 %v2460, %v2459
        %v2462 = vmul.f32 0.5, %v2461
        %v2463 = vsub.f32 1.5, %v2462
        %v2464 = vmul.f32 %v2459, %v2463
        %vm2465 = vweird.f32 %v2458
        %vm2466 = vweird.f32 %v2459
        %vm2467 = vmor %vm2465, %vm2466
        %v2468 = vsel %vm2467, %v2459, %v2464
        %v2469 = vmul.f32 %v2452, %v2468
        %v2471 = vperm.slane %v2446, 0
        %v2473 = vmul.f32 %v2469, %v2471
        %v2475 = vperm.slane %v2447, 0
        %v2477 = vadd.f32 %v2473, %v2475
        %v2478 = vpack.c.bf16 %v2477, %v2477
        %v2479 = vld [vmem:[%s17] sm:$0xf]
        %v2480 = vld [vmem:[%s17 + $0x4] sm:$0xf]
        %v2481 = vld [vmem:[%s17 + $0x8] sm:$0xf]
        %v2482 = vld [vmem:[%s17 + $0xc] sm:$0xf]
        %v2483 = vld [vmem:[%s18] sm:$0x1]
        %v2485 = vperm.slane %v2483, 0
        %v2491 = vunpack.c.l.b16 %v2479
        %v2492 = vunpack.c.l.b16 %v2480
        %v2493 = vunpack.c.l.b16 %v2481
        %v2494 = vunpack.c.l.b16 %v2482
        %v2495 = vpack.c.b16 %v2492, %v2491
        %v2496 = vpack.c.b16 %v2494, %v2493
        %v2500 = vsel %vm717, %v2478, 0
        %2502 = vmatpush.bf16.msra.mxu0 0
        %2503 = vmatpush.bf16.msra.mxu0 0
        %2504 = vmatpush.bf16.msra.mxu0 0
        %2505 = vmatpush.bf16.msra.mxu0 0
        %2506 = vmatpush.bf16.msra.mxu0 0
        %2507 = vmatpush.bf16.msra.mxu0 0
        %2508 = vmatpush.bf16.msra.mxu0 %v2496
        %2509 = vmatpush.bf16.msra.mxu0 %v2495
        %2510 = vmatmul.bf16.gmra.mxu0 %v2500
        %v2511 = vpop.f32.mrf.mxu0
        %v2512 = vadd.f32 %v2485, %v2511
        %v2513 = vpop.f32.mrf.mxu0
        %2514 = vdwg.mxu0
        %2515 = vst [vmem:[%s634] sm:$0xff] %v2512
        %v2516 = vld [vmem:[%s647] sm:$0xff]
        %vm2517 = vcmp.lt.s32.totalorder %v654, 64
        %v2518 = vsel %vm2517, %v2512, -1e+30
        %2519 = vmax.xlane.f32.xlu0 %v2518
        %v2520 = vpop.xlane.xlu0 %2519
        %v2521 = vsub.f32 %v2518, %v2520
        %v2522 = vmul.f32 %v2521, 1.442695
        %v2523 = vpow.pop %v2522
        %2524 = vadd.xlane.f32.xlu0 %v2523
        %v2525 = vpop.xlane.xlu0 %2524
        %v2526 = vlog2.pop %v2525
        %v2527 = vmul.f32 %v2526, 0.6931472
        %v2528 = vadd.f32 %v2520, %v2527
        %2529 = vset.pattern.permute.xlu0 0
        %2530 = vperm.xlu0 %2529, %v2516
        %v2531 = vpop.permute.xlu0 %2530
        %vm2532 = vcmp.eq.s32.totalorder %v654, %v2531
        %v2533 = vsel %vm2532, 1, 0
        %v2534 = vcvt.s32.f32 %v2533
        %v2535 = vmul.f32 %v2534, %v2512
        %2536 = vadd.xlane.f32.xlu0 %v2535
        %v2537 = vpop.xlane.xlu0 %2536
        %v2538 = vsub.f32 %v2528, %v2537
        %v2539 = vrot.slane %v2538, 4
        %v2540 = vadd.f32 %v2538, %v2539
        %v2541 = vrot.slane %v2540, 2
        %v2542 = vadd.f32 %v2540, %v2541
        %v2543 = vrot.slane %v2542, 1
        %v2544 = vadd.f32 %v2542, %v2543
        %vm2545 = vcmask 0
        %2546 = vst.msk [vmem:[%s650] sm:$0x1] %vm2545, %v2544
        %s2547 = sand.u32 %s452, 1
        %s2548 = scalar_lea.sflag [#allocation3], %s2547
        %s2549 = sand.u32 %s452, 1
        %s2550 = smul.addr %s2549, 8
        %s2551 = scalar_lea.vmem [#allocation2], %s2550
        %p2552 = scmp.lt.s32.totalorder %s35, 1
        %s2553 = scalar_select %p2552, %s35, 1
        %s2554 = scalar_lea.vmem %s20, %s2553
        // Predicated region
        $region97: #{_forward_jit.1} parent=95 // pred_check
          %p2555 = pneg %p462
        $region98: #{_forward_jit.1} parent=95 // pred_check_branch
          %2557 = sbr.rel (%p2555) target = $region100
        $region99: #{_forward_jit.1} parent=95 // pred_region
          %2559 = vsyncadd %s2548, 0
          %s2560 = smul.addr %s35, 8
          %s2561 = scalar_lea.hbm %s19, %s2560
          %s2563 = sshll.u32 %s2551, 4
          %s2564 = int_to_ptr.vmem [resolvable:$true] %s2563
          %s2565 = sshll.u32 %s2561, 4
          %s2566 = int_to_ptr.hbm [resolvable:$true] %s2565
          %2568 = dma.vmem_to_hbm [thread:$0]  %s2564, 128, %s2566, %s2548
        $region100: #{_forward_jit.1} parent=95 // pred_fallthru
          _
        // Predicated region
        $region101: #{_forward_jit.1} parent=95 // pred_check
          %p2569 = pneg %p488
        $region102: #{_forward_jit.1} parent=95 // pred_check_branch
          %2571 = sbr.rel (%p2569) target = $region104
        $region103: #{_forward_jit.1} parent=95 // pred_region
          _
        $region104: #{_forward_jit.1} parent=95 // pred_fallthru
          _
      $region96: #{_forward_jit.1} parent=5 // pred_fallthru
        _
      %p2572 = scmp.le.s32.totalorder 2, %s30
      // Predicated region
      $region105: #{_forward_jit.1} parent=5 // pred_check
        %p2573 = pneg %p2572
      $region106: #{_forward_jit.1} parent=5 // pred_check_branch
        %2575 = sbr.rel (%p2573) target = $region108
      $region107: #{_forward_jit.1} parent=5 // pred_region
        %s2576 = ssub.s32 %s30, 2
        // Predicated region
        $region109: #{_forward_jit.1} parent=107 // pred_check
          %p2577 = pneg %p468
        $region110: #{_forward_jit.1} parent=107 // pred_check_branch
          %2579 = sbr.rel (%p2577) target = $region112
        $region111: #{_forward_jit.1} parent=107 // pred_region
          %s2580 = sand.u32 %s453, 1
          %s2581 = scalar_lea.sflag [#allocation3], %s2580
          %s2582 = sand.u32 %s453, 1
          %s2583 = smul.addr %s2582, 8
          %s2584 = scalar_lea.vmem [#allocation2], %s2583
          %2586 = dma.done %s2581, 128
        $region112: #{_forward_jit.1} parent=107 // pred_fallthru
          _
        // Predicated region
        $region113: #{_forward_jit.1} parent=107 // pred_check
          %p2587 = pneg %p494
        $region114: #{_forward_jit.1} parent=107 // pred_check_branch
          %2589 = sbr.rel (%p2587) target = $region116
        $region115: #{_forward_jit.1} parent=107 // pred_region
          %p2590 = scmp.lt.s32.totalorder %s36, 1
          %s2591 = scalar_select %p2590, %s36, 1
          %s2592 = scalar_lea.vmem %s20, %s2591
        $region116: #{_forward_jit.1} parent=107 // pred_fallthru
          _
      $region108: #{_forward_jit.1} parent=5 // pred_fallthru
        _
    $region6: #{_forward_jit.1} parent=1 // loop_footer
      %s34 = sadd.s32 1, %s30
    $region7: #{_forward_jit.1} parent=1 // loop_footer_branch
      %29 = sbr.rel target = $region3
    $region8: #{_forward_jit.1} parent=1 // loop_exit
      _
    %2593 = vsyncpa [#allocation3], 1
    %s2594 = scalar_lea.sflag [#allocation3], 1
    %2595 = vsyncpa %s2594, 1

</llo_original>
